<compile_context>
chip_gen: v7x
topology: tpu7x:2x2x1
jax: 0.10.0
libtpu: 0.0.40
codegen_flags: <defaults>
</compile_context>

<pallas_src>
import functools

import jax
import jax.numpy as jnp
from jax.experimental import pallas as pl
from jax.experimental.pallas import tpu as pltpu

E, NUM_HEADS, HEAD_DIM = 128, 4, 32
C_MID = 64
K1_PAD = 32        # conv1 im2col contraction: 9 taps * 3 ch = 27, padded to 32


# ----------------------------------------------------------------------------
# Fused kernel (one grid step = one batch of N images):
#   conv1 (im2col matmul) -> fused conv2+spatial-mean -> MHA -> mean over N.
# ----------------------------------------------------------------------------
def fused_kernel(xc_ref, w1_ref, b1_ref, sel_ref, w2_ref, b2_ref,
                 wqkv_ref, bqkv_ref, wo_ref, bo_ref, out_ref, *, n_inputs):
    n = n_inputs
    num_heads, hd, e = wo_ref.shape

    # ---- conv1 (3x3, pad=1) + bias + ReLU: ONE bf16 im2col matmul -------------
    h1 = jnp.dot(xc_ref[0], w1_ref[...], preferred_element_type=jnp.float32)
    h1 = jnp.maximum(h1 + b1_ref[...], 0.0)               # (n*H*W, C_MID) f32

    # ---- conv2 (3x3, pad=1) fused with the spatial mean ----------------------
    # sel already folds: per-tap interior window, per-image grouping, 1/(H*W).
    s = jnp.dot(sel_ref[...], h1.astype(jnp.bfloat16),
                preferred_element_type=jnp.float32)        # (9*n, C_MID)
    acc = jnp.dot(s[0:n, :], w2_ref[0], preferred_element_type=jnp.float32)
    for t in range(1, 9):
        acc = acc + jnp.dot(s[t * n:(t + 1) * n, :], w2_ref[t],
                            preferred_element_type=jnp.float32)
    feats = acc + b2_ref[...]                              # (n, E)

    # ---- multi-head self attention over the n images of this batch -----------
    # (1/sqrt(head_dim) is pre-folded into the Q slice of wqkv/bqkv.)
    qkv = jnp.dot(feats, wqkv_ref[...],
                  preferred_element_type=jnp.float32) + bqkv_ref[...]
    q, k, v = qkv[:, 0:e], qkv[:, e:2 * e], qkv[:, 2 * e:3 * e]
    o = None
    for h in range(num_heads):
        qh = q[:, h * hd:(h + 1) * hd]
        kh = k[:, h * hd:(h + 1) * hd]
        vh = v[:, h * hd:(h + 1) * hd]
        sc = jax.lax.dot_general(qh, kh, (((1,), (1,)), ((), ())),
                                 preferred_element_type=jnp.float32)   # (n, n)
        sc = sc - jnp.max(sc, axis=-1, keepdims=True)
        p = jnp.exp(sc)
        p = p * pl.reciprocal(jnp.sum(p, axis=-1, keepdims=True), approx=True)
        oh = jnp.dot(p, vh, preferred_element_type=jnp.float32)        # (n, hd)
        # concat(heads) @ Wo == sum_h  oh @ Wo[h*hd:(h+1)*hd, :]
        contrib = jnp.dot(oh, wo_ref[h], preferred_element_type=jnp.float32)
        o = contrib if o is None else o + contrib
    o = o + bo_ref[...]                                    # (n, E)

    # mean over the N inputs of this batch -> (1, 1, E)
    out_ref[...] = jnp.mean(o, axis=0, keepdims=True).reshape(1, 1, e)


# ----------------------------------------------------------------------------
# Parameters (deterministic synthetic init) and the full forward wrapper.
# ----------------------------------------------------------------------------
def init_params(key):
    ks = jax.random.split(key, 12)
    return {
        "w1": 0.10 * jax.random.normal(ks[0], (3, 3, 3, C_MID), jnp.float32),   # HWIO
        "b1": 0.10 * jax.random.normal(ks[1], (C_MID,), jnp.float32),
        "w2": 0.05 * jax.random.normal(ks[2], (3, 3, C_MID, E), jnp.float32),   # HWIO
        "b2": 0.10 * jax.random.normal(ks[3], (E,), jnp.float32),
        "wq": 0.05 * jax.random.normal(ks[4], (E, E), jnp.float32),  # x @ Wq convention
        "wk": 0.05 * jax.random.normal(ks[5], (E, E), jnp.float32),
        "wv": 0.05 * jax.random.normal(ks[6], (E, E), jnp.float32),
        "bq": 0.05 * jax.random.normal(ks[7], (E,), jnp.float32),
        "bk": 0.05 * jax.random.normal(ks[8], (E,), jnp.float32),
        "bv": 0.05 * jax.random.normal(ks[9], (E,), jnp.float32),
        "wo": 0.05 * jax.random.normal(ks[10], (E, E), jnp.float32),
        "bo": 0.05 * jax.random.normal(ks[11], (E,), jnp.float32),
    }


def multi_image_fusion(inputs, params):
    """inputs: PyTorch-style (B, N, C, H, W) float32. Returns (B, 1, 128)."""
    B, N, C, H, W = inputs.shape
    if (H, W) != (16, 16):
        # AdaptiveAvgPool2d((16,16)) is only the identity for 16x16 inputs.
        raise NotImplementedError("only H=W=16 is supported")
    HW = H * W

    # ---- wrapper-side conv1 im2col (layout plumbing only) --------------------
    x = jnp.transpose(inputs.reshape(B * N, C, H, W), (0, 2, 3, 1)).astype(jnp.float32)
    xp = jnp.pad(x, ((0, 0), (1, 1), (1, 1), (0, 0)))           # (BN, H+2, W+2, C)
    cols = jnp.concatenate([xp[:, ky:ky + H, kx:kx + W, :]      # (ky,kx,ci) order
                            for ky in range(3) for kx in range(3)], axis=-1)
    cols = jnp.pad(cols, ((0, 0), (0, 0), (0, 0), (0, K1_PAD - 9 * C)))
    cols = cols.reshape(B, N * HW, K1_PAD).astype(jnp.bfloat16)

    # ---- constant selector: per-tap interior window sum + per-image grouping
    #      + the 1/(H*W) spatial mean, all folded into one matrix --------------
    yy = jnp.arange(H)[:, None]
    xx = jnp.arange(W)[None, :]
    taps = []
    for ky in range(3):
        for kx in range(3):
            ylo, yhi = max(0, ky - 1), min(H - 1, H - 2 + ky)
            xlo, xhi = max(0, kx - 1), min(W - 1, W - 2 + kx)
            m = (yy >= ylo) & (yy <= yhi) & (xx >= xlo) & (xx <= xhi)
            taps.append(m.reshape(-1).astype(jnp.float32))
    tap_m = jnp.stack(taps)                                      # (9, H*W)
    eye_n = jnp.eye(N, dtype=jnp.float32)
    sel = tap_m[:, None, None, :] * eye_n[None, :, :, None]      # (9, N, N, HW)
    sel = (sel.reshape(9 * N, N * HW) / float(HW)).astype(jnp.bfloat16)

    # ---- parameters in kernel layout -----------------------------------------
    w1k = jnp.pad(params["w1"].reshape(9 * C, C_MID),
                  ((0, K1_PAD - 9 * C), (0, 0))).astype(jnp.bfloat16)
    b1k = params["b1"].reshape(1, C_MID)
    w2k = params["w2"].reshape(9, C_MID, E)
    b2k = params["b2"].reshape(1, E)
    scale = 1.0 / float(HEAD_DIM) ** 0.5                         # folded into Wq/bq
    wqkv = jnp.concatenate([params["wq"] * scale, params["wk"], params["wv"]], axis=1)
    bqkv = jnp.concatenate([params["bq"] * scale, params["bk"],
                            params["bv"]]).reshape(1, 3 * E)
    wok = params["wo"].reshape(NUM_HEADS, HEAD_DIM, E)
    bok = params["bo"].reshape(1, E)

    kernel = functools.partial(fused_kernel, n_inputs=N)
    out = pl.pallas_call(
        kernel,
        out_shape=jax.ShapeDtypeStruct((B, 1, E), jnp.float32),
        grid_spec=pltpu.PrefetchScalarGridSpec(
            num_scalar_prefetch=0,
            grid=(B,),                                           # one batch per step
            in_specs=[
                pl.BlockSpec((1, N * HW, K1_PAD), lambda b: (b, 0, 0)),
                pl.BlockSpec((K1_PAD, C_MID), lambda b: (0, 0)),
                pl.BlockSpec((1, C_MID), lambda b: (0, 0)),
                pl.BlockSpec((9 * N, N * HW), lambda b: (0, 0)),
                pl.BlockSpec((9, C_MID, E), lambda b: (0, 0, 0)),
                pl.BlockSpec((1, E), lambda b: (0, 0)),
                pl.BlockSpec((E, 3 * E), lambda b: (0, 0)),
                pl.BlockSpec((1, 3 * E), lambda b: (0, 0)),
                pl.BlockSpec((NUM_HEADS, HEAD_DIM, E), lambda b: (0, 0, 0)),
                pl.BlockSpec((1, E), lambda b: (0, 0)),
            ],
            out_specs=pl.BlockSpec((1, 1, E), lambda b: (b, 0, 0)),
        ),
        # Batches are fully independent: shard across TensorCores on v7x,
        # plain (cheap) sequential steps on single-TC v5e/v6e.
        compiler_params=pltpu.CompilerParams(
            dimension_semantics=("parallel",)),
    )(cols, w1k, b1k, sel, w2k, b2k, wqkv, bqkv, wok, bok)
    return out


# ----------------------------------------------------------------------------
# Pure-JAX reference (for correctness check only).
# ----------------------------------------------------------------------------
def reference_forward(inputs, params):
    B, N, C, H, W = inputs.shape
    with jax.default_matmul_precision("float32"):
        x = jnp.transpose(inputs.reshape(B * N, C, H, W), (0, 2, 3, 1))
        y = jax.lax.conv_general_dilated(
            x, params["w1"], (1, 1), "SAME",
            dimension_numbers=("NHWC", "HWIO", "NHWC")) + params["b1"]
        y = jnp.maximum(y, 0.0)
        y = jax.lax.conv_general_dilated(
            y, params["w2"], (1, 1), "SAME",
            dimension_numbers=("NHWC", "HWIO", "NHWC")) + params["b2"]
        feats = y.mean(axis=(1, 2)).reshape(B, N, E)

        q = feats @ params["wq"] + params["bq"]
        k = feats @ params["wk"] + params["bk"]
        v = feats @ params["wv"] + params["bv"]
        qh = q.reshape(B, N, NUM_HEADS, HEAD_DIM)
        kh = k.reshape(B, N, NUM_HEADS, HEAD_DIM)
        vh = v.reshape(B, N, NUM_HEADS, HEAD_DIM)
        s = jnp.einsum("bnhd,bmhd->bhnm", qh, kh) / jnp.sqrt(float(HEAD_DIM))
        pmat = jax.nn.softmax(s, axis=-1)
        o = jnp.einsum("bhnm,bmhd->bnhd", pmat, vh).reshape(B, N, E)
        o = o @ params["wo"] + params["bo"]
        return o.mean(axis=1)[:, None, :]


if __name__ == "__main__":
    B, N, C, H, W = 2, 4, 3, 16, 16
    inputs = jax.random.normal(jax.random.PRNGKey(0), (B, N, C, H, W), jnp.float32)
    params = init_params(jax.random.PRNGKey(1))

    out = multi_image_fusion(inputs, params)
    out = jax.block_until_ready(out)
    assert out.shape == (B, 1, E), out.shape

    ref = jax.block_until_ready(reference_forward(inputs, params))
    # bf16 MXU operands on the conv1 / selector matmuls + approx reciprocal in
    # the softmax -> relaxed tolerance (review item).
    assert jnp.allclose(out, ref, atol=1e-2, rtol=1e-2), (
        float(jnp.max(jnp.abs(out - ref))))

    print("KERNEL_OK")
</pallas_src>

<mosaic_0001>
module attributes {stable_mosaic.version = 11 : i64} {
  func.func @fused_kernel(%arg0: i32, %arg1: memref<1x1024x32xbf16, #tpu.memory_space<vmem>>, %arg2: memref<32x64xbf16, #tpu.memory_space<vmem>>, %arg3: memref<1x64xf32, #tpu.memory_space<vmem>>, %arg4: memref<36x1024xbf16, #tpu.memory_space<vmem>>, %arg5: memref<9x64x128xf32, #tpu.memory_space<vmem>>, %arg6: memref<1x128xf32, #tpu.memory_space<vmem>>, %arg7: memref<128x384xf32, #tpu.memory_space<vmem>>, %arg8: memref<1x384xf32, #tpu.memory_space<vmem>>, %arg9: memref<4x32x128xf32, #tpu.memory_space<vmem>>, %arg10: memref<1x128xf32, #tpu.memory_space<vmem>>, %arg11: memref<1x1x128xf32, #tpu.memory_space<vmem>>) attributes {dimension_semantics = [#tpu.dimension_semantics<parallel>], iteration_bounds = array<i64: 2>, scalar_prefetch = 0 : i64, scratch_operands = 0 : i64, tpu.core_type = #tpu.core_type<tc>, window_params = [{transform_indices = @transform_0, window_bounds = array<i64: 1, 1024, 32>}, {pipeline_mode = #tpu.pipeline_mode<synchronous>, transform_indices = @transform_1, window_bounds = array<i64: 32, 64>}, {pipeline_mode = #tpu.pipeline_mode<synchronous>, transform_indices = @transform_2, window_bounds = array<i64: 1, 64>}, {pipeline_mode = #tpu.pipeline_mode<synchronous>, transform_indices = @transform_3, window_bounds = array<i64: 36, 1024>}, {pipeline_mode = #tpu.pipeline_mode<synchronous>, transform_indices = @transform_4, window_bounds = array<i64: 9, 64, 128>}, {pipeline_mode = #tpu.pipeline_mode<synchronous>, transform_indices = @transform_5, window_bounds = array<i64: 1, 128>}, {pipeline_mode = #tpu.pipeline_mode<synchronous>, transform_indices = @transform_6, window_bounds = array<i64: 128, 384>}, {pipeline_mode = #tpu.pipeline_mode<synchronous>, transform_indices = @transform_7, window_bounds = array<i64: 1, 384>}, {pipeline_mode = #tpu.pipeline_mode<synchronous>, transform_indices = @transform_8, window_bounds = array<i64: 4, 32, 128>}, {pipeline_mode = #tpu.pipeline_mode<synchronous>, transform_indices = @transform_9, window_bounds = array<i64: 1, 128>}, {transform_indices = @transform_10, window_bounds = array<i64: 1, 1, 128>}]} {
    %c0 = arith.constant 0 : index
    %c0_0 = arith.constant 0 : index
    %c0_1 = arith.constant 0 : index
    %0 = vector.load %arg1[%c0, %c0_0, %c0_1] : memref<1x1024x32xbf16, #tpu.memory_space<vmem>>, vector<1x1024x32xbf16>
    %1 = vector.shape_cast %0 : vector<1x1024x32xbf16> to vector<1024x32xbf16>
    %c0_2 = arith.constant 0 : index
    %c0_3 = arith.constant 0 : index
    %2 = vector.load %arg2[%c0_2, %c0_3] : memref<32x64xbf16, #tpu.memory_space<vmem>>, vector<32x64xbf16>
    %cst = arith.constant dense<0.000000e+00> : vector<1024x64xf32>
    %3 = tpu.matmul %1, %2, %cst {dimension_numbers = #tpu.dot_dimension_numbers<[1], [0], [0], [1], [0, 0, 1, 1], [], []>} : vector<1024x32xbf16>, vector<32x64xbf16>, vector<1024x64xf32> -> vector<1024x64xf32>
    %c0_4 = arith.constant 0 : index
    %c0_5 = arith.constant 0 : index
    %4 = vector.load %arg3[%c0_4, %c0_5] : memref<1x64xf32, #tpu.memory_space<vmem>>, vector<1x64xf32>
    %5 = vector.broadcast %4 : vector<1x64xf32> to vector<1024x64xf32>
    %6 = arith.addf %3, %5 : vector<1024x64xf32>
    %cst_6 = arith.constant 0.000000e+00 : f32
    %7 = vector.broadcast %cst_6 : f32 to vector<1024x64xf32>
    %8 = arith.maximumf %6, %7 : vector<1024x64xf32>
    %c0_7 = arith.constant 0 : index
    %c0_8 = arith.constant 0 : index
    %9 = vector.load %arg4[%c0_7, %c0_8] : memref<36x1024xbf16, #tpu.memory_space<vmem>>, vector<36x1024xbf16>
    %10 = arith.truncf %8 : vector<1024x64xf32> to vector<1024x64xbf16>
    %cst_9 = arith.constant dense<0.000000e+00> : vector<36x64xf32>
    %11 = tpu.matmul %9, %10, %cst_9 {dimension_numbers = #tpu.dot_dimension_numbers<[1], [0], [0], [1], [0, 0, 1, 1], [], []>} : vector<36x1024xbf16>, vector<1024x64xbf16>, vector<36x64xf32> -> vector<36x64xf32>
    %12 = vector.extract_strided_slice %11 {offsets = [0, 0], sizes = [4, 64], strides = [1, 1]} : vector<36x64xf32> to vector<4x64xf32>
    %c0_10 = arith.constant 0 : index
    %c0_11 = arith.constant 0 : index
    %c0_12 = arith.constant 0 : index
    %13 = vector.load %arg5[%c0_10, %c0_11, %c0_12] : memref<9x64x128xf32, #tpu.memory_space<vmem>>, vector<1x64x128xf32>
    %14 = vector.shape_cast %13 : vector<1x64x128xf32> to vector<64x128xf32>
    %cst_13 = arith.constant dense<0.000000e+00> : vector<4x128xf32>
    %15 = tpu.matmul %12, %14, %cst_13 {dimension_numbers = #tpu.dot_dimension_numbers<[1], [0], [0], [1], [0, 0, 1, 1], [], []>} : vector<4x64xf32>, vector<64x128xf32>, vector<4x128xf32> -> vector<4x128xf32>
    %16 = vector.extract_strided_slice %11 {offsets = [4, 0], sizes = [4, 64], strides = [1, 1]} : vector<36x64xf32> to vector<4x64xf32>
    %c1 = arith.constant 1 : index
    %c0_14 = arith.constant 0 : index
    %c0_15 = arith.constant 0 : index
    %17 = vector.load %arg5[%c1, %c0_14, %c0_15] : memref<9x64x128xf32, #tpu.memory_space<vmem>>, vector<1x64x128xf32>
    %18 = vector.shape_cast %17 : vector<1x64x128xf32> to vector<64x128xf32>
    %cst_16 = arith.constant dense<0.000000e+00> : vector<4x128xf32>
    %19 = tpu.matmul %16, %18, %cst_16 {dimension_numbers = #tpu.dot_dimension_numbers<[1], [0], [0], [1], [0, 0, 1, 1], [], []>} : vector<4x64xf32>, vector<64x128xf32>, vector<4x128xf32> -> vector<4x128xf32>
    %20 = arith.addf %15, %19 : vector<4x128xf32>
    %21 = vector.extract_strided_slice %11 {offsets = [8, 0], sizes = [4, 64], strides = [1, 1]} : vector<36x64xf32> to vector<4x64xf32>
    %c2 = arith.constant 2 : index
    %c0_17 = arith.constant 0 : index
    %c0_18 = arith.constant 0 : index
    %22 = vector.load %arg5[%c2, %c0_17, %c0_18] : memref<9x64x128xf32, #tpu.memory_space<vmem>>, vector<1x64x128xf32>
    %23 = vector.shape_cast %22 : vector<1x64x128xf32> to vector<64x128xf32>
    %cst_19 = arith.constant dense<0.000000e+00> : vector<4x128xf32>
    %24 = tpu.matmul %21, %23, %cst_19 {dimension_numbers = #tpu.dot_dimension_numbers<[1], [0], [0], [1], [0, 0, 1, 1], [], []>} : vector<4x64xf32>, vector<64x128xf32>, vector<4x128xf32> -> vector<4x128xf32>
    %25 = arith.addf %20, %24 : vector<4x128xf32>
    %26 = vector.extract_strided_slice %11 {offsets = [12, 0], sizes = [4, 64], strides = [1, 1]} : vector<36x64xf32> to vector<4x64xf32>
    %c3 = arith.constant 3 : index
    %c0_20 = arith.constant 0 : index
    %c0_21 = arith.constant 0 : index
    %27 = vector.load %arg5[%c3, %c0_20, %c0_21] : memref<9x64x128xf32, #tpu.memory_space<vmem>>, vector<1x64x128xf32>
    %28 = vector.shape_cast %27 : vector<1x64x128xf32> to vector<64x128xf32>
    %cst_22 = arith.constant dense<0.000000e+00> : vector<4x128xf32>
    %29 = tpu.matmul %26, %28, %cst_22 {dimension_numbers = #tpu.dot_dimension_numbers<[1], [0], [0], [1], [0, 0, 1, 1], [], []>} : vector<4x64xf32>, vector<64x128xf32>, vector<4x128xf32> -> vector<4x128xf32>
    %30 = arith.addf %25, %29 : vector<4x128xf32>
    %31 = vector.extract_strided_slice %11 {offsets = [16, 0], sizes = [4, 64], strides = [1, 1]} : vector<36x64xf32> to vector<4x64xf32>
    %c4 = arith.constant 4 : index
    %c0_23 = arith.constant 0 : index
    %c0_24 = arith.constant 0 : index
    %32 = vector.load %arg5[%c4, %c0_23, %c0_24] : memref<9x64x128xf32, #tpu.memory_space<vmem>>, vector<1x64x128xf32>
    %33 = vector.shape_cast %32 : vector<1x64x128xf32> to vector<64x128xf32>
    %cst_25 = arith.constant dense<0.000000e+00> : vector<4x128xf32>
    %34 = tpu.matmul %31, %33, %cst_25 {dimension_numbers = #tpu.dot_dimension_numbers<[1], [0], [0], [1], [0, 0, 1, 1], [], []>} : vector<4x64xf32>, vector<64x128xf32>, vector<4x128xf32> -> vector<4x128xf32>
    %35 = arith.addf %30, %34 : vector<4x128xf32>
    %36 = vector.extract_strided_slice %11 {offsets = [20, 0], sizes = [4, 64], strides = [1, 1]} : vector<36x64xf32> to vector<4x64xf32>
    %c5 = arith.constant 5 : index
    %c0_26 = arith.constant 0 : index
    %c0_27 = arith.constant 0 : index
    %37 = vector.load %arg5[%c5, %c0_26, %c0_27] : memref<9x64x128xf32, #tpu.memory_space<vmem>>, vector<1x64x128xf32>
    %38 = vector.shape_cast %37 : vector<1x64x128xf32> to vector<64x128xf32>
    %cst_28 = arith.constant dense<0.000000e+00> : vector<4x128xf32>
    %39 = tpu.matmul %36, %38, %cst_28 {dimension_numbers = #tpu.dot_dimension_numbers<[1], [0], [0], [1], [0, 0, 1, 1], [], []>} : vector<4x64xf32>, vector<64x128xf32>, vector<4x128xf32> -> vector<4x128xf32>
    %40 = arith.addf %35, %39 : vector<4x128xf32>
    %41 = vector.extract_strided_slice %11 {offsets = [24, 0], sizes = [4, 64], strides = [1, 1]} : vector<36x64xf32> to vector<4x64xf32>
    %c6 = arith.constant 6 : index
    %c0_29 = arith.constant 0 : index
    %c0_30 = arith.constant 0 : index
    %42 = vector.load %arg5[%c6, %c0_29, %c0_30] : memref<9x64x128xf32, #tpu.memory_space<vmem>>, vector<1x64x128xf32>
    %43 = vector.shape_cast %42 : vector<1x64x128xf32> to vector<64x128xf32>
    %cst_31 = arith.constant dense<0.000000e+00> : vector<4x128xf32>
    %44 = tpu.matmul %41, %43, %cst_31 {dimension_numbers = #tpu.dot_dimension_numbers<[1], [0], [0], [1], [0, 0, 1, 1], [], []>} : vector<4x64xf32>, vector<64x128xf32>, vector<4x128xf32> -> vector<4x128xf32>
    %45 = arith.addf %40, %44 : vector<4x128xf32>
    %46 = vector.extract_strided_slice %11 {offsets = [28, 0], sizes = [4, 64], strides = [1, 1]} : vector<36x64xf32> to vector<4x64xf32>
    %c7 = arith.constant 7 : index
    %c0_32 = arith.constant 0 : index
    %c0_33 = arith.constant 0 : index
    %47 = vector.load %arg5[%c7, %c0_32, %c0_33] : memref<9x64x128xf32, #tpu.memory_space<vmem>>, vector<1x64x128xf32>
    %48 = vector.shape_cast %47 : vector<1x64x128xf32> to vector<64x128xf32>
    %cst_34 = arith.constant dense<0.000000e+00> : vector<4x128xf32>
    %49 = tpu.matmul %46, %48, %cst_34 {dimension_numbers = #tpu.dot_dimension_numbers<[1], [0], [0], [1], [0, 0, 1, 1], [], []>} : vector<4x64xf32>, vector<64x128xf32>, vector<4x128xf32> -> vector<4x128xf32>
    %50 = arith.addf %45, %49 : vector<4x128xf32>
    %51 = vector.extract_strided_slice %11 {offsets = [32, 0], sizes = [4, 64], strides = [1, 1]} : vector<36x64xf32> to vector<4x64xf32>
    %c8 = arith.constant 8 : index
    %c0_35 = arith.constant 0 : index
    %c0_36 = arith.constant 0 : index
    %52 = vector.load %arg5[%c8, %c0_35, %c0_36] : memref<9x64x128xf32, #tpu.memory_space<vmem>>, vector<1x64x128xf32>
    %53 = vector.shape_cast %52 : vector<1x64x128xf32> to vector<64x128xf32>
    %cst_37 = arith.constant dense<0.000000e+00> : vector<4x128xf32>
    %54 = tpu.matmul %51, %53, %cst_37 {dimension_numbers = #tpu.dot_dimension_numbers<[1], [0], [0], [1], [0, 0, 1, 1], [], []>} : vector<4x64xf32>, vector<64x128xf32>, vector<4x128xf32> -> vector<4x128xf32>
    %55 = arith.addf %50, %54 : vector<4x128xf32>
    %c0_38 = arith.constant 0 : index
    %c0_39 = arith.constant 0 : index
    %56 = vector.load %arg6[%c0_38, %c0_39] : memref<1x128xf32, #tpu.memory_space<vmem>>, vector<1x128xf32>
    %57 = vector.broadcast %56 : vector<1x128xf32> to vector<4x128xf32>
    %58 = arith.addf %55, %57 : vector<4x128xf32>
    %c0_40 = arith.constant 0 : index
    %c0_41 = arith.constant 0 : index
    %59 = vector.load %arg7[%c0_40, %c0_41] : memref<128x384xf32, #tpu.memory_space<vmem>>, vector<128x384xf32>
    %cst_42 = arith.constant dense<0.000000e+00> : vector<4x384xf32>
    %60 = tpu.matmul %58, %59, %cst_42 {dimension_numbers = #tpu.dot_dimension_numbers<[1], [0], [0], [1], [0, 0, 1, 1], [], []>} : vector<4x128xf32>, vector<128x384xf32>, vector<4x384xf32> -> vector<4x384xf32>
    %c0_43 = arith.constant 0 : index
    %c0_44 = arith.constant 0 : index
    %61 = vector.load %arg8[%c0_43, %c0_44] : memref<1x384xf32, #tpu.memory_space<vmem>>, vector<1x384xf32>
    %62 = vector.broadcast %61 : vector<1x384xf32> to vector<4x384xf32>
    %63 = arith.addf %60, %62 : vector<4x384xf32>
    %64 = vector.extract_strided_slice %63 {offsets = [0, 0], sizes = [4, 128], strides = [1, 1]} : vector<4x384xf32> to vector<4x128xf32>
    %65 = vector.extract_strided_slice %63 {offsets = [0, 128], sizes = [4, 128], strides = [1, 1]} : vector<4x384xf32> to vector<4x128xf32>
    %66 = vector.extract_strided_slice %63 {offsets = [0, 256], sizes = [4, 128], strides = [1, 1]} : vector<4x384xf32> to vector<4x128xf32>
    %67 = vector.extract_strided_slice %64 {offsets = [0, 0], sizes = [4, 32], strides = [1, 1]} : vector<4x128xf32> to vector<4x32xf32>
    %68 = vector.extract_strided_slice %65 {offsets = [0, 0], sizes = [4, 32], strides = [1, 1]} : vector<4x128xf32> to vector<4x32xf32>
    %69 = vector.extract_strided_slice %66 {offsets = [0, 0], sizes = [4, 32], strides = [1, 1]} : vector<4x128xf32> to vector<4x32xf32>
    %cst_45 = arith.constant dense<0.000000e+00> : vector<4x4xf32>
    %70 = tpu.matmul %67, %68, %cst_45 {dimension_numbers = #tpu.dot_dimension_numbers<[1], [1], [0], [0], [0, 0, 1, 0], [], []>} : vector<4x32xf32>, vector<4x32xf32>, vector<4x4xf32> -> vector<4x4xf32>
    %cst_46 = arith.constant dense<0xFF800000> : vector<4xf32>
    %71 = vector.multi_reduction <maximumf>, %70, %cst_46 [1] : vector<4x4xf32> to vector<4xf32>
    %72 = vector.shape_cast %71 : vector<4xf32> to vector<4x1xf32>
    %73 = vector.broadcast %72 : vector<4x1xf32> to vector<4x4xf32>
    %74 = arith.subf %70, %73 : vector<4x4xf32>
    %75 = math.exp %74 : vector<4x4xf32>
    %cst_47 = arith.constant dense<0.000000e+00> : vector<4xf32>
    %76 = vector.multi_reduction <add>, %75, %cst_47 [1] : vector<4x4xf32> to vector<4xf32>
    %77 = vector.shape_cast %76 : vector<4xf32> to vector<4x1xf32>
    %78 = tpu.reciprocal %77 {approx = true} : vector<4x1xf32> -> vector<4x1xf32>
    %79 = vector.broadcast %78 : vector<4x1xf32> to vector<4x4xf32>
    %80 = arith.mulf %75, %79 : vector<4x4xf32>
    %cst_48 = arith.constant dense<0.000000e+00> : vector<4x32xf32>
    %81 = tpu.matmul %80, %69, %cst_48 {dimension_numbers = #tpu.dot_dimension_numbers<[1], [0], [0], [1], [0, 0, 1, 1], [], []>} : vector<4x4xf32>, vector<4x32xf32>, vector<4x32xf32> -> vector<4x32xf32>
    %c0_49 = arith.constant 0 : index
    %c0_50 = arith.constant 0 : index
    %c0_51 = arith.constant 0 : index
    %82 = vector.load %arg9[%c0_49, %c0_50, %c0_51] : memref<4x32x128xf32, #tpu.memory_space<vmem>>, vector<1x32x128xf32>
    %83 = vector.shape_cast %82 : vector<1x32x128xf32> to vector<32x128xf32>
    %cst_52 = arith.constant dense<0.000000e+00> : vector<4x128xf32>
    %84 = tpu.matmul %81, %83, %cst_52 {dimension_numbers = #tpu.dot_dimension_numbers<[1], [0], [0], [1], [0, 0, 1, 1], [], []>} : vector<4x32xf32>, vector<32x128xf32>, vector<4x128xf32> -> vector<4x128xf32>
    %85 = vector.extract_strided_slice %64 {offsets = [0, 32], sizes = [4, 32], strides = [1, 1]} : vector<4x128xf32> to vector<4x32xf32>
    %86 = vector.extract_strided_slice %65 {offsets = [0, 32], sizes = [4, 32], strides = [1, 1]} : vector<4x128xf32> to vector<4x32xf32>
    %87 = vector.extract_strided_slice %66 {offsets = [0, 32], sizes = [4, 32], strides = [1, 1]} : vector<4x128xf32> to vector<4x32xf32>
    %cst_53 = arith.constant dense<0.000000e+00> : vector<4x4xf32>
    %88 = tpu.matmul %85, %86, %cst_53 {dimension_numbers = #tpu.dot_dimension_numbers<[1], [1], [0], [0], [0, 0, 1, 0], [], []>} : vector<4x32xf32>, vector<4x32xf32>, vector<4x4xf32> -> vector<4x4xf32>
    %cst_54 = arith.constant dense<0xFF800000> : vector<4xf32>
    %89 = vector.multi_reduction <maximumf>, %88, %cst_54 [1] : vector<4x4xf32> to vector<4xf32>
    %90 = vector.shape_cast %89 : vector<4xf32> to vector<4x1xf32>
    %91 = vector.broadcast %90 : vector<4x1xf32> to vector<4x4xf32>
    %92 = arith.subf %88, %91 : vector<4x4xf32>
    %93 = math.exp %92 : vector<4x4xf32>
    %cst_55 = arith.constant dense<0.000000e+00> : vector<4xf32>
    %94 = vector.multi_reduction <add>, %93, %cst_55 [1] : vector<4x4xf32> to vector<4xf32>
    %95 = vector.shape_cast %94 : vector<4xf32> to vector<4x1xf32>
    %96 = tpu.reciprocal %95 {approx = true} : vector<4x1xf32> -> vector<4x1xf32>
    %97 = vector.broadcast %96 : vector<4x1xf32> to vector<4x4xf32>
    %98 = arith.mulf %93, %97 : vector<4x4xf32>
    %cst_56 = arith.constant dense<0.000000e+00> : vector<4x32xf32>
    %99 = tpu.matmul %98, %87, %cst_56 {dimension_numbers = #tpu.dot_dimension_numbers<[1], [0], [0], [1], [0, 0, 1, 1], [], []>} : vector<4x4xf32>, vector<4x32xf32>, vector<4x32xf32> -> vector<4x32xf32>
    %c1_57 = arith.constant 1 : index
    %c0_58 = arith.constant 0 : index
    %c0_59 = arith.constant 0 : index
    %100 = vector.load %arg9[%c1_57, %c0_58, %c0_59] : memref<4x32x128xf32, #tpu.memory_space<vmem>>, vector<1x32x128xf32>
    %101 = vector.shape_cast %100 : vector<1x32x128xf32> to vector<32x128xf32>
    %cst_60 = arith.constant dense<0.000000e+00> : vector<4x128xf32>
    %102 = tpu.matmul %99, %101, %cst_60 {dimension_numbers = #tpu.dot_dimension_numbers<[1], [0], [0], [1], [0, 0, 1, 1], [], []>} : vector<4x32xf32>, vector<32x128xf32>, vector<4x128xf32> -> vector<4x128xf32>
    %103 = arith.addf %84, %102 : vector<4x128xf32>
    %104 = vector.extract_strided_slice %64 {offsets = [0, 64], sizes = [4, 32], strides = [1, 1]} : vector<4x128xf32> to vector<4x32xf32>
    %105 = vector.extract_strided_slice %65 {offsets = [0, 64], sizes = [4, 32], strides = [1, 1]} : vector<4x128xf32> to vector<4x32xf32>
    %106 = vector.extract_strided_slice %66 {offsets = [0, 64], sizes = [4, 32], strides = [1, 1]} : vector<4x128xf32> to vector<4x32xf32>
    %cst_61 = arith.constant dense<0.000000e+00> : vector<4x4xf32>
    %107 = tpu.matmul %104, %105, %cst_61 {dimension_numbers = #tpu.dot_dimension_numbers<[1], [1], [0], [0], [0, 0, 1, 0], [], []>} : vector<4x32xf32>, vector<4x32xf32>, vector<4x4xf32> -> vector<4x4xf32>
    %cst_62 = arith.constant dense<0xFF800000> : vector<4xf32>
    %108 = vector.multi_reduction <maximumf>, %107, %cst_62 [1] : vector<4x4xf32> to vector<4xf32>
    %109 = vector.shape_cast %108 : vector<4xf32> to vector<4x1xf32>
    %110 = vector.broadcast %109 : vector<4x1xf32> to vector<4x4xf32>
    %111 = arith.subf %107, %110 : vector<4x4xf32>
    %112 = math.exp %111 : vector<4x4xf32>
    %cst_63 = arith.constant dense<0.000000e+00> : vector<4xf32>
    %113 = vector.multi_reduction <add>, %112, %cst_63 [1] : vector<4x4xf32> to vector<4xf32>
    %114 = vector.shape_cast %113 : vector<4xf32> to vector<4x1xf32>
    %115 = tpu.reciprocal %114 {approx = true} : vector<4x1xf32> -> vector<4x1xf32>
    %116 = vector.broadcast %115 : vector<4x1xf32> to vector<4x4xf32>
    %117 = arith.mulf %112, %116 : vector<4x4xf32>
    %cst_64 = arith.constant dense<0.000000e+00> : vector<4x32xf32>
    %118 = tpu.matmul %117, %106, %cst_64 {dimension_numbers = #tpu.dot_dimension_numbers<[1], [0], [0], [1], [0, 0, 1, 1], [], []>} : vector<4x4xf32>, vector<4x32xf32>, vector<4x32xf32> -> vector<4x32xf32>
    %c2_65 = arith.constant 2 : index
    %c0_66 = arith.constant 0 : index
    %c0_67 = arith.constant 0 : index
    %119 = vector.load %arg9[%c2_65, %c0_66, %c0_67] : memref<4x32x128xf32, #tpu.memory_space<vmem>>, vector<1x32x128xf32>
    %120 = vector.shape_cast %119 : vector<1x32x128xf32> to vector<32x128xf32>
    %cst_68 = arith.constant dense<0.000000e+00> : vector<4x128xf32>
    %121 = tpu.matmul %118, %120, %cst_68 {dimension_numbers = #tpu.dot_dimension_numbers<[1], [0], [0], [1], [0, 0, 1, 1], [], []>} : vector<4x32xf32>, vector<32x128xf32>, vector<4x128xf32> -> vector<4x128xf32>
    %122 = arith.addf %103, %121 : vector<4x128xf32>
    %123 = vector.extract_strided_slice %64 {offsets = [0, 96], sizes = [4, 32], strides = [1, 1]} : vector<4x128xf32> to vector<4x32xf32>
    %124 = vector.extract_strided_slice %65 {offsets = [0, 96], sizes = [4, 32], strides = [1, 1]} : vector<4x128xf32> to vector<4x32xf32>
    %125 = vector.extract_strided_slice %66 {offsets = [0, 96], sizes = [4, 32], strides = [1, 1]} : vector<4x128xf32> to vector<4x32xf32>
    %cst_69 = arith.constant dense<0.000000e+00> : vector<4x4xf32>
    %126 = tpu.matmul %123, %124, %cst_69 {dimension_numbers = #tpu.dot_dimension_numbers<[1], [1], [0], [0], [0, 0, 1, 0], [], []>} : vector<4x32xf32>, vector<4x32xf32>, vector<4x4xf32> -> vector<4x4xf32>
    %cst_70 = arith.constant dense<0xFF800000> : vector<4xf32>
    %127 = vector.multi_reduction <maximumf>, %126, %cst_70 [1] : vector<4x4xf32> to vector<4xf32>
    %128 = vector.shape_cast %127 : vector<4xf32> to vector<4x1xf32>
    %129 = vector.broadcast %128 : vector<4x1xf32> to vector<4x4xf32>
    %130 = arith.subf %126, %129 : vector<4x4xf32>
    %131 = math.exp %130 : vector<4x4xf32>
    %cst_71 = arith.constant dense<0.000000e+00> : vector<4xf32>
    %132 = vector.multi_reduction <add>, %131, %cst_71 [1] : vector<4x4xf32> to vector<4xf32>
    %133 = vector.shape_cast %132 : vector<4xf32> to vector<4x1xf32>
    %134 = tpu.reciprocal %133 {approx = true} : vector<4x1xf32> -> vector<4x1xf32>
    %135 = vector.broadcast %134 : vector<4x1xf32> to vector<4x4xf32>
    %136 = arith.mulf %131, %135 : vector<4x4xf32>
    %cst_72 = arith.constant dense<0.000000e+00> : vector<4x32xf32>
    %137 = tpu.matmul %136, %125, %cst_72 {dimension_numbers = #tpu.dot_dimension_numbers<[1], [0], [0], [1], [0, 0, 1, 1], [], []>} : vector<4x4xf32>, vector<4x32xf32>, vector<4x32xf32> -> vector<4x32xf32>
    %c3_73 = arith.constant 3 : index
    %c0_74 = arith.constant 0 : index
    %c0_75 = arith.constant 0 : index
    %138 = vector.load %arg9[%c3_73, %c0_74, %c0_75] : memref<4x32x128xf32, #tpu.memory_space<vmem>>, vector<1x32x128xf32>
    %139 = vector.shape_cast %138 : vector<1x32x128xf32> to vector<32x128xf32>
    %cst_76 = arith.constant dense<0.000000e+00> : vector<4x128xf32>
    %140 = tpu.matmul %137, %139, %cst_76 {dimension_numbers = #tpu.dot_dimension_numbers<[1], [0], [0], [1], [0, 0, 1, 1], [], []>} : vector<4x32xf32>, vector<32x128xf32>, vector<4x128xf32> -> vector<4x128xf32>
    %141 = arith.addf %122, %140 : vector<4x128xf32>
    %c0_77 = arith.constant 0 : index
    %c0_78 = arith.constant 0 : index
    %142 = vector.load %arg10[%c0_77, %c0_78] : memref<1x128xf32, #tpu.memory_space<vmem>>, vector<1x128xf32>
    %143 = vector.broadcast %142 : vector<1x128xf32> to vector<4x128xf32>
    %144 = arith.addf %141, %143 : vector<4x128xf32>
    %cst_79 = arith.constant dense<0.000000e+00> : vector<128xf32>
    %145 = vector.multi_reduction <add>, %144, %cst_79 [0] : vector<4x128xf32> to vector<128xf32>
    %146 = vector.shape_cast %145 : vector<128xf32> to vector<1x128xf32>
    %cst_80 = arith.constant 4.000000e+00 : f32
    %147 = vector.broadcast %cst_80 : f32 to vector<1x128xf32>
    %148 = arith.divf %146, %147 : vector<1x128xf32>
    %149 = vector.shape_cast %148 : vector<1x128xf32> to vector<1x1x128xf32>
    %c0_81 = arith.constant 0 : index
    %c0_82 = arith.constant 0 : index
    %c0_83 = arith.constant 0 : index
    %150 = vector.load %arg11[%c0_81, %c0_82, %c0_83] : memref<1x1x128xf32, #tpu.memory_space<vmem>>, vector<1x1x128xf32>
    tpu.vector_store %arg11[%c0_81, %c0_82, %c0_83], %149 {strides = array<i32>} : memref<1x1x128xf32, #tpu.memory_space<vmem>>, vector<1x1x128xf32>,
    return
  }
  func.func @transform_0(%arg0: i32) -> (i32, i32, i32) {
    %c0_i32 = arith.constant 0 : i32
    %c0_i32_0 = arith.constant 0 : i32
    %c0_i32_1 = arith.constant 0 : i32
    return %arg0, %c0_i32, %c0_i32_0 : i32, i32, i32
  }
  func.func @transform_1(%arg0: i32) -> (i32, i32) {
    %c0_i32 = arith.constant 0 : i32
    %c0_i32_0 = arith.constant 0 : i32
    %c0_i32_1 = arith.constant 0 : i32
    return %c0_i32, %c0_i32_0 : i32, i32
  }
  func.func @transform_2(%arg0: i32) -> (i32, i32) {
    %c0_i32 = arith.constant 0 : i32
    %c0_i32_0 = arith.constant 0 : i32
    %c0_i32_1 = arith.constant 0 : i32
    return %c0_i32, %c0_i32_0 : i32, i32
  }
  func.func @transform_3(%arg0: i32) -> (i32, i32) {
    %c0_i32 = arith.constant 0 : i32
    %c0_i32_0 = arith.constant 0 : i32
    %c0_i32_1 = arith.constant 0 : i32
    return %c0_i32, %c0_i32_0 : i32, i32
  }
  func.func @transform_4(%arg0: i32) -> (i32, i32, i32) {
    %c0_i32 = arith.constant 0 : i32
    %c0_i32_0 = arith.constant 0 : i32
    %c0_i32_1 = arith.constant 0 : i32
    %c0_i32_2 = arith.constant 0 : i32
    return %c0_i32, %c0_i32_0, %c0_i32_1 : i32, i32, i32
  }
  func.func @transform_5(%arg0: i32) -> (i32, i32) {
    %c0_i32 = arith.constant 0 : i32
    %c0_i32_0 = arith.constant 0 : i32
    %c0_i32_1 = arith.constant 0 : i32
    return %c0_i32, %c0_i32_0 : i32, i32
  }
  func.func @transform_6(%arg0: i32) -> (i32, i32) {
    %c0_i32 = arith.constant 0 : i32
    %c0_i32_0 = arith.constant 0 : i32
    %c0_i32_1 = arith.constant 0 : i32
    return %c0_i32, %c0_i32_0 : i32, i32
  }
  func.func @transform_7(%arg0: i32) -> (i32, i32) {
    %c0_i32 = arith.constant 0 : i32
    %c0_i32_0 = arith.constant 0 : i32
    %c0_i32_1 = arith.constant 0 : i32
    return %c0_i32, %c0_i32_0 : i32, i32
  }
  func.func @transform_8(%arg0: i32) -> (i32, i32, i32) {
    %c0_i32 = arith.constant 0 : i32
    %c0_i32_0 = arith.constant 0 : i32
    %c0_i32_1 = arith.constant 0 : i32
    %c0_i32_2 = arith.constant 0 : i32
    return %c0_i32, %c0_i32_0, %c0_i32_1 : i32, i32, i32
  }
  func.func @transform_9(%arg0: i32) -> (i32, i32) {
    %c0_i32 = arith.constant 0 : i32
    %c0_i32_0 = arith.constant 0 : i32
    %c0_i32_1 = arith.constant 0 : i32
    return %c0_i32, %c0_i32_0 : i32, i32
  }
  func.func @transform_10(%arg0: i32) -> (i32, i32, i32) {
    %c0_i32 = arith.constant 0 : i32
    %c0_i32_0 = arith.constant 0 : i32
    %c0_i32_1 = arith.constant 0 : i32
    return %arg0, %c0_i32, %c0_i32_0 : i32, i32, i32
  }
}

</mosaic_0001>

<llo_original>
// kernel: tpu_custom_call.1
$region0: #{tpu_custom_call.1}
  #allocation0 [shape = 'u32[]', space=smem, size = 0x4, offset = 0x4, fixed_abs, tag = 'smem constant byte address 0x4 - core index']
  #allocation1 [shape = 'u32[144,128]{1,0:T(1,128)}', space=vmem, size = 0x12000, scoped, tag = 'internal scratch']
  %s0 = inlined_call_operand.vmem [shape: bf16[2,1024,32], index: 0, kind: input, shape index: {}]
  %s1 = inlined_call_operand.vmem [shape: bf16[32,64], index: 1, kind: input, shape index: {}]
  %s2 = inlined_call_operand.vmem [shape: f32[1,64], index: 2, kind: input, shape index: {}]
  %s3 = inlined_call_operand.vmem [shape: bf16[36,1024], index: 3, kind: input, shape index: {}]
  %s4 = inlined_call_operand.vmem [shape: f32[9,64,128], index: 4, kind: input, shape index: {}]
  %s5 = inlined_call_operand.vmem [shape: f32[1,128], index: 5, kind: input, shape index: {}]
  %s6 = inlined_call_operand.vmem [shape: f32[128,384], index: 6, kind: input, shape index: {}]
  %s7 = inlined_call_operand.vmem [shape: f32[1,384], index: 7, kind: input, shape index: {}]
  %s8 = inlined_call_operand.vmem [shape: f32[4,32,128], index: 8, kind: input, shape index: {}]
  %s9 = inlined_call_operand.vmem [shape: f32[1,128], index: 9, kind: input, shape index: {}]
  %s10 = inlined_call_operand.hbm [shape: f32[2,1,128], index: 10, kind: output, shape index: {}]
  %s11 = sld [smem:[#allocation0]]
  $region73: #{tpu_custom_call.1} parent=0
    _
  %s13 = ssub.s32 1, %s11
  %s14 = scalar_select 0, %s13, %s11
  $region1: #{tpu_custom_call.1} parent=0
    #allocation2 [shape = 'u8[1024]{0}', space=vmem, size = 0x400, scoped, tag = 'output window, operand 0']
    #allocation3 [shape = 's32[2]{0}', space=sflag, size = 0x8, scoped, tag = 'scoped memory for tpu_custom_call.1']
    %15 = vsyncpa [#allocation3], 0
    %s16 = scalar_lea.sflag [#allocation3], 1
    %17 = vsyncpa %s16, 0
    loop: start=0, step=1, limit=4
    $region2: #{tpu_custom_call.1} parent=1 // loop_pre_header
      _
    $region3: #{tpu_custom_call.1} parent=1 // loop_header
      %s19 = sphi 0, %s23
      %p20 = scmp.ge.s32.totalorder %s19, 4
      %s29 = sphi 0, %s31
      %s32 = sphi 0, %s29
      %s33 = sphi 0, %s32
      %s49 = sphi 0, %s33
      %s53 = sphi 0, %s53
      %s55 = sphi 0, %s53
      %s56 = sphi 0, %s55
      %s70 = sphi 0, %s56
      %s74 = sphi 0, %s74
      %s76 = sphi 0, %s74
      %s77 = sphi 0, %s76
      %s91 = sphi 0, %s77
      %s95 = sphi 0, %s95
      %s97 = sphi 0, %s95
      %s98 = sphi 0, %s97
      %s112 = sphi 0, %s98
      %s116 = sphi 0, %s116
      %s118 = sphi 0, %s116
      %s119 = sphi 0, %s118
      %s133 = sphi 0, %s119
      %s137 = sphi 0, %s137
      %s139 = sphi 0, %s137
      %s140 = sphi 0, %s139
      %s154 = sphi 0, %s140
      %s158 = sphi 0, %s158
      %s160 = sphi 0, %s158
      %s161 = sphi 0, %s160
      %s175 = sphi 0, %s161
      %s179 = sphi 0, %s179
      %s181 = sphi 0, %s179
      %s182 = sphi 0, %s181
      %s196 = sphi 0, %s182
      %s200 = sphi 0, %s200
      %s202 = sphi 0, %s200
      %s203 = sphi 0, %s202
      %s217 = sphi 0, %s203
      %s221 = sphi 0, %s221
      %s223 = sphi 0, %s221
      %s224 = sphi 0, %s223
      %s238 = sphi 0, %s224
      %s244 = sphi 0, %s246
      %s247 = sphi 0, %s244
      %s248 = sphi 0, %s247
      %s264 = sphi 0, %s248
    $region4: #{tpu_custom_call.1} parent=1 // loop_header_branch
      %22 = sbr.rel (%p20) target = $region8
    $region5: #{tpu_custom_call.1} parent=1 // loop_body
      %s24 = ssub.s32 %s19, 1
      %s25 = ssub.s32 %s19, 2
      %s26 = sadd.s32 %s19, 1
      %s27 = ssub.s32 %s19, %s26
      %p28 = scmp.eq.s32.totalorder %s27, 0
      %s30 = sadd.s32 %s29, 1
      %s31 = scalar_select %p28, %s29, %s30
      %p34 = pneg %p28
      %p35 = scmp.eq.s32.totalorder %s19, 1
      %p36 = por %p34, %p35
      %p37 = scmp.ne.s32.totalorder %s29, %s32
      %p38 = scmp.eq.s32.totalorder %s19, 0
      %p39 = por %p37, %p38
      %p40 = scmp.ne.s32.totalorder %s29, %s32
      %p41 = scmp.eq.s32.totalorder %s24, 1
      %p42 = por %p40, %p41
      %p43 = scmp.ne.s32.totalorder %s32, %s33
      %p44 = scmp.eq.s32.totalorder %s24, 0
      %p45 = por %p43, %p44
      %p46 = scmp.ne.s32.totalorder %s32, %s33
      %p47 = scmp.eq.s32.totalorder %s25, 1
      %p48 = por %p46, %p47
      %p50 = scmp.ne.s32.totalorder %s33, %s49
      %p51 = scmp.eq.s32.totalorder %s25, 0
      %p52 = por %p50, %p51
      %s54 = sadd.s32 %s53, 1
      %p57 = scmp.eq.s32.totalorder %s19, 1
      %p58 = scmp.ne.s32.totalorder %s53, %s55
      %p59 = scmp.eq.s32.totalorder %s19, 0
      %p60 = por %p58, %p59
      %p61 = scmp.ne.s32.totalorder %s53, %s55
      %p62 = scmp.eq.s32.totalorder %s24, 1
      %p63 = por %p61, %p62
      %p64 = scmp.ne.s32.totalorder %s55, %s56
      %p65 = scmp.eq.s32.totalorder %s24, 0
      %p66 = por %p64, %p65
      %p67 = scmp.ne.s32.totalorder %s55, %s56
      %p68 = scmp.eq.s32.totalorder %s25, 1
      %p69 = por %p67, %p68
      %p71 = scmp.ne.s32.totalorder %s56, %s70
      %p72 = scmp.eq.s32.totalorder %s25, 0
      %p73 = por %p71, %p72
      %s75 = sadd.s32 %s74, 1
      %p78 = scmp.eq.s32.totalorder %s19, 1
      %p79 = scmp.ne.s32.totalorder %s74, %s76
      %p80 = scmp.eq.s32.totalorder %s19, 0
      %p81 = por %p79, %p80
      %p82 = scmp.ne.s32.totalorder %s74, %s76
      %p83 = scmp.eq.s32.totalorder %s24, 1
      %p84 = por %p82, %p83
      %p85 = scmp.ne.s32.totalorder %s76, %s77
      %p86 = scmp.eq.s32.totalorder %s24, 0
      %p87 = por %p85, %p86
      %p88 = scmp.ne.s32.totalorder %s76, %s77
      %p89 = scmp.eq.s32.totalorder %s25, 1
      %p90 = por %p88, %p89
      %p92 = scmp.ne.s32.totalorder %s77, %s91
      %p93 = scmp.eq.s32.totalorder %s25, 0
      %p94 = por %p92, %p93
      %s96 = sadd.s32 %s95, 1
      %p99 = scmp.eq.s32.totalorder %s19, 1
      %p100 = scmp.ne.s32.totalorder %s95, %s97
      %p101 = scmp.eq.s32.totalorder %s19, 0
      %p102 = por %p100, %p101
      %p103 = scmp.ne.s32.totalorder %s95, %s97
      %p104 = scmp.eq.s32.totalorder %s24, 1
      %p105 = por %p103, %p104
      %p106 = scmp.ne.s32.totalorder %s97, %s98
      %p107 = scmp.eq.s32.totalorder %s24, 0
      %p108 = por %p106, %p107
      %p109 = scmp.ne.s32.totalorder %s97, %s98
      %p110 = scmp.eq.s32.totalorder %s25, 1
      %p111 = por %p109, %p110
      %p113 = scmp.ne.s32.totalorder %s98, %s112
      %p114 = scmp.eq.s32.totalorder %s25, 0
      %p115 = por %p113, %p114
      %s117 = sadd.s32 %s116, 1
      %p120 = scmp.eq.s32.totalorder %s19, 1
      %p121 = scmp.ne.s32.totalorder %s116, %s118
      %p122 = scmp.eq.s32.totalorder %s19, 0
      %p123 = por %p121, %p122
      %p124 = scmp.ne.s32.totalorder %s116, %s118
      %p125 = scmp.eq.s32.totalorder %s24, 1
      %p126 = por %p124, %p125
      %p127 = scmp.ne.s32.totalorder %s118, %s119
      %p128 = scmp.eq.s32.totalorder %s24, 0
      %p129 = por %p127, %p128
      %p130 = scmp.ne.s32.totalorder %s118, %s119
      %p131 = scmp.eq.s32.totalorder %s25, 1
      %p132 = por %p130, %p131
      %p134 = scmp.ne.s32.totalorder %s119, %s133
      %p135 = scmp.eq.s32.totalorder %s25, 0
      %p136 = por %p134, %p135
      %s138 = sadd.s32 %s137, 1
      %p141 = scmp.eq.s32.totalorder %s19, 1
      %p142 = scmp.ne.s32.totalorder %s137, %s139
      %p143 = scmp.eq.s32.totalorder %s19, 0
      %p144 = por %p142, %p143
      %p145 = scmp.ne.s32.totalorder %s137, %s139
      %p146 = scmp.eq.s32.totalorder %s24, 1
      %p147 = por %p145, %p146
      %p148 = scmp.ne.s32.totalorder %s139, %s140
      %p149 = scmp.eq.s32.totalorder %s24, 0
      %p150 = por %p148, %p149
      %p151 = scmp.ne.s32.totalorder %s139, %s140
      %p152 = scmp.eq.s32.totalorder %s25, 1
      %p153 = por %p151, %p152
      %p155 = scmp.ne.s32.totalorder %s140, %s154
      %p156 = scmp.eq.s32.totalorder %s25, 0
      %p157 = por %p155, %p156
      %s159 = sadd.s32 %s158, 1
      %p162 = scmp.eq.s32.totalorder %s19, 1
      %p163 = scmp.ne.s32.totalorder %s158, %s160
      %p164 = scmp.eq.s32.totalorder %s19, 0
      %p165 = por %p163, %p164
      %p166 = scmp.ne.s32.totalorder %s158, %s160
      %p167 = scmp.eq.s32.totalorder %s24, 1
      %p168 = por %p166, %p167
      %p169 = scmp.ne.s32.totalorder %s160, %s161
      %p170 = scmp.eq.s32.totalorder %s24, 0
      %p171 = por %p169, %p170
      %p172 = scmp.ne.s32.totalorder %s160, %s161
      %p173 = scmp.eq.s32.totalorder %s25, 1
      %p174 = por %p172, %p173
      %p176 = scmp.ne.s32.totalorder %s161, %s175
      %p177 = scmp.eq.s32.totalorder %s25, 0
      %p178 = por %p176, %p177
      %s180 = sadd.s32 %s179, 1
      %p183 = scmp.eq.s32.totalorder %s19, 1
      %p184 = scmp.ne.s32.totalorder %s179, %s181
      %p185 = scmp.eq.s32.totalorder %s19, 0
      %p186 = por %p184, %p185
      %p187 = scmp.ne.s32.totalorder %s179, %s181
      %p188 = scmp.eq.s32.totalorder %s24, 1
      %p189 = por %p187, %p188
      %p190 = scmp.ne.s32.totalorder %s181, %s182
      %p191 = scmp.eq.s32.totalorder %s24, 0
      %p192 = por %p190, %p191
      %p193 = scmp.ne.s32.totalorder %s181, %s182
      %p194 = scmp.eq.s32.totalorder %s25, 1
      %p195 = por %p193, %p194
      %p197 = scmp.ne.s32.totalorder %s182, %s196
      %p198 = scmp.eq.s32.totalorder %s25, 0
      %p199 = por %p197, %p198
      %s201 = sadd.s32 %s200, 1
      %p204 = scmp.eq.s32.totalorder %s19, 1
      %p205 = scmp.ne.s32.totalorder %s200, %s202
      %p206 = scmp.eq.s32.totalorder %s19, 0
      %p207 = por %p205, %p206
      %p208 = scmp.ne.s32.totalorder %s200, %s202
      %p209 = scmp.eq.s32.totalorder %s24, 1
      %p210 = por %p208, %p209
      %p211 = scmp.ne.s32.totalorder %s202, %s203
      %p212 = scmp.eq.s32.totalorder %s24, 0
      %p213 = por %p211, %p212
      %p214 = scmp.ne.s32.totalorder %s202, %s203
      %p215 = scmp.eq.s32.totalorder %s25, 1
      %p216 = por %p214, %p215
      %p218 = scmp.ne.s32.totalorder %s203, %s217
      %p219 = scmp.eq.s32.totalorder %s25, 0
      %p220 = por %p218, %p219
      %s222 = sadd.s32 %s221, 1
      %p225 = scmp.eq.s32.totalorder %s19, 1
      %p226 = scmp.ne.s32.totalorder %s221, %s223
      %p227 = scmp.eq.s32.totalorder %s19, 0
      %p228 = por %p226, %p227
      %p229 = scmp.ne.s32.totalorder %s221, %s223
      %p230 = scmp.eq.s32.totalorder %s24, 1
      %p231 = por %p229, %p230
      %p232 = scmp.ne.s32.totalorder %s223, %s224
      %p233 = scmp.eq.s32.totalorder %s24, 0
      %p234 = por %p232, %p233
      %p235 = scmp.ne.s32.totalorder %s223, %s224
      %p236 = scmp.eq.s32.totalorder %s25, 1
      %p237 = por %p235, %p236
      %p239 = scmp.ne.s32.totalorder %s224, %s238
      %p240 = scmp.eq.s32.totalorder %s25, 0
      %p241 = por %p239, %p240
      %s242 = ssub.s32 %s19, %s26
      %p243 = scmp.eq.s32.totalorder %s242, 0
      %s245 = sadd.s32 %s244, 1
      %s246 = scalar_select %p243, %s244, %s245
      %p249 = pneg %p243
      %p250 = scmp.eq.s32.totalorder %s19, 1
      %p251 = por %p249, %p250
      %p252 = scmp.ne.s32.totalorder %s244, %s247
      %p253 = scmp.eq.s32.totalorder %s19, 0
      %p254 = por %p252, %p253
      %p255 = scmp.ne.s32.totalorder %s244, %s247
      %p256 = scmp.eq.s32.totalorder %s24, 1
      %p257 = por %p255, %p256
      %p258 = scmp.ne.s32.totalorder %s247, %s248
      %p259 = scmp.eq.s32.totalorder %s24, 0
      %p260 = por %p258, %p259
      %p261 = scmp.ne.s32.totalorder %s247, %s248
      %p262 = scmp.eq.s32.totalorder %s25, 1
      %p263 = por %p261, %p262
      %p265 = scmp.ne.s32.totalorder %s248, %s264
      %p266 = scmp.eq.s32.totalorder %s25, 0
      %p267 = por %p265, %p266
      %p268 = scmp.le.s32.totalorder 1, %s19
      %p269 = scmp.lt.s32.totalorder %s19, 3
      %p270 = pnand %p268, %p269
      %p271 = pneg %p270
      // Predicated region
      $region9: #{tpu_custom_call.1} parent=5 // pred_check
        _
      $region10: #{tpu_custom_call.1} parent=5 // pred_check_branch
        %273 = sbr.rel (%p270) target = $region12
      $region11: #{tpu_custom_call.1} parent=5 // pred_region
        %s274 = ssub.s32 %s19, 1
        // Predicated region
        $region13: #{tpu_custom_call.1} parent=11 // pred_check
          %p275 = pneg %p66
        $region14: #{tpu_custom_call.1} parent=11 // pred_check_branch
          %277 = sbr.rel (%p275) target = $region16
        $region15: #{tpu_custom_call.1} parent=11 // pred_region
          _
        $region16: #{tpu_custom_call.1} parent=11 // pred_fallthru
          _
        // Predicated region
        $region17: #{tpu_custom_call.1} parent=11 // pred_check
          %p278 = pneg %p87
        $region18: #{tpu_custom_call.1} parent=11 // pred_check_branch
          %280 = sbr.rel (%p278) target = $region20
        $region19: #{tpu_custom_call.1} parent=11 // pred_region
          _
        $region20: #{tpu_custom_call.1} parent=11 // pred_fallthru
          _
        // Predicated region
        $region21: #{tpu_custom_call.1} parent=11 // pred_check
          %p281 = pneg %p108
        $region22: #{tpu_custom_call.1} parent=11 // pred_check_branch
          %283 = sbr.rel (%p281) target = $region24
        $region23: #{tpu_custom_call.1} parent=11 // pred_region
          _
        $region24: #{tpu_custom_call.1} parent=11 // pred_fallthru
          _
        // Predicated region
        $region25: #{tpu_custom_call.1} parent=11 // pred_check
          %p284 = pneg %p129
        $region26: #{tpu_custom_call.1} parent=11 // pred_check_branch
          %286 = sbr.rel (%p284) target = $region28
        $region27: #{tpu_custom_call.1} parent=11 // pred_region
          _
        $region28: #{tpu_custom_call.1} parent=11 // pred_fallthru
          _
        // Predicated region
        $region29: #{tpu_custom_call.1} parent=11 // pred_check
          %p287 = pneg %p150
        $region30: #{tpu_custom_call.1} parent=11 // pred_check_branch
          %289 = sbr.rel (%p287) target = $region32
        $region31: #{tpu_custom_call.1} parent=11 // pred_region
          _
        $region32: #{tpu_custom_call.1} parent=11 // pred_fallthru
          _
        // Predicated region
        $region33: #{tpu_custom_call.1} parent=11 // pred_check
          %p290 = pneg %p171
        $region34: #{tpu_custom_call.1} parent=11 // pred_check_branch
          %292 = sbr.rel (%p290) target = $region36
        $region35: #{tpu_custom_call.1} parent=11 // pred_region
          _
        $region36: #{tpu_custom_call.1} parent=11 // pred_fallthru
          _
        // Predicated region
        $region37: #{tpu_custom_call.1} parent=11 // pred_check
          %p293 = pneg %p192
        $region38: #{tpu_custom_call.1} parent=11 // pred_check_branch
          %295 = sbr.rel (%p293) target = $region40
        $region39: #{tpu_custom_call.1} parent=11 // pred_region
          _
        $region40: #{tpu_custom_call.1} parent=11 // pred_fallthru
          _
        // Predicated region
        $region41: #{tpu_custom_call.1} parent=11 // pred_check
          %p296 = pneg %p213
        $region42: #{tpu_custom_call.1} parent=11 // pred_check_branch
          %298 = sbr.rel (%p296) target = $region44
        $region43: #{tpu_custom_call.1} parent=11 // pred_region
          _
        $region44: #{tpu_custom_call.1} parent=11 // pred_fallthru
          _
        // Predicated region
        $region45: #{tpu_custom_call.1} parent=11 // pred_check
          %p299 = pneg %p234
        $region46: #{tpu_custom_call.1} parent=11 // pred_check_branch
          %301 = sbr.rel (%p299) target = $region48
        $region47: #{tpu_custom_call.1} parent=11 // pred_region
          _
        $region48: #{tpu_custom_call.1} parent=11 // pred_fallthru
          _
      $region12: #{tpu_custom_call.1} parent=5 // pred_fallthru
        _
      %p302 = scmp.lt.s32.totalorder %s19, 2
      // Predicated region
      $region49: #{tpu_custom_call.1} parent=5 // pred_check
        %p303 = pneg %p302
      $region50: #{tpu_custom_call.1} parent=5 // pred_check_branch
        %305 = sbr.rel (%p303) target = $region52
      $region51: #{tpu_custom_call.1} parent=5 // pred_region
        // Predicated region
        $region53: #{tpu_custom_call.1} parent=51 // pred_check
          %p306 = pneg %p39
        $region54: #{tpu_custom_call.1} parent=51 // pred_check_branch
          %308 = sbr.rel (%p306) target = $region56
        $region55: #{tpu_custom_call.1} parent=51 // pred_region
          %p309 = scmp.lt.s32.totalorder %s19, 1
          %s310 = scalar_select %p309, %s19, 1
          %s311 = smul.addr %s310, 128
          %s312 = smul.addr %s311, 4
          %s313 = scalar_lea.vmem %s0, %s312
        $region56: #{tpu_custom_call.1} parent=51 // pred_fallthru
          _
      $region52: #{tpu_custom_call.1} parent=5 // pred_fallthru
        _
      %p314 = scmp.le.s32.totalorder 1, %s19
      %p315 = scmp.lt.s32.totalorder %s19, 3
      %p316 = pnand %p314, %p315
      %p317 = pneg %p316
      // Predicated region
      $region57: #{tpu_custom_call.1} parent=5 // pred_check
        _
      $region58: #{tpu_custom_call.1} parent=5 // pred_check_branch
        %319 = sbr.rel (%p316) target = $region60
      $region59: #{tpu_custom_call.1} parent=5 // pred_region
        %s320 = ssub.s32 %s19, 1
        %p321 = scmp.lt.s32.totalorder %s24, 1
        %s322 = scalar_select %p321, %s24, 1
        %s323 = smul.addr %s322, 128
        %s324 = smul.addr %s323, 4
        %s325 = scalar_lea.vmem %s0, %s324
        %p326 = pneg %p45
        %p327 = pneg %p42
        %p328 = pneg %p66
        %p329 = pneg %p63
        %p330 = pneg %p87
        %p331 = pneg %p84
        %p332 = pneg %p108
        %p333 = pneg %p105
        %p334 = pneg %p129
        %p335 = pneg %p126
        %p336 = pneg %p150
        %p337 = pneg %p147
        %p338 = pneg %p171
        %p339 = pneg %p168
        %p340 = pneg %p192
        %p341 = pneg %p189
        %p342 = pneg %p213
        %p343 = pneg %p210
        %p344 = pneg %p234
        %p345 = pneg %p231
        %p346 = pneg %p260
        %p347 = pneg %p257
        %s348 = sand.u32 %s247, 1
        %s349 = scalar_lea.sflag [#allocation3], %s348
        %s350 = sand.u32 %s247, 1
        %s351 = scalar_lea.vmem [#allocation2], %s350
        %p352 = scmp.lt.s32.totalorder %s24, 1
        %s353 = scalar_select %p352, %s24, 1
        %s354 = smul.addr %s353, 128
        %s355 = smul.addr %s354, 4
        %s356 = scalar_lea.vmem %s0, %s355
        %v358 = vld [vmem:[%s356] sm:$0xf]
        %v359 = vld [vmem:[%s356 + $0x4] sm:$0xf]
        %v360 = vld [vmem:[%s356 + $0x8] sm:$0xf]
        %v361 = vld [vmem:[%s356 + $0xc] sm:$0xf]
        %v362 = vld [vmem:[%s356 + $0x10] sm:$0xf]
        %v363 = vld [vmem:[%s356 + $0x14] sm:$0xf]
        %v364 = vld [vmem:[%s356 + $0x18] sm:$0xf]
        %v365 = vld [vmem:[%s356 + $0x1c] sm:$0xf]
        %v366 = vld [vmem:[%s356 + $0x20] sm:$0xf]
        %v367 = vld [vmem:[%s356 + $0x24] sm:$0xf]
        %v368 = vld [vmem:[%s356 + $0x28] sm:$0xf]
        %v369 = vld [vmem:[%s356 + $0x2c] sm:$0xf]
        %v370 = vld [vmem:[%s356 + $0x30] sm:$0xf]
        %v371 = vld [vmem:[%s356 + $0x34] sm:$0xf]
        %v372 = vld [vmem:[%s356 + $0x38] sm:$0xf]
        %v373 = vld [vmem:[%s356 + $0x3c] sm:$0xf]
        %v374 = vld [vmem:[%s356 + $0x40] sm:$0xf]
        %v375 = vld [vmem:[%s356 + $0x44] sm:$0xf]
        %v376 = vld [vmem:[%s356 + $0x48] sm:$0xf]
        %v377 = vld [vmem:[%s356 + $0x4c] sm:$0xf]
        %v378 = vld [vmem:[%s356 + $0x50] sm:$0xf]
        %v379 = vld [vmem:[%s356 + $0x54] sm:$0xf]
        %v380 = vld [vmem:[%s356 + $0x58] sm:$0xf]
        %v381 = vld [vmem:[%s356 + $0x5c] sm:$0xf]
        %v382 = vld [vmem:[%s356 + $0x60] sm:$0xf]
        %v383 = vld [vmem:[%s356 + $0x64] sm:$0xf]
        %v384 = vld [vmem:[%s356 + $0x68] sm:$0xf]
        %v385 = vld [vmem:[%s356 + $0x6c] sm:$0xf]
        %v386 = vld [vmem:[%s356 + $0x70] sm:$0xf]
        %v387 = vld [vmem:[%s356 + $0x74] sm:$0xf]
        %v388 = vld [vmem:[%s356 + $0x78] sm:$0xf]
        %v389 = vld [vmem:[%s356 + $0x7c] sm:$0xf]
        %v390 = vld [vmem:[%s356 + $0x80] sm:$0xf]
        %v391 = vld [vmem:[%s356 + $0x84] sm:$0xf]
        %v392 = vld [vmem:[%s356 + $0x88] sm:$0xf]
        %v393 = vld [vmem:[%s356 + $0x8c] sm:$0xf]
        %v394 = vld [vmem:[%s356 + $0x90] sm:$0xf]
        %v395 = vld [vmem:[%s356 + $0x94] sm:$0xf]
        %v396 = vld [vmem:[%s356 + $0x98] sm:$0xf]
        %v397 = vld [vmem:[%s356 + $0x9c] sm:$0xf]
        %v398 = vld [vmem:[%s356 + $0xa0] sm:$0xf]
        %v399 = vld [vmem:[%s356 + $0xa4] sm:$0xf]
        %v400 = vld [vmem:[%s356 + $0xa8] sm:$0xf]
        %v401 = vld [vmem:[%s356 + $0xac] sm:$0xf]
        %v402 = vld [vmem:[%s356 + $0xb0] sm:$0xf]
        %v403 = vld [vmem:[%s356 + $0xb4] sm:$0xf]
        %v404 = vld [vmem:[%s356 + $0xb8] sm:$0xf]
        %v405 = vld [vmem:[%s356 + $0xbc] sm:$0xf]
        %v406 = vld [vmem:[%s356 + $0xc0] sm:$0xf]
        %v407 = vld [vmem:[%s356 + $0xc4] sm:$0xf]
        %v408 = vld [vmem:[%s356 + $0xc8] sm:$0xf]
        %v409 = vld [vmem:[%s356 + $0xcc] sm:$0xf]
        %v410 = vld [vmem:[%s356 + $0xd0] sm:$0xf]
        %v411 = vld [vmem:[%s356 + $0xd4] sm:$0xf]
        %v412 = vld [vmem:[%s356 + $0xd8] sm:$0xf]
        %v413 = vld [vmem:[%s356 + $0xdc] sm:$0xf]
        %v414 = vld [vmem:[%s356 + $0xe0] sm:$0xf]
        %v415 = vld [vmem:[%s356 + $0xe4] sm:$0xf]
        %v416 = vld [vmem:[%s356 + $0xe8] sm:$0xf]
        %v417 = vld [vmem:[%s356 + $0xec] sm:$0xf]
        %v418 = vld [vmem:[%s356 + $0xf0] sm:$0xf]
        %v419 = vld [vmem:[%s356 + $0xf4] sm:$0xf]
        %v420 = vld [vmem:[%s356 + $0xf8] sm:$0xf]
        %v421 = vld [vmem:[%s356 + $0xfc] sm:$0xf]
        %v422 = vld [vmem:[%s356 + $0x100] sm:$0xf]
        %v423 = vld [vmem:[%s356 + $0x104] sm:$0xf]
        %v424 = vld [vmem:[%s356 + $0x108] sm:$0xf]
        %v425 = vld [vmem:[%s356 + $0x10c] sm:$0xf]
        %v426 = vld [vmem:[%s356 + $0x110] sm:$0xf]
        %v427 = vld [vmem:[%s356 + $0x114] sm:$0xf]
        %v428 = vld [vmem:[%s356 + $0x118] sm:$0xf]
        %v429 = vld [vmem:[%s356 + $0x11c] sm:$0xf]
        %v430 = vld [vmem:[%s356 + $0x120] sm:$0xf]
        %v431 = vld [vmem:[%s356 + $0x124] sm:$0xf]
        %v432 = vld [vmem:[%s356 + $0x128] sm:$0xf]
        %v433 = vld [vmem:[%s356 + $0x12c] sm:$0xf]
        %v434 = vld [vmem:[%s356 + $0x130] sm:$0xf]
        %v435 = vld [vmem:[%s356 + $0x134] sm:$0xf]
        %v436 = vld [vmem:[%s356 + $0x138] sm:$0xf]
        %v437 = vld [vmem:[%s356 + $0x13c] sm:$0xf]
        %v438 = vld [vmem:[%s356 + $0x140] sm:$0xf]
        %v439 = vld [vmem:[%s356 + $0x144] sm:$0xf]
        %v440 = vld [vmem:[%s356 + $0x148] sm:$0xf]
        %v441 = vld [vmem:[%s356 + $0x14c] sm:$0xf]
        %v442 = vld [vmem:[%s356 + $0x150] sm:$0xf]
        %v443 = vld [vmem:[%s356 + $0x154] sm:$0xf]
        %v444 = vld [vmem:[%s356 + $0x158] sm:$0xf]
        %v445 = vld [vmem:[%s356 + $0x15c] sm:$0xf]
        %v446 = vld [vmem:[%s356 + $0x160] sm:$0xf]
        %v447 = vld [vmem:[%s356 + $0x164] sm:$0xf]
        %v448 = vld [vmem:[%s356 + $0x168] sm:$0xf]
        %v449 = vld [vmem:[%s356 + $0x16c] sm:$0xf]
        %v450 = vld [vmem:[%s356 + $0x170] sm:$0xf]
        %v451 = vld [vmem:[%s356 + $0x174] sm:$0xf]
        %v452 = vld [vmem:[%s356 + $0x178] sm:$0xf]
        %v453 = vld [vmem:[%s356 + $0x17c] sm:$0xf]
        %v454 = vld [vmem:[%s356 + $0x180] sm:$0xf]
        %v455 = vld [vmem:[%s356 + $0x184] sm:$0xf]
        %v456 = vld [vmem:[%s356 + $0x188] sm:$0xf]
        %v457 = vld [vmem:[%s356 + $0x18c] sm:$0xf]
        %v458 = vld [vmem:[%s356 + $0x190] sm:$0xf]
        %v459 = vld [vmem:[%s356 + $0x194] sm:$0xf]
        %v460 = vld [vmem:[%s356 + $0x198] sm:$0xf]
        %v461 = vld [vmem:[%s356 + $0x19c] sm:$0xf]
        %v462 = vld [vmem:[%s356 + $0x1a0] sm:$0xf]
        %v463 = vld [vmem:[%s356 + $0x1a4] sm:$0xf]
        %v464 = vld [vmem:[%s356 + $0x1a8] sm:$0xf]
        %v465 = vld [vmem:[%s356 + $0x1ac] sm:$0xf]
        %v466 = vld [vmem:[%s356 + $0x1b0] sm:$0xf]
        %v467 = vld [vmem:[%s356 + $0x1b4] sm:$0xf]
        %v468 = vld [vmem:[%s356 + $0x1b8] sm:$0xf]
        %v469 = vld [vmem:[%s356 + $0x1bc] sm:$0xf]
        %v470 = vld [vmem:[%s356 + $0x1c0] sm:$0xf]
        %v471 = vld [vmem:[%s356 + $0x1c4] sm:$0xf]
        %v472 = vld [vmem:[%s356 + $0x1c8] sm:$0xf]
        %v473 = vld [vmem:[%s356 + $0x1cc] sm:$0xf]
        %v474 = vld [vmem:[%s356 + $0x1d0] sm:$0xf]
        %v475 = vld [vmem:[%s356 + $0x1d4] sm:$0xf]
        %v476 = vld [vmem:[%s356 + $0x1d8] sm:$0xf]
        %v477 = vld [vmem:[%s356 + $0x1dc] sm:$0xf]
        %v478 = vld [vmem:[%s356 + $0x1e0] sm:$0xf]
        %v479 = vld [vmem:[%s356 + $0x1e4] sm:$0xf]
        %v480 = vld [vmem:[%s356 + $0x1e8] sm:$0xf]
        %v481 = vld [vmem:[%s356 + $0x1ec] sm:$0xf]
        %v482 = vld [vmem:[%s356 + $0x1f0] sm:$0xf]
        %v483 = vld [vmem:[%s356 + $0x1f4] sm:$0xf]
        %v484 = vld [vmem:[%s356 + $0x1f8] sm:$0xf]
        %v485 = vld [vmem:[%s356 + $0x1fc] sm:$0xf]
        %v486 = vld [vmem:[%s1] sm:$0xf]
        %v487 = vld [vmem:[%s1 + $0x4] sm:$0xf]
        %v488 = vld [vmem:[%s1 + $0x8] sm:$0xf]
        %v489 = vld [vmem:[%s1 + $0xc] sm:$0xf]
        %v490 = vld [vmem:[%s2] sm:$0x1]
        %v492 = vlaneseq
        %v493 = vshrl.u32 %v492, 7
        %v494 = vsub.s32 0, %v493
        %v495 = vrot.slane %v490, %v494
        %v625 = vunpack.c.l.b16 %v358
        %v626 = vunpack.c.l.b16 %v359
        %v627 = vunpack.c.l.b16 %v360
        %v628 = vunpack.c.l.b16 %v361
        %v629 = vunpack.c.l.b16 %v362
        %v630 = vunpack.c.l.b16 %v363
        %v631 = vunpack.c.l.b16 %v364
        %v632 = vunpack.c.l.b16 %v365
        %v633 = vunpack.c.l.b16 %v366
        %v634 = vunpack.c.l.b16 %v367
        %v635 = vunpack.c.l.b16 %v368
        %v636 = vunpack.c.l.b16 %v369
        %v637 = vunpack.c.l.b16 %v370
        %v638 = vunpack.c.l.b16 %v371
        %v639 = vunpack.c.l.b16 %v372
        %v640 = vunpack.c.l.b16 %v373
        %v641 = vunpack.c.l.b16 %v374
        %v642 = vunpack.c.l.b16 %v375
        %v643 = vunpack.c.l.b16 %v376
        %v644 = vunpack.c.l.b16 %v377
        %v645 = vunpack.c.l.b16 %v378
        %v646 = vunpack.c.l.b16 %v379
        %v647 = vunpack.c.l.b16 %v380
        %v648 = vunpack.c.l.b16 %v381
        %v649 = vunpack.c.l.b16 %v382
        %v650 = vunpack.c.l.b16 %v383
        %v651 = vunpack.c.l.b16 %v384
        %v652 = vunpack.c.l.b16 %v385
        %v653 = vunpack.c.l.b16 %v386
        %v654 = vunpack.c.l.b16 %v387
        %v655 = vunpack.c.l.b16 %v388
        %v656 = vunpack.c.l.b16 %v389
        %v657 = vunpack.c.l.b16 %v390
        %v658 = vunpack.c.l.b16 %v391
        %v659 = vunpack.c.l.b16 %v392
        %v660 = vunpack.c.l.b16 %v393
        %v661 = vunpack.c.l.b16 %v394
        %v662 = vunpack.c.l.b16 %v395
        %v663 = vunpack.c.l.b16 %v396
        %v664 = vunpack.c.l.b16 %v397
        %v665 = vunpack.c.l.b16 %v398
        %v666 = vunpack.c.l.b16 %v399
        %v667 = vunpack.c.l.b16 %v400
        %v668 = vunpack.c.l.b16 %v401
        %v669 = vunpack.c.l.b16 %v402
        %v670 = vunpack.c.l.b16 %v403
        %v671 = vunpack.c.l.b16 %v404
        %v672 = vunpack.c.l.b16 %v405
        %v673 = vunpack.c.l.b16 %v406
        %v674 = vunpack.c.l.b16 %v407
        %v675 = vunpack.c.l.b16 %v408
        %v676 = vunpack.c.l.b16 %v409
        %v677 = vunpack.c.l.b16 %v410
        %v678 = vunpack.c.l.b16 %v411
        %v679 = vunpack.c.l.b16 %v412
        %v680 = vunpack.c.l.b16 %v413
        %v681 = vunpack.c.l.b16 %v414
        %v682 = vunpack.c.l.b16 %v415
        %v683 = vunpack.c.l.b16 %v416
        %v684 = vunpack.c.l.b16 %v417
        %v685 = vunpack.c.l.b16 %v418
        %v686 = vunpack.c.l.b16 %v419
        %v687 = vunpack.c.l.b16 %v420
        %v688 = vunpack.c.l.b16 %v421
        %v689 = vunpack.c.l.b16 %v422
        %v690 = vunpack.c.l.b16 %v423
        %v691 = vunpack.c.l.b16 %v424
        %v692 = vunpack.c.l.b16 %v425
        %v693 = vunpack.c.l.b16 %v426
        %v694 = vunpack.c.l.b16 %v427
        %v695 = vunpack.c.l.b16 %v428
        %v696 = vunpack.c.l.b16 %v429
        %v697 = vunpack.c.l.b16 %v430
        %v698 = vunpack.c.l.b16 %v431
        %v699 = vunpack.c.l.b16 %v432
        %v700 = vunpack.c.l.b16 %v433
        %v701 = vunpack.c.l.b16 %v434
        %v702 = vunpack.c.l.b16 %v435
        %v703 = vunpack.c.l.b16 %v436
        %v704 = vunpack.c.l.b16 %v437
        %v705 = vunpack.c.l.b16 %v438
        %v706 = vunpack.c.l.b16 %v439
        %v707 = vunpack.c.l.b16 %v440
        %v708 = vunpack.c.l.b16 %v441
        %v709 = vunpack.c.l.b16 %v442
        %v710 = vunpack.c.l.b16 %v443
        %v711 = vunpack.c.l.b16 %v444
        %v712 = vunpack.c.l.b16 %v445
        %v713 = vunpack.c.l.b16 %v446
        %v714 = vunpack.c.l.b16 %v447
        %v715 = vunpack.c.l.b16 %v448
        %v716 = vunpack.c.l.b16 %v449
        %v717 = vunpack.c.l.b16 %v450
        %v718 = vunpack.c.l.b16 %v451
        %v719 = vunpack.c.l.b16 %v452
        %v720 = vunpack.c.l.b16 %v453
        %v721 = vunpack.c.l.b16 %v454
        %v722 = vunpack.c.l.b16 %v455
        %v723 = vunpack.c.l.b16 %v456
        %v724 = vunpack.c.l.b16 %v457
        %v725 = vunpack.c.l.b16 %v458
        %v726 = vunpack.c.l.b16 %v459
        %v727 = vunpack.c.l.b16 %v460
        %v728 = vunpack.c.l.b16 %v461
        %v729 = vunpack.c.l.b16 %v462
        %v730 = vunpack.c.l.b16 %v463
        %v731 = vunpack.c.l.b16 %v464
        %v732 = vunpack.c.l.b16 %v465
        %v733 = vunpack.c.l.b16 %v466
        %v734 = vunpack.c.l.b16 %v467
        %v735 = vunpack.c.l.b16 %v468
        %v736 = vunpack.c.l.b16 %v469
        %v737 = vunpack.c.l.b16 %v470
        %v738 = vunpack.c.l.b16 %v471
        %v739 = vunpack.c.l.b16 %v472
        %v740 = vunpack.c.l.b16 %v473
        %v741 = vunpack.c.l.b16 %v474
        %v742 = vunpack.c.l.b16 %v475
        %v743 = vunpack.c.l.b16 %v476
        %v744 = vunpack.c.l.b16 %v477
        %v745 = vunpack.c.l.b16 %v478
        %v746 = vunpack.c.l.b16 %v479
        %v747 = vunpack.c.l.b16 %v480
        %v748 = vunpack.c.l.b16 %v481
        %v749 = vunpack.c.l.b16 %v482
        %v750 = vunpack.c.l.b16 %v483
        %v751 = vunpack.c.l.b16 %v484
        %v752 = vunpack.c.l.b16 %v485
        %v753 = vpack.c.b16 %v626, %v625
        %v754 = vpack.c.b16 %v628, %v627
        %v755 = vpack.c.b16 %v630, %v629
        %v756 = vpack.c.b16 %v632, %v631
        %v757 = vpack.c.b16 %v634, %v633
        %v758 = vpack.c.b16 %v636, %v635
        %v759 = vpack.c.b16 %v638, %v637
        %v760 = vpack.c.b16 %v640, %v639
        %v761 = vpack.c.b16 %v642, %v641
        %v762 = vpack.c.b16 %v644, %v643
        %v763 = vpack.c.b16 %v646, %v645
        %v764 = vpack.c.b16 %v648, %v647
        %v765 = vpack.c.b16 %v650, %v649
        %v766 = vpack.c.b16 %v652, %v651
        %v767 = vpack.c.b16 %v654, %v653
        %v768 = vpack.c.b16 %v656, %v655
        %v769 = vpack.c.b16 %v658, %v657
        %v770 = vpack.c.b16 %v660, %v659
        %v771 = vpack.c.b16 %v662, %v661
        %v772 = vpack.c.b16 %v664, %v663
        %v773 = vpack.c.b16 %v666, %v665
        %v774 = vpack.c.b16 %v668, %v667
        %v775 = vpack.c.b16 %v670, %v669
        %v776 = vpack.c.b16 %v672, %v671
        %v777 = vpack.c.b16 %v674, %v673
        %v778 = vpack.c.b16 %v676, %v675
        %v779 = vpack.c.b16 %v678, %v677
        %v780 = vpack.c.b16 %v680, %v679
        %v781 = vpack.c.b16 %v682, %v681
        %v782 = vpack.c.b16 %v684, %v683
        %v783 = vpack.c.b16 %v686, %v685
        %v784 = vpack.c.b16 %v688, %v687
        %v785 = vpack.c.b16 %v690, %v689
        %v786 = vpack.c.b16 %v692, %v691
        %v787 = vpack.c.b16 %v694, %v693
        %v788 = vpack.c.b16 %v696, %v695
        %v789 = vpack.c.b16 %v698, %v697
        %v790 = vpack.c.b16 %v700, %v699
        %v791 = vpack.c.b16 %v702, %v701
        %v792 = vpack.c.b16 %v704, %v703
        %v793 = vpack.c.b16 %v706, %v705
        %v794 = vpack.c.b16 %v708, %v707
        %v795 = vpack.c.b16 %v710, %v709
        %v796 = vpack.c.b16 %v712, %v711
        %v797 = vpack.c.b16 %v714, %v713
        %v798 = vpack.c.b16 %v716, %v715
        %v799 = vpack.c.b16 %v718, %v717
        %v800 = vpack.c.b16 %v720, %v719
        %v801 = vpack.c.b16 %v722, %v721
        %v802 = vpack.c.b16 %v724, %v723
        %v803 = vpack.c.b16 %v726, %v725
        %v804 = vpack.c.b16 %v728, %v727
        %v805 = vpack.c.b16 %v730, %v729
        %v806 = vpack.c.b16 %v732, %v731
        %v807 = vpack.c.b16 %v734, %v733
        %v808 = vpack.c.b16 %v736, %v735
        %v809 = vpack.c.b16 %v738, %v737
        %v810 = vpack.c.b16 %v740, %v739
        %v811 = vpack.c.b16 %v742, %v741
        %v812 = vpack.c.b16 %v744, %v743
        %v813 = vpack.c.b16 %v746, %v745
        %v814 = vpack.c.b16 %v748, %v747
        %v815 = vpack.c.b16 %v750, %v749
        %v816 = vpack.c.b16 %v752, %v751
        %v821 = vunpack.c.l.b16 %v486
        %v822 = vunpack.c.l.b16 %v487
        %v823 = vunpack.c.l.b16 %v488
        %v824 = vunpack.c.l.b16 %v489
        %v825 = vpack.c.b16 %v822, %v821
        %v826 = vpack.c.b16 %v824, %v823
        %vm829 = vcmask 261120
        %v831 = vsel %vm829, %v753, 0
        %v834 = vsel %vm829, %v754, 0
        %v837 = vsel %vm829, %v755, 0
        %v840 = vsel %vm829, %v756, 0
        %v843 = vsel %vm829, %v757, 0
        %v846 = vsel %vm829, %v758, 0
        %v849 = vsel %vm829, %v759, 0
        %v852 = vsel %vm829, %v760, 0
        %v855 = vsel %vm829, %v761, 0
        %v858 = vsel %vm829, %v762, 0
        %v861 = vsel %vm829, %v763, 0
        %v864 = vsel %vm829, %v764, 0
        %v867 = vsel %vm829, %v765, 0
        %v870 = vsel %vm829, %v766, 0
        %v873 = vsel %vm829, %v767, 0
        %v876 = vsel %vm829, %v768, 0
        %v879 = vsel %vm829, %v769, 0
        %v882 = vsel %vm829, %v770, 0
        %v885 = vsel %vm829, %v771, 0
        %v888 = vsel %vm829, %v772, 0
        %v891 = vsel %vm829, %v773, 0
        %v894 = vsel %vm829, %v774, 0
        %v897 = vsel %vm829, %v775, 0
        %v900 = vsel %vm829, %v776, 0
        %v903 = vsel %vm829, %v777, 0
        %v906 = vsel %vm829, %v778, 0
        %v909 = vsel %vm829, %v779, 0
        %v912 = vsel %vm829, %v780, 0
        %v915 = vsel %vm829, %v781, 0
        %v918 = vsel %vm829, %v782, 0
        %v921 = vsel %vm829, %v783, 0
        %v924 = vsel %vm829, %v784, 0
        %v927 = vsel %vm829, %v785, 0
        %v930 = vsel %vm829, %v786, 0
        %v933 = vsel %vm829, %v787, 0
        %v936 = vsel %vm829, %v788, 0
        %v939 = vsel %vm829, %v789, 0
        %v942 = vsel %vm829, %v790, 0
        %v945 = vsel %vm829, %v791, 0
        %v948 = vsel %vm829, %v792, 0
        %v951 = vsel %vm829, %v793, 0
        %v954 = vsel %vm829, %v794, 0
        %v957 = vsel %vm829, %v795, 0
        %v960 = vsel %vm829, %v796, 0
        %v963 = vsel %vm829, %v797, 0
        %v966 = vsel %vm829, %v798, 0
        %v969 = vsel %vm829, %v799, 0
        %v972 = vsel %vm829, %v800, 0
        %v975 = vsel %vm829, %v801, 0
        %v978 = vsel %vm829, %v802, 0
        %v981 = vsel %vm829, %v803, 0
        %v984 = vsel %vm829, %v804, 0
        %v987 = vsel %vm829, %v805, 0
        %v990 = vsel %vm829, %v806, 0
        %v993 = vsel %vm829, %v807, 0
        %v996 = vsel %vm829, %v808, 0
        %v999 = vsel %vm829, %v809, 0
        %v1002 = vsel %vm829, %v810, 0
        %v1005 = vsel %vm829, %v811, 0
        %v1008 = vsel %vm829, %v812, 0
        %v1011 = vsel %vm829, %v813, 0
        %v1014 = vsel %vm829, %v814, 0
        %v1017 = vsel %vm829, %v815, 0
        %v1020 = vsel %vm829, %v816, 0
        %1022 = vmatprep.subr.bf16.mxu0 0
        %1023 = vmatpush1.bf16.msra.mxu0 %v825
        %1024 = vmatprep.subr.bf16.mxu0 0
        %1025 = vmatpush1.bf16.msra.mxu0 %v826
        %1026 = vmatprep.subr.bf16.mxu0 0
        %1027 = vmatpush1.bf16.msra.mxu0 0
        %1028 = vmatprep.subr.bf16.mxu0 0
        %1029 = vmatpush1.bf16.msra.mxu0 0
        %1030 = vmatprep.subr.bf16.mxu0 0
        %1031 = vmatpush1.bf16.msra.mxu0 0
        %1032 = vmatprep.subr.bf16.mxu0 0
        %1033 = vmatpush1.bf16.msra.mxu0 0
        %1034 = vmatprep.subr.bf16.mxu0 0
        %1035 = vmatpush1.bf16.msra.mxu0 0
        %1036 = vmatprep.subr.bf16.mxu0 0
        %1037 = vmatpush1.bf16.msra.mxu0 0
        %1038 = vmatprep.subr.bf16.mxu0 0
        %1039 = vmatpush1.bf16.msra.mxu0 0
        %1040 = vmatprep.subr.bf16.mxu0 0
        %1041 = vmatpush1.bf16.msra.mxu0 0
        %1042 = vmatprep.subr.bf16.mxu0 0
        %1043 = vmatpush1.bf16.msra.mxu0 0
        %1044 = vmatprep.subr.bf16.mxu0 0
        %1045 = vmatpush1.bf16.msra.mxu0 0
        %1046 = vmatprep.subr.bf16.mxu0 0
        %1047 = vmatpush1.bf16.msra.mxu0 0
        %1048 = vmatprep.subr.bf16.mxu0 0
        %1049 = vmatpush1.bf16.msra.mxu0 0
        %1050 = vmatprep.subr.bf16.mxu0 0
        %1051 = vmatpush1.bf16.msra.mxu0 0
        %1052 = vmatprep.subr.bf16.mxu0 0
        %1053 = vmatpush1.bf16.msra.mxu0 0
        %1054 = vmatprep.mubr.bf16.mxu0 0
        %1055 = vmatmul.mubr.bf16.gmra.mrb[0].mxu0 %v831
        %v1056 = vpop.f32.mrb[0].mxu0
        %v1057 = vadd.f32 %v495, %v1056
        %v1058 = vpop.f32.mrb[0].mxu0
        %v1059 = vpop.f32.mrb[0].mxu0
        %v1060 = vadd.f32 %v495, %v1059
        %v1061 = vpop.f32.mrb[0].mxu0
        %1062 = vmatprep.mubr.bf16.mxu0 0
        %1063 = vmatmul.mubr.bf16.gmra.mrb[0].mxu0 %v834
        %v1064 = vpop.f32.mrb[0].mxu0
        %v1065 = vadd.f32 %v495, %v1064
        %v1066 = vpop.f32.mrb[0].mxu0
        %v1067 = vpop.f32.mrb[0].mxu0
        %v1068 = vadd.f32 %v495, %v1067
        %v1069 = vpop.f32.mrb[0].mxu0
        %1070 = vmatprep.mubr.bf16.mxu0 0
        %1071 = vmatmul.mubr.bf16.gmra.mrb[0].mxu0 %v837
        %v1072 = vpop.f32.mrb[0].mxu0
        %v1073 = vadd.f32 %v495, %v1072
        %v1074 = vpop.f32.mrb[0].mxu0
        %v1075 = vpop.f32.mrb[0].mxu0
        %v1076 = vadd.f32 %v495, %v1075
        %v1077 = vpop.f32.mrb[0].mxu0
        %1078 = vmatprep.mubr.bf16.mxu0 0
        %1079 = vmatmul.mubr.bf16.gmra.mrb[0].mxu0 %v840
        %v1080 = vpop.f32.mrb[0].mxu0
        %v1081 = vadd.f32 %v495, %v1080
        %v1082 = vpop.f32.mrb[0].mxu0
        %v1083 = vpop.f32.mrb[0].mxu0
        %v1084 = vadd.f32 %v495, %v1083
        %v1085 = vpop.f32.mrb[0].mxu0
        %1086 = vmatprep.mubr.bf16.mxu0 0
        %1087 = vmatmul.mubr.bf16.gmra.mrb[0].mxu0 %v843
        %v1088 = vpop.f32.mrb[0].mxu0
        %v1089 = vadd.f32 %v495, %v1088
        %v1090 = vpop.f32.mrb[0].mxu0
        %v1091 = vpop.f32.mrb[0].mxu0
        %v1092 = vadd.f32 %v495, %v1091
        %v1093 = vpop.f32.mrb[0].mxu0
        %1094 = vmatprep.mubr.bf16.mxu0 0
        %1095 = vmatmul.mubr.bf16.gmra.mrb[0].mxu0 %v846
        %v1096 = vpop.f32.mrb[0].mxu0
        %v1097 = vadd.f32 %v495, %v1096
        %v1098 = vpop.f32.mrb[0].mxu0
        %v1099 = vpop.f32.mrb[0].mxu0
        %v1100 = vadd.f32 %v495, %v1099
        %v1101 = vpop.f32.mrb[0].mxu0
        %1102 = vmatprep.mubr.bf16.mxu0 0
        %1103 = vmatmul.mubr.bf16.gmra.mrb[0].mxu0 %v849
        %v1104 = vpop.f32.mrb[0].mxu0
        %v1105 = vadd.f32 %v495, %v1104
        %v1106 = vpop.f32.mrb[0].mxu0
        %v1107 = vpop.f32.mrb[0].mxu0
        %v1108 = vadd.f32 %v495, %v1107
        %v1109 = vpop.f32.mrb[0].mxu0
        %1110 = vmatprep.mubr.bf16.mxu0 0
        %1111 = vmatmul.mubr.bf16.gmra.mrb[0].mxu0 %v852
        %v1112 = vpop.f32.mrb[0].mxu0
        %v1113 = vadd.f32 %v495, %v1112
        %v1114 = vpop.f32.mrb[0].mxu0
        %v1115 = vpop.f32.mrb[0].mxu0
        %v1116 = vadd.f32 %v495, %v1115
        %v1117 = vpop.f32.mrb[0].mxu0
        %1118 = vmatprep.mubr.bf16.mxu0 0
        %1119 = vmatmul.mubr.bf16.gmra.mrb[0].mxu0 %v855
        %v1120 = vpop.f32.mrb[0].mxu0
        %v1121 = vadd.f32 %v495, %v1120
        %v1122 = vpop.f32.mrb[0].mxu0
        %v1123 = vpop.f32.mrb[0].mxu0
        %v1124 = vadd.f32 %v495, %v1123
        %v1125 = vpop.f32.mrb[0].mxu0
        %1126 = vmatprep.mubr.bf16.mxu0 0
        %1127 = vmatmul.mubr.bf16.gmra.mrb[0].mxu0 %v858
        %v1128 = vpop.f32.mrb[0].mxu0
        %v1129 = vadd.f32 %v495, %v1128
        %v1130 = vpop.f32.mrb[0].mxu0
        %v1131 = vpop.f32.mrb[0].mxu0
        %v1132 = vadd.f32 %v495, %v1131
        %v1133 = vpop.f32.mrb[0].mxu0
        %1134 = vmatprep.mubr.bf16.mxu0 0
        %1135 = vmatmul.mubr.bf16.gmra.mrb[0].mxu0 %v861
        %v1136 = vpop.f32.mrb[0].mxu0
        %v1137 = vadd.f32 %v495, %v1136
        %v1138 = vpop.f32.mrb[0].mxu0
        %v1139 = vpop.f32.mrb[0].mxu0
        %v1140 = vadd.f32 %v495, %v1139
        %v1141 = vpop.f32.mrb[0].mxu0
        %1142 = vmatprep.mubr.bf16.mxu0 0
        %1143 = vmatmul.mubr.bf16.gmra.mrb[0].mxu0 %v864
        %v1144 = vpop.f32.mrb[0].mxu0
        %v1145 = vadd.f32 %v495, %v1144
        %v1146 = vpop.f32.mrb[0].mxu0
        %v1147 = vpop.f32.mrb[0].mxu0
        %v1148 = vadd.f32 %v495, %v1147
        %v1149 = vpop.f32.mrb[0].mxu0
        %1150 = vmatprep.mubr.bf16.mxu0 0
        %1151 = vmatmul.mubr.bf16.gmra.mrb[0].mxu0 %v867
        %v1152 = vpop.f32.mrb[0].mxu0
        %v1153 = vadd.f32 %v495, %v1152
        %v1154 = vpop.f32.mrb[0].mxu0
        %v1155 = vpop.f32.mrb[0].mxu0
        %v1156 = vadd.f32 %v495, %v1155
        %v1157 = vpop.f32.mrb[0].mxu0
        %1158 = vmatprep.mubr.bf16.mxu0 0
        %1159 = vmatmul.mubr.bf16.gmra.mrb[0].mxu0 %v870
        %v1160 = vpop.f32.mrb[0].mxu0
        %v1161 = vadd.f32 %v495, %v1160
        %v1162 = vpop.f32.mrb[0].mxu0
        %v1163 = vpop.f32.mrb[0].mxu0
        %v1164 = vadd.f32 %v495, %v1163
        %v1165 = vpop.f32.mrb[0].mxu0
        %1166 = vmatprep.mubr.bf16.mxu0 0
        %1167 = vmatmul.mubr.bf16.gmra.mrb[0].mxu0 %v873
        %v1168 = vpop.f32.mrb[0].mxu0
        %v1169 = vadd.f32 %v495, %v1168
        %v1170 = vpop.f32.mrb[0].mxu0
        %v1171 = vpop.f32.mrb[0].mxu0
        %v1172 = vadd.f32 %v495, %v1171
        %v1173 = vpop.f32.mrb[0].mxu0
        %1174 = vmatprep.mubr.bf16.mxu0 0
        %1175 = vmatmul.mubr.bf16.gmra.mrb[0].mxu0 %v876
        %v1176 = vpop.f32.mrb[0].mxu0
        %v1177 = vadd.f32 %v495, %v1176
        %v1178 = vpop.f32.mrb[0].mxu0
        %v1179 = vpop.f32.mrb[0].mxu0
        %v1180 = vadd.f32 %v495, %v1179
        %v1181 = vpop.f32.mrb[0].mxu0
        %1182 = vmatprep.mubr.bf16.mxu0 0
        %1183 = vmatmul.mubr.bf16.gmra.mrb[0].mxu0 %v879
        %v1184 = vpop.f32.mrb[0].mxu0
        %v1185 = vadd.f32 %v495, %v1184
        %v1186 = vpop.f32.mrb[0].mxu0
        %v1187 = vpop.f32.mrb[0].mxu0
        %v1188 = vadd.f32 %v495, %v1187
        %v1189 = vpop.f32.mrb[0].mxu0
        %1190 = vmatprep.mubr.bf16.mxu0 0
        %1191 = vmatmul.mubr.bf16.gmra.mrb[0].mxu0 %v882
        %v1192 = vpop.f32.mrb[0].mxu0
        %v1193 = vadd.f32 %v495, %v1192
        %v1194 = vpop.f32.mrb[0].mxu0
        %v1195 = vpop.f32.mrb[0].mxu0
        %v1196 = vadd.f32 %v495, %v1195
        %v1197 = vpop.f32.mrb[0].mxu0
        %1198 = vmatprep.mubr.bf16.mxu0 0
        %1199 = vmatmul.mubr.bf16.gmra.mrb[0].mxu0 %v885
        %v1200 = vpop.f32.mrb[0].mxu0
        %v1201 = vadd.f32 %v495, %v1200
        %v1202 = vpop.f32.mrb[0].mxu0
        %v1203 = vpop.f32.mrb[0].mxu0
        %v1204 = vadd.f32 %v495, %v1203
        %v1205 = vpop.f32.mrb[0].mxu0
        %1206 = vmatprep.mubr.bf16.mxu0 0
        %1207 = vmatmul.mubr.bf16.gmra.mrb[0].mxu0 %v888
        %v1208 = vpop.f32.mrb[0].mxu0
        %v1209 = vadd.f32 %v495, %v1208
        %v1210 = vpop.f32.mrb[0].mxu0
        %v1211 = vpop.f32.mrb[0].mxu0
        %v1212 = vadd.f32 %v495, %v1211
        %v1213 = vpop.f32.mrb[0].mxu0
        %1214 = vmatprep.mubr.bf16.mxu0 0
        %1215 = vmatmul.mubr.bf16.gmra.mrb[0].mxu0 %v891
        %v1216 = vpop.f32.mrb[0].mxu0
        %v1217 = vadd.f32 %v495, %v1216
        %v1218 = vpop.f32.mrb[0].mxu0
        %v1219 = vpop.f32.mrb[0].mxu0
        %v1220 = vadd.f32 %v495, %v1219
        %v1221 = vpop.f32.mrb[0].mxu0
        %1222 = vmatprep.mubr.bf16.mxu0 0
        %1223 = vmatmul.mubr.bf16.gmra.mrb[0].mxu0 %v894
        %v1224 = vpop.f32.mrb[0].mxu0
        %v1225 = vadd.f32 %v495, %v1224
        %v1226 = vpop.f32.mrb[0].mxu0
        %v1227 = vpop.f32.mrb[0].mxu0
        %v1228 = vadd.f32 %v495, %v1227
        %v1229 = vpop.f32.mrb[0].mxu0
        %1230 = vmatprep.mubr.bf16.mxu0 0
        %1231 = vmatmul.mubr.bf16.gmra.mrb[0].mxu0 %v897
        %v1232 = vpop.f32.mrb[0].mxu0
        %v1233 = vadd.f32 %v495, %v1232
        %v1234 = vpop.f32.mrb[0].mxu0
        %v1235 = vpop.f32.mrb[0].mxu0
        %v1236 = vadd.f32 %v495, %v1235
        %v1237 = vpop.f32.mrb[0].mxu0
        %1238 = vmatprep.mubr.bf16.mxu0 0
        %1239 = vmatmul.mubr.bf16.gmra.mrb[0].mxu0 %v900
        %v1240 = vpop.f32.mrb[0].mxu0
        %v1241 = vadd.f32 %v495, %v1240
        %v1242 = vpop.f32.mrb[0].mxu0
        %v1243 = vpop.f32.mrb[0].mxu0
        %v1244 = vadd.f32 %v495, %v1243
        %v1245 = vpop.f32.mrb[0].mxu0
        %1246 = vmatprep.mubr.bf16.mxu0 0
        %1247 = vmatmul.mubr.bf16.gmra.mrb[0].mxu0 %v903
        %v1248 = vpop.f32.mrb[0].mxu0
        %v1249 = vadd.f32 %v495, %v1248
        %v1250 = vpop.f32.mrb[0].mxu0
        %v1251 = vpop.f32.mrb[0].mxu0
        %v1252 = vadd.f32 %v495, %v1251
        %v1253 = vpop.f32.mrb[0].mxu0
        %1254 = vmatprep.mubr.bf16.mxu0 0
        %1255 = vmatmul.mubr.bf16.gmra.mrb[0].mxu0 %v906
        %v1256 = vpop.f32.mrb[0].mxu0
        %v1257 = vadd.f32 %v495, %v1256
        %v1258 = vpop.f32.mrb[0].mxu0
        %v1259 = vpop.f32.mrb[0].mxu0
        %v1260 = vadd.f32 %v495, %v1259
        %v1261 = vpop.f32.mrb[0].mxu0
        %1262 = vmatprep.mubr.bf16.mxu0 0
        %1263 = vmatmul.mubr.bf16.gmra.mrb[0].mxu0 %v909
        %v1264 = vpop.f32.mrb[0].mxu0
        %v1265 = vadd.f32 %v495, %v1264
        %v1266 = vpop.f32.mrb[0].mxu0
        %v1267 = vpop.f32.mrb[0].mxu0
        %v1268 = vadd.f32 %v495, %v1267
        %v1269 = vpop.f32.mrb[0].mxu0
        %1270 = vmatprep.mubr.bf16.mxu0 0
        %1271 = vmatmul.mubr.bf16.gmra.mrb[0].mxu0 %v912
        %v1272 = vpop.f32.mrb[0].mxu0
        %v1273 = vadd.f32 %v495, %v1272
        %v1274 = vpop.f32.mrb[0].mxu0
        %v1275 = vpop.f32.mrb[0].mxu0
        %v1276 = vadd.f32 %v495, %v1275
        %v1277 = vpop.f32.mrb[0].mxu0
        %1278 = vmatprep.mubr.bf16.mxu0 0
        %1279 = vmatmul.mubr.bf16.gmra.mrb[0].mxu0 %v915
        %v1280 = vpop.f32.mrb[0].mxu0
        %v1281 = vadd.f32 %v495, %v1280
        %v1282 = vpop.f32.mrb[0].mxu0
        %v1283 = vpop.f32.mrb[0].mxu0
        %v1284 = vadd.f32 %v495, %v1283
        %v1285 = vpop.f32.mrb[0].mxu0
        %1286 = vmatprep.mubr.bf16.mxu0 0
        %1287 = vmatmul.mubr.bf16.gmra.mrb[0].mxu0 %v918
        %v1288 = vpop.f32.mrb[0].mxu0
        %v1289 = vadd.f32 %v495, %v1288
        %v1290 = vpop.f32.mrb[0].mxu0
        %v1291 = vpop.f32.mrb[0].mxu0
        %v1292 = vadd.f32 %v495, %v1291
        %v1293 = vpop.f32.mrb[0].mxu0
        %1294 = vmatprep.mubr.bf16.mxu0 0
        %1295 = vmatmul.mubr.bf16.gmra.mrb[0].mxu0 %v921
        %v1296 = vpop.f32.mrb[0].mxu0
        %v1297 = vadd.f32 %v495, %v1296
        %v1298 = vpop.f32.mrb[0].mxu0
        %v1299 = vpop.f32.mrb[0].mxu0
        %v1300 = vadd.f32 %v495, %v1299
        %v1301 = vpop.f32.mrb[0].mxu0
        %1302 = vmatprep.mubr.bf16.mxu0 0
        %1303 = vmatmul.mubr.bf16.gmra.mrb[0].mxu0 %v924
        %v1304 = vpop.f32.mrb[0].mxu0
        %v1305 = vadd.f32 %v495, %v1304
        %v1306 = vpop.f32.mrb[0].mxu0
        %v1307 = vpop.f32.mrb[0].mxu0
        %v1308 = vadd.f32 %v495, %v1307
        %v1309 = vpop.f32.mrb[0].mxu0
        %1310 = vmatprep.mubr.bf16.mxu0 0
        %1311 = vmatmul.mubr.bf16.gmra.mrb[0].mxu0 %v927
        %v1312 = vpop.f32.mrb[0].mxu0
        %v1313 = vadd.f32 %v495, %v1312
        %v1314 = vpop.f32.mrb[0].mxu0
        %v1315 = vpop.f32.mrb[0].mxu0
        %v1316 = vadd.f32 %v495, %v1315
        %v1317 = vpop.f32.mrb[0].mxu0
        %1318 = vmatprep.mubr.bf16.mxu0 0
        %1319 = vmatmul.mubr.bf16.gmra.mrb[0].mxu0 %v930
        %v1320 = vpop.f32.mrb[0].mxu0
        %v1321 = vadd.f32 %v495, %v1320
        %v1322 = vpop.f32.mrb[0].mxu0
        %v1323 = vpop.f32.mrb[0].mxu0
        %v1324 = vadd.f32 %v495, %v1323
        %v1325 = vpop.f32.mrb[0].mxu0
        %1326 = vmatprep.mubr.bf16.mxu0 0
        %1327 = vmatmul.mubr.bf16.gmra.mrb[0].mxu0 %v933
        %v1328 = vpop.f32.mrb[0].mxu0
        %v1329 = vadd.f32 %v495, %v1328
        %v1330 = vpop.f32.mrb[0].mxu0
        %v1331 = vpop.f32.mrb[0].mxu0
        %v1332 = vadd.f32 %v495, %v1331
        %v1333 = vpop.f32.mrb[0].mxu0
        %1334 = vmatprep.mubr.bf16.mxu0 0
        %1335 = vmatmul.mubr.bf16.gmra.mrb[0].mxu0 %v936
        %v1336 = vpop.f32.mrb[0].mxu0
        %v1337 = vadd.f32 %v495, %v1336
        %v1338 = vpop.f32.mrb[0].mxu0
        %v1339 = vpop.f32.mrb[0].mxu0
        %v1340 = vadd.f32 %v495, %v1339
        %v1341 = vpop.f32.mrb[0].mxu0
        %1342 = vmatprep.mubr.bf16.mxu0 0
        %1343 = vmatmul.mubr.bf16.gmra.mrb[0].mxu0 %v939
        %v1344 = vpop.f32.mrb[0].mxu0
        %v1345 = vadd.f32 %v495, %v1344
        %v1346 = vpop.f32.mrb[0].mxu0
        %v1347 = vpop.f32.mrb[0].mxu0
        %v1348 = vadd.f32 %v495, %v1347
        %v1349 = vpop.f32.mrb[0].mxu0
        %1350 = vmatprep.mubr.bf16.mxu0 0
        %1351 = vmatmul.mubr.bf16.gmra.mrb[0].mxu0 %v942
        %v1352 = vpop.f32.mrb[0].mxu0
        %v1353 = vadd.f32 %v495, %v1352
        %v1354 = vpop.f32.mrb[0].mxu0
        %v1355 = vpop.f32.mrb[0].mxu0
        %v1356 = vadd.f32 %v495, %v1355
        %v1357 = vpop.f32.mrb[0].mxu0
        %1358 = vmatprep.mubr.bf16.mxu0 0
        %1359 = vmatmul.mubr.bf16.gmra.mrb[0].mxu0 %v945
        %v1360 = vpop.f32.mrb[0].mxu0
        %v1361 = vadd.f32 %v495, %v1360
        %v1362 = vpop.f32.mrb[0].mxu0
        %v1363 = vpop.f32.mrb[0].mxu0
        %v1364 = vadd.f32 %v495, %v1363
        %v1365 = vpop.f32.mrb[0].mxu0
        %1366 = vmatprep.mubr.bf16.mxu0 0
        %1367 = vmatmul.mubr.bf16.gmra.mrb[0].mxu0 %v948
        %v1368 = vpop.f32.mrb[0].mxu0
        %v1369 = vadd.f32 %v495, %v1368
        %v1370 = vpop.f32.mrb[0].mxu0
        %v1371 = vpop.f32.mrb[0].mxu0
        %v1372 = vadd.f32 %v495, %v1371
        %v1373 = vpop.f32.mrb[0].mxu0
        %1374 = vmatprep.mubr.bf16.mxu0 0
        %1375 = vmatmul.mubr.bf16.gmra.mrb[0].mxu0 %v951
        %v1376 = vpop.f32.mrb[0].mxu0
        %v1377 = vadd.f32 %v495, %v1376
        %v1378 = vpop.f32.mrb[0].mxu0
        %v1379 = vpop.f32.mrb[0].mxu0
        %v1380 = vadd.f32 %v495, %v1379
        %v1381 = vpop.f32.mrb[0].mxu0
        %1382 = vmatprep.mubr.bf16.mxu0 0
        %1383 = vmatmul.mubr.bf16.gmra.mrb[0].mxu0 %v954
        %v1384 = vpop.f32.mrb[0].mxu0
        %v1385 = vadd.f32 %v495, %v1384
        %v1386 = vpop.f32.mrb[0].mxu0
        %v1387 = vpop.f32.mrb[0].mxu0
        %v1388 = vadd.f32 %v495, %v1387
        %v1389 = vpop.f32.mrb[0].mxu0
        %1390 = vmatprep.mubr.bf16.mxu0 0
        %1391 = vmatmul.mubr.bf16.gmra.mrb[0].mxu0 %v957
        %v1392 = vpop.f32.mrb[0].mxu0
        %v1393 = vadd.f32 %v495, %v1392
        %v1394 = vpop.f32.mrb[0].mxu0
        %v1395 = vpop.f32.mrb[0].mxu0
        %v1396 = vadd.f32 %v495, %v1395
        %v1397 = vpop.f32.mrb[0].mxu0
        %1398 = vmatprep.mubr.bf16.mxu0 0
        %1399 = vmatmul.mubr.bf16.gmra.mrb[0].mxu0 %v960
        %v1400 = vpop.f32.mrb[0].mxu0
        %v1401 = vadd.f32 %v495, %v1400
        %v1402 = vpop.f32.mrb[0].mxu0
        %v1403 = vpop.f32.mrb[0].mxu0
        %v1404 = vadd.f32 %v495, %v1403
        %v1405 = vpop.f32.mrb[0].mxu0
        %1406 = vmatprep.mubr.bf16.mxu0 0
        %1407 = vmatmul.mubr.bf16.gmra.mrb[0].mxu0 %v963
        %v1408 = vpop.f32.mrb[0].mxu0
        %v1409 = vadd.f32 %v495, %v1408
        %v1410 = vpop.f32.mrb[0].mxu0
        %v1411 = vpop.f32.mrb[0].mxu0
        %v1412 = vadd.f32 %v495, %v1411
        %v1413 = vpop.f32.mrb[0].mxu0
        %1414 = vmatprep.mubr.bf16.mxu0 0
        %1415 = vmatmul.mubr.bf16.gmra.mrb[0].mxu0 %v966
        %v1416 = vpop.f32.mrb[0].mxu0
        %v1417 = vadd.f32 %v495, %v1416
        %v1418 = vpop.f32.mrb[0].mxu0
        %v1419 = vpop.f32.mrb[0].mxu0
        %v1420 = vadd.f32 %v495, %v1419
        %v1421 = vpop.f32.mrb[0].mxu0
        %1422 = vmatprep.mubr.bf16.mxu0 0
        %1423 = vmatmul.mubr.bf16.gmra.mrb[0].mxu0 %v969
        %v1424 = vpop.f32.mrb[0].mxu0
        %v1425 = vadd.f32 %v495, %v1424
        %v1426 = vpop.f32.mrb[0].mxu0
        %v1427 = vpop.f32.mrb[0].mxu0
        %v1428 = vadd.f32 %v495, %v1427
        %v1429 = vpop.f32.mrb[0].mxu0
        %1430 = vmatprep.mubr.bf16.mxu0 0
        %1431 = vmatmul.mubr.bf16.gmra.mrb[0].mxu0 %v972
        %v1432 = vpop.f32.mrb[0].mxu0
        %v1433 = vadd.f32 %v495, %v1432
        %v1434 = vpop.f32.mrb[0].mxu0
        %v1435 = vpop.f32.mrb[0].mxu0
        %v1436 = vadd.f32 %v495, %v1435
        %v1437 = vpop.f32.mrb[0].mxu0
        %1438 = vmatprep.mubr.bf16.mxu0 0
        %1439 = vmatmul.mubr.bf16.gmra.mrb[0].mxu0 %v975
        %v1440 = vpop.f32.mrb[0].mxu0
        %v1441 = vadd.f32 %v495, %v1440
        %v1442 = vpop.f32.mrb[0].mxu0
        %v1443 = vpop.f32.mrb[0].mxu0
        %v1444 = vadd.f32 %v495, %v1443
        %v1445 = vpop.f32.mrb[0].mxu0
        %1446 = vmatprep.mubr.bf16.mxu0 0
        %1447 = vmatmul.mubr.bf16.gmra.mrb[0].mxu0 %v978
        %v1448 = vpop.f32.mrb[0].mxu0
        %v1449 = vadd.f32 %v495, %v1448
        %v1450 = vpop.f32.mrb[0].mxu0
        %v1451 = vpop.f32.mrb[0].mxu0
        %v1452 = vadd.f32 %v495, %v1451
        %v1453 = vpop.f32.mrb[0].mxu0
        %1454 = vmatprep.mubr.bf16.mxu0 0
        %1455 = vmatmul.mubr.bf16.gmra.mrb[0].mxu0 %v981
        %v1456 = vpop.f32.mrb[0].mxu0
        %v1457 = vadd.f32 %v495, %v1456
        %v1458 = vpop.f32.mrb[0].mxu0
        %v1459 = vpop.f32.mrb[0].mxu0
        %v1460 = vadd.f32 %v495, %v1459
        %v1461 = vpop.f32.mrb[0].mxu0
        %1462 = vmatprep.mubr.bf16.mxu0 0
        %1463 = vmatmul.mubr.bf16.gmra.mrb[0].mxu0 %v984
        %v1464 = vpop.f32.mrb[0].mxu0
        %v1465 = vadd.f32 %v495, %v1464
        %v1466 = vpop.f32.mrb[0].mxu0
        %v1467 = vpop.f32.mrb[0].mxu0
        %v1468 = vadd.f32 %v495, %v1467
        %v1469 = vpop.f32.mrb[0].mxu0
        %1470 = vmatprep.mubr.bf16.mxu0 0
        %1471 = vmatmul.mubr.bf16.gmra.mrb[0].mxu0 %v987
        %v1472 = vpop.f32.mrb[0].mxu0
        %v1473 = vadd.f32 %v495, %v1472
        %v1474 = vpop.f32.mrb[0].mxu0
        %v1475 = vpop.f32.mrb[0].mxu0
        %v1476 = vadd.f32 %v495, %v1475
        %v1477 = vpop.f32.mrb[0].mxu0
        %1478 = vmatprep.mubr.bf16.mxu0 0
        %1479 = vmatmul.mubr.bf16.gmra.mrb[0].mxu0 %v990
        %v1480 = vpop.f32.mrb[0].mxu0
        %v1481 = vadd.f32 %v495, %v1480
        %v1482 = vpop.f32.mrb[0].mxu0
        %v1483 = vpop.f32.mrb[0].mxu0
        %v1484 = vadd.f32 %v495, %v1483
        %v1485 = vpop.f32.mrb[0].mxu0
        %1486 = vmatprep.mubr.bf16.mxu0 0
        %1487 = vmatmul.mubr.bf16.gmra.mrb[0].mxu0 %v993
        %v1488 = vpop.f32.mrb[0].mxu0
        %v1489 = vadd.f32 %v495, %v1488
        %v1490 = vpop.f32.mrb[0].mxu0
        %v1491 = vpop.f32.mrb[0].mxu0
        %v1492 = vadd.f32 %v495, %v1491
        %v1493 = vpop.f32.mrb[0].mxu0
        %1494 = vmatprep.mubr.bf16.mxu0 0
        %1495 = vmatmul.mubr.bf16.gmra.mrb[0].mxu0 %v996
        %v1496 = vpop.f32.mrb[0].mxu0
        %v1497 = vadd.f32 %v495, %v1496
        %v1498 = vpop.f32.mrb[0].mxu0
        %v1499 = vpop.f32.mrb[0].mxu0
        %v1500 = vadd.f32 %v495, %v1499
        %v1501 = vpop.f32.mrb[0].mxu0
        %1502 = vmatprep.mubr.bf16.mxu0 0
        %1503 = vmatmul.mubr.bf16.gmra.mrb[0].mxu0 %v999
        %v1504 = vpop.f32.mrb[0].mxu0
        %v1505 = vadd.f32 %v495, %v1504
        %v1506 = vpop.f32.mrb[0].mxu0
        %v1507 = vpop.f32.mrb[0].mxu0
        %v1508 = vadd.f32 %v495, %v1507
        %v1509 = vpop.f32.mrb[0].mxu0
        %1510 = vmatprep.mubr.bf16.mxu0 0
        %1511 = vmatmul.mubr.bf16.gmra.mrb[0].mxu0 %v1002
        %v1512 = vpop.f32.mrb[0].mxu0
        %v1513 = vadd.f32 %v495, %v1512
        %v1514 = vpop.f32.mrb[0].mxu0
        %v1515 = vpop.f32.mrb[0].mxu0
        %v1516 = vadd.f32 %v495, %v1515
        %v1517 = vpop.f32.mrb[0].mxu0
        %1518 = vmatprep.mubr.bf16.mxu0 0
        %1519 = vmatmul.mubr.bf16.gmra.mrb[0].mxu0 %v1005
        %v1520 = vpop.f32.mrb[0].mxu0
        %v1521 = vadd.f32 %v495, %v1520
        %v1522 = vpop.f32.mrb[0].mxu0
        %v1523 = vpop.f32.mrb[0].mxu0
        %v1524 = vadd.f32 %v495, %v1523
        %v1525 = vpop.f32.mrb[0].mxu0
        %1526 = vmatprep.mubr.bf16.mxu0 0
        %1527 = vmatmul.mubr.bf16.gmra.mrb[0].mxu0 %v1008
        %v1528 = vpop.f32.mrb[0].mxu0
        %v1529 = vadd.f32 %v495, %v1528
        %v1530 = vpop.f32.mrb[0].mxu0
        %v1531 = vpop.f32.mrb[0].mxu0
        %v1532 = vadd.f32 %v495, %v1531
        %v1533 = vpop.f32.mrb[0].mxu0
        %1534 = vmatprep.mubr.bf16.mxu0 0
        %1535 = vmatmul.mubr.bf16.gmra.mrb[0].mxu0 %v1011
        %v1536 = vpop.f32.mrb[0].mxu0
        %v1537 = vadd.f32 %v495, %v1536
        %v1538 = vpop.f32.mrb[0].mxu0
        %v1539 = vpop.f32.mrb[0].mxu0
        %v1540 = vadd.f32 %v495, %v1539
        %v1541 = vpop.f32.mrb[0].mxu0
        %1542 = vmatprep.mubr.bf16.mxu0 0
        %1543 = vmatmul.mubr.bf16.gmra.mrb[0].mxu0 %v1014
        %v1544 = vpop.f32.mrb[0].mxu0
        %v1545 = vadd.f32 %v495, %v1544
        %v1546 = vpop.f32.mrb[0].mxu0
        %v1547 = vpop.f32.mrb[0].mxu0
        %v1548 = vadd.f32 %v495, %v1547
        %v1549 = vpop.f32.mrb[0].mxu0
        %1550 = vmatprep.mubr.bf16.mxu0 0
        %1551 = vmatmul.mubr.bf16.gmra.mrb[0].mxu0 %v1017
        %v1552 = vpop.f32.mrb[0].mxu0
        %v1553 = vadd.f32 %v495, %v1552
        %v1554 = vpop.f32.mrb[0].mxu0
        %v1555 = vpop.f32.mrb[0].mxu0
        %v1556 = vadd.f32 %v495, %v1555
        %v1557 = vpop.f32.mrb[0].mxu0
        %1558 = vmatprep.mubr.bf16.mxu0 0
        %1559 = vmatmul.mubr.bf16.gmra.mrb[0].mxu0 %v1020
        %v1560 = vpop.f32.mrb[0].mxu0
        %v1561 = vadd.f32 %v495, %v1560
        %v1562 = vpop.f32.mrb[0].mxu0
        %v1563 = vpop.f32.mrb[0].mxu0
        %v1564 = vadd.f32 %v495, %v1563
        %v1565 = vpop.f32.mrb[0].mxu0
        %1566 = vdwg.mxu0
        %v1567 = vmax.f32 %v1057, 0.0
        %v1568 = vmax.f32 %v1060, 0.0
        %v1569 = vmax.f32 %v1065, 0.0
        %v1570 = vmax.f32 %v1068, 0.0
        %v1571 = vmax.f32 %v1073, 0.0
        %v1572 = vmax.f32 %v1076, 0.0
        %v1573 = vmax.f32 %v1081, 0.0
        %v1574 = vmax.f32 %v1084, 0.0
        %v1575 = vmax.f32 %v1089, 0.0
        %v1576 = vmax.f32 %v1092, 0.0
        %v1577 = vmax.f32 %v1097, 0.0
        %v1578 = vmax.f32 %v1100, 0.0
        %v1579 = vmax.f32 %v1105, 0.0
        %v1580 = vmax.f32 %v1108, 0.0
        %v1581 = vmax.f32 %v1113, 0.0
        %v1582 = vmax.f32 %v1116, 0.0
        %v1583 = vmax.f32 %v1121, 0.0
        %v1584 = vmax.f32 %v1124, 0.0
        %v1585 = vmax.f32 %v1129, 0.0
        %v1586 = vmax.f32 %v1132, 0.0
        %v1587 = vmax.f32 %v1137, 0.0
        %v1588 = vmax.f32 %v1140, 0.0
        %v1589 = vmax.f32 %v1145, 0.0
        %v1590 = vmax.f32 %v1148, 0.0
        %v1591 = vmax.f32 %v1153, 0.0
        %v1592 = vmax.f32 %v1156, 0.0
        %v1593 = vmax.f32 %v1161, 0.0
        %v1594 = vmax.f32 %v1164, 0.0
        %v1595 = vmax.f32 %v1169, 0.0
        %v1596 = vmax.f32 %v1172, 0.0
        %v1597 = vmax.f32 %v1177, 0.0
        %v1598 = vmax.f32 %v1180, 0.0
        %v1599 = vmax.f32 %v1185, 0.0
        %v1600 = vmax.f32 %v1188, 0.0
        %v1601 = vmax.f32 %v1193, 0.0
        %v1602 = vmax.f32 %v1196, 0.0
        %v1603 = vmax.f32 %v1201, 0.0
        %v1604 = vmax.f32 %v1204, 0.0
        %v1605 = vmax.f32 %v1209, 0.0
        %v1606 = vmax.f32 %v1212, 0.0
        %v1607 = vmax.f32 %v1217, 0.0
        %v1608 = vmax.f32 %v1220, 0.0
        %v1609 = vmax.f32 %v1225, 0.0
        %v1610 = vmax.f32 %v1228, 0.0
        %v1611 = vmax.f32 %v1233, 0.0
        %v1612 = vmax.f32 %v1236, 0.0
        %v1613 = vmax.f32 %v1241, 0.0
        %v1614 = vmax.f32 %v1244, 0.0
        %v1615 = vmax.f32 %v1249, 0.0
        %v1616 = vmax.f32 %v1252, 0.0
        %v1617 = vmax.f32 %v1257, 0.0
        %v1618 = vmax.f32 %v1260, 0.0
        %v1619 = vmax.f32 %v1265, 0.0
        %v1620 = vmax.f32 %v1268, 0.0
        %v1621 = vmax.f32 %v1273, 0.0
        %v1622 = vmax.f32 %v1276, 0.0
        %v1623 = vmax.f32 %v1281, 0.0
        %v1624 = vmax.f32 %v1284, 0.0
        %v1625 = vmax.f32 %v1289, 0.0
        %v1626 = vmax.f32 %v1292, 0.0
        %v1627 = vmax.f32 %v1297, 0.0
        %v1628 = vmax.f32 %v1300, 0.0
        %v1629 = vmax.f32 %v1305, 0.0
        %v1630 = vmax.f32 %v1308, 0.0
        %v1631 = vmax.f32 %v1313, 0.0
        %v1632 = vmax.f32 %v1316, 0.0
        %v1633 = vmax.f32 %v1321, 0.0
        %v1634 = vmax.f32 %v1324, 0.0
        %v1635 = vmax.f32 %v1329, 0.0
        %v1636 = vmax.f32 %v1332, 0.0
        %v1637 = vmax.f32 %v1337, 0.0
        %v1638 = vmax.f32 %v1340, 0.0
        %v1639 = vmax.f32 %v1345, 0.0
        %v1640 = vmax.f32 %v1348, 0.0
        %v1641 = vmax.f32 %v1353, 0.0
        %v1642 = vmax.f32 %v1356, 0.0
        %v1643 = vmax.f32 %v1361, 0.0
        %v1644 = vmax.f32 %v1364, 0.0
        %v1645 = vmax.f32 %v1369, 0.0
        %v1646 = vmax.f32 %v1372, 0.0
        %v1647 = vmax.f32 %v1377, 0.0
        %v1648 = vmax.f32 %v1380, 0.0
        %v1649 = vmax.f32 %v1385, 0.0
        %v1650 = vmax.f32 %v1388, 0.0
        %v1651 = vmax.f32 %v1393, 0.0
        %v1652 = vmax.f32 %v1396, 0.0
        %v1653 = vmax.f32 %v1401, 0.0
        %v1654 = vmax.f32 %v1404, 0.0
        %v1655 = vmax.f32 %v1409, 0.0
        %v1656 = vmax.f32 %v1412, 0.0
        %v1657 = vmax.f32 %v1417, 0.0
        %v1658 = vmax.f32 %v1420, 0.0
        %v1659 = vmax.f32 %v1425, 0.0
        %v1660 = vmax.f32 %v1428, 0.0
        %v1661 = vmax.f32 %v1433, 0.0
        %v1662 = vmax.f32 %v1436, 0.0
        %v1663 = vmax.f32 %v1441, 0.0
        %v1664 = vmax.f32 %v1444, 0.0
        %v1665 = vmax.f32 %v1449, 0.0
        %v1666 = vmax.f32 %v1452, 0.0
        %v1667 = vmax.f32 %v1457, 0.0
        %v1668 = vmax.f32 %v1460, 0.0
        %v1669 = vmax.f32 %v1465, 0.0
        %v1670 = vmax.f32 %v1468, 0.0
        %v1671 = vmax.f32 %v1473, 0.0
        %v1672 = vmax.f32 %v1476, 0.0
        %v1673 = vmax.f32 %v1481, 0.0
        %v1674 = vmax.f32 %v1484, 0.0
        %v1675 = vmax.f32 %v1489, 0.0
        %v1676 = vmax.f32 %v1492, 0.0
        %v1677 = vmax.f32 %v1497, 0.0
        %v1678 = vmax.f32 %v1500, 0.0
        %v1679 = vmax.f32 %v1505, 0.0
        %v1680 = vmax.f32 %v1508, 0.0
        %v1681 = vmax.f32 %v1513, 0.0
        %v1682 = vmax.f32 %v1516, 0.0
        %v1683 = vmax.f32 %v1521, 0.0
        %v1684 = vmax.f32 %v1524, 0.0
        %v1685 = vmax.f32 %v1529, 0.0
        %v1686 = vmax.f32 %v1532, 0.0
        %v1687 = vmax.f32 %v1537, 0.0
        %v1688 = vmax.f32 %v1540, 0.0
        %v1689 = vmax.f32 %v1545, 0.0
        %v1690 = vmax.f32 %v1548, 0.0
        %v1691 = vmax.f32 %v1553, 0.0
        %v1692 = vmax.f32 %v1556, 0.0
        %v1693 = vmax.f32 %v1561, 0.0
        %v1694 = vmax.f32 %v1564, 0.0
        %v1695 = vld [vmem:[%s3] sm:$0xff]
        %v1696 = vld [vmem:[%s3 + $0x8] sm:$0xff]
        %v1697 = vld [vmem:[%s3 + $0x10] sm:$0xff]
        %v1698 = vld [vmem:[%s3 + $0x18] sm:$0xff]
        %v1699 = vld [vmem:[%s3 + $0x20] sm:$0xff]
        %v1700 = vld [vmem:[%s3 + $0x28] sm:$0xff]
        %v1701 = vld [vmem:[%s3 + $0x30] sm:$0xff]
        %v1702 = vld [vmem:[%s3 + $0x38] sm:$0xff]
        %v1703 = vld [vmem:[%s3 + $0x40] sm:$0xff]
        %v1704 = vld [vmem:[%s3 + $0x48] sm:$0xff]
        %v1705 = vld [vmem:[%s3 + $0x50] sm:$0xff]
        %v1706 = vld [vmem:[%s3 + $0x58] sm:$0xff]
        %v1707 = vld [vmem:[%s3 + $0x60] sm:$0xff]
        %v1708 = vld [vmem:[%s3 + $0x68] sm:$0xff]
        %v1709 = vld [vmem:[%s3 + $0x70] sm:$0xff]
        %v1710 = vld [vmem:[%s3 + $0x78] sm:$0xff]
        %v1711 = vld [vmem:[%s3 + $0x80] sm:$0x33]
        %v1712 = vld [vmem:[%s3 + $0x88] sm:$0x33]
        %v1713 = vld [vmem:[%s3 + $0x90] sm:$0x33]
        %v1714 = vld [vmem:[%s3 + $0x98] sm:$0x33]
        %v1715 = vpack.c.bf16 %v1568, %v1567
        %v1716 = vpack.c.bf16 %v1570, %v1569
        %v1717 = vpack.c.bf16 %v1572, %v1571
        %v1718 = vpack.c.bf16 %v1574, %v1573
        %v1719 = vpack.c.bf16 %v1576, %v1575
        %v1720 = vpack.c.bf16 %v1578, %v1577
        %v1721 = vpack.c.bf16 %v1580, %v1579
        %v1722 = vpack.c.bf16 %v1582, %v1581
        %v1723 = vpack.c.bf16 %v1584, %v1583
        %v1724 = vpack.c.bf16 %v1586, %v1585
        %v1725 = vpack.c.bf16 %v1588, %v1587
        %v1726 = vpack.c.bf16 %v1590, %v1589
        %v1727 = vpack.c.bf16 %v1592, %v1591
        %v1728 = vpack.c.bf16 %v1594, %v1593
        %v1729 = vpack.c.bf16 %v1596, %v1595
        %v1730 = vpack.c.bf16 %v1598, %v1597
        %v1731 = vpack.c.bf16 %v1600, %v1599
        %v1732 = vpack.c.bf16 %v1602, %v1601
        %v1733 = vpack.c.bf16 %v1604, %v1603
        %v1734 = vpack.c.bf16 %v1606, %v1605
        %v1735 = vpack.c.bf16 %v1608, %v1607
        %v1736 = vpack.c.bf16 %v1610, %v1609
        %v1737 = vpack.c.bf16 %v1612, %v1611
        %v1738 = vpack.c.bf16 %v1614, %v1613
        %v1739 = vpack.c.bf16 %v1616, %v1615
        %v1740 = vpack.c.bf16 %v1618, %v1617
        %v1741 = vpack.c.bf16 %v1620, %v1619
        %v1742 = vpack.c.bf16 %v1622, %v1621
        %v1743 = vpack.c.bf16 %v1624, %v1623
        %v1744 = vpack.c.bf16 %v1626, %v1625
        %v1745 = vpack.c.bf16 %v1628, %v1627
        %v1746 = vpack.c.bf16 %v1630, %v1629
        %v1747 = vpack.c.bf16 %v1632, %v1631
        %v1748 = vpack.c.bf16 %v1634, %v1633
        %v1749 = vpack.c.bf16 %v1636, %v1635
        %v1750 = vpack.c.bf16 %v1638, %v1637
        %v1751 = vpack.c.bf16 %v1640, %v1639
        %v1752 = vpack.c.bf16 %v1642, %v1641
        %v1753 = vpack.c.bf16 %v1644, %v1643
        %v1754 = vpack.c.bf16 %v1646, %v1645
        %v1755 = vpack.c.bf16 %v1648, %v1647
        %v1756 = vpack.c.bf16 %v1650, %v1649
        %v1757 = vpack.c.bf16 %v1652, %v1651
        %v1758 = vpack.c.bf16 %v1654, %v1653
        %v1759 = vpack.c.bf16 %v1656, %v1655
        %v1760 = vpack.c.bf16 %v1658, %v1657
        %v1761 = vpack.c.bf16 %v1660, %v1659
        %v1762 = vpack.c.bf16 %v1662, %v1661
        %v1763 = vpack.c.bf16 %v1664, %v1663
        %v1764 = vpack.c.bf16 %v1666, %v1665
        %v1765 = vpack.c.bf16 %v1668, %v1667
        %v1766 = vpack.c.bf16 %v1670, %v1669
        %v1767 = vpack.c.bf16 %v1672, %v1671
        %v1768 = vpack.c.bf16 %v1674, %v1673
        %v1769 = vpack.c.bf16 %v1676, %v1675
        %v1770 = vpack.c.bf16 %v1678, %v1677
        %v1771 = vpack.c.bf16 %v1680, %v1679
        %v1772 = vpack.c.bf16 %v1682, %v1681
        %v1773 = vpack.c.bf16 %v1684, %v1683
        %v1774 = vpack.c.bf16 %v1686, %v1685
        %v1775 = vpack.c.bf16 %v1688, %v1687
        %v1776 = vpack.c.bf16 %v1690, %v1689
        %v1777 = vpack.c.bf16 %v1692, %v1691
        %v1778 = vpack.c.bf16 %v1694, %v1693
        %v1799 = vunpack.c.l.b16 %v1695
        %v1800 = vunpack.c.h.b16 %v1695
        %v1801 = vunpack.c.l.b16 %v1696
        %v1802 = vunpack.c.h.b16 %v1696
        %v1803 = vunpack.c.l.b16 %v1697
        %v1804 = vunpack.c.h.b16 %v1697
        %v1805 = vunpack.c.l.b16 %v1698
        %v1806 = vunpack.c.h.b16 %v1698
        %v1807 = vunpack.c.l.b16 %v1699
        %v1808 = vunpack.c.h.b16 %v1699
        %v1809 = vunpack.c.l.b16 %v1700
        %v1810 = vunpack.c.h.b16 %v1700
        %v1811 = vunpack.c.l.b16 %v1701
        %v1812 = vunpack.c.h.b16 %v1701
        %v1813 = vunpack.c.l.b16 %v1702
        %v1814 = vunpack.c.h.b16 %v1702
        %v1815 = vunpack.c.l.b16 %v1703
        %v1816 = vunpack.c.h.b16 %v1703
        %v1817 = vunpack.c.l.b16 %v1704
        %v1818 = vunpack.c.h.b16 %v1704
        %v1819 = vunpack.c.l.b16 %v1705
        %v1820 = vunpack.c.h.b16 %v1705
        %v1821 = vunpack.c.l.b16 %v1706
        %v1822 = vunpack.c.h.b16 %v1706
        %v1823 = vunpack.c.l.b16 %v1707
        %v1824 = vunpack.c.h.b16 %v1707
        %v1825 = vunpack.c.l.b16 %v1708
        %v1826 = vunpack.c.h.b16 %v1708
        %v1827 = vunpack.c.l.b16 %v1709
        %v1828 = vunpack.c.h.b16 %v1709
        %v1829 = vunpack.c.l.b16 %v1710
        %v1830 = vunpack.c.h.b16 %v1710
        %v1831 = vunpack.c.l.b16 %v1711
        %v1832 = vunpack.c.h.b16 %v1711
        %v1833 = vunpack.c.l.b16 %v1712
        %v1834 = vunpack.c.h.b16 %v1712
        %v1835 = vunpack.c.l.b16 %v1713
        %v1836 = vunpack.c.h.b16 %v1713
        %v1837 = vunpack.c.l.b16 %v1714
        %v1838 = vunpack.c.h.b16 %v1714
        %v1839 = vpack.c.b16 %v1807, %v1799
        %v1840 = vpack.c.b16 %v1808, %v1800
        %v1841 = vpack.c.b16 %v1809, %v1801
        %v1842 = vpack.c.b16 %v1810, %v1802
        %v1843 = vpack.c.b16 %v1811, %v1803
        %v1844 = vpack.c.b16 %v1812, %v1804
        %v1845 = vpack.c.b16 %v1813, %v1805
        %v1846 = vpack.c.b16 %v1814, %v1806
        %v1847 = vpack.c.b16 %v1823, %v1815
        %v1848 = vpack.c.b16 %v1824, %v1816
        %v1849 = vpack.c.b16 %v1825, %v1817
        %v1850 = vpack.c.b16 %v1826, %v1818
        %v1851 = vpack.c.b16 %v1827, %v1819
        %v1852 = vpack.c.b16 %v1828, %v1820
        %v1853 = vpack.c.b16 %v1829, %v1821
        %v1854 = vpack.c.b16 %v1830, %v1822
        %v1855 = vpack.c.b16 %v1831, %v1831
        %v1856 = vpack.c.b16 %v1832, %v1832
        %v1857 = vpack.c.b16 %v1833, %v1833
        %v1858 = vpack.c.b16 %v1834, %v1834
        %v1859 = vpack.c.b16 %v1835, %v1835
        %v1860 = vpack.c.b16 %v1836, %v1836
        %v1861 = vpack.c.b16 %v1837, %v1837
        %v1862 = vpack.c.b16 %v1838, %v1838
        %1887 = vmatprep.subr.bf16.mxu0 0
        %1888 = vmatpush1.bf16.msra.mxu0 %v1715
        %1889 = vmatprep.subr.bf16.mxu0 0
        %1890 = vmatpush1.bf16.msra.mxu0 %v1716
        %1891 = vmatprep.subr.bf16.mxu0 0
        %1892 = vmatpush1.bf16.msra.mxu0 %v1717
        %1893 = vmatprep.subr.bf16.mxu0 0
        %1894 = vmatpush1.bf16.msra.mxu0 %v1718
        %1895 = vmatprep.subr.bf16.mxu0 0
        %1896 = vmatpush1.bf16.msra.mxu0 %v1719
        %1897 = vmatprep.subr.bf16.mxu0 0
        %1898 = vmatpush1.bf16.msra.mxu0 %v1720
        %1899 = vmatprep.subr.bf16.mxu0 0
        %1900 = vmatpush1.bf16.msra.mxu0 %v1721
        %1901 = vmatprep.subr.bf16.mxu0 0
        %1902 = vmatpush1.bf16.msra.mxu0 %v1722
        %1903 = vmatprep.subr.bf16.mxu0 0
        %1904 = vmatpush1.bf16.msra.mxu0 %v1723
        %1905 = vmatprep.subr.bf16.mxu0 0
        %1906 = vmatpush1.bf16.msra.mxu0 %v1724
        %1907 = vmatprep.subr.bf16.mxu0 0
        %1908 = vmatpush1.bf16.msra.mxu0 %v1725
        %1909 = vmatprep.subr.bf16.mxu0 0
        %1910 = vmatpush1.bf16.msra.mxu0 %v1726
        %1911 = vmatprep.subr.bf16.mxu0 0
        %1912 = vmatpush1.bf16.msra.mxu0 %v1727
        %1913 = vmatprep.subr.bf16.mxu0 0
        %1914 = vmatpush1.bf16.msra.mxu0 %v1728
        %1915 = vmatprep.subr.bf16.mxu0 0
        %1916 = vmatpush1.bf16.msra.mxu0 %v1729
        %1917 = vmatprep.subr.bf16.mxu0 0
        %1918 = vmatpush1.bf16.msra.mxu0 %v1730
        %1919 = vmatprep.mubr.bf16.mxu0 %v1840
        %1920 = vmatmul.mubr.bf16.gmra.mrb[0].mxu0 %v1839
        %v1921 = vpop.f32.mrb[0].mxu0
        %v1922 = vadd.f32 0.0, %v1921
        %v1923 = vpop.f32.mrb[0].mxu0
        %v1924 = vpop.f32.mrb[0].mxu0
        %v1925 = vadd.f32 0.0, %v1924
        %v1926 = vpop.f32.mrb[0].mxu0
        %1927 = vmatprep.mubr.bf16.mxu0 %v1848
        %1928 = vmatmul.mubr.bf16.gmra.mrb[0].mxu0 %v1847
        %v1929 = vpop.f32.mrb[0].mxu0
        %v1930 = vadd.f32 0.0, %v1929
        %v1931 = vpop.f32.mrb[0].mxu0
        %v1932 = vpop.f32.mrb[0].mxu0
        %v1933 = vadd.f32 0.0, %v1932
        %v1934 = vpop.f32.mrb[0].mxu0
        %1935 = vmatprep.mubr.bf16.mxu0 %v1856
        %1936 = vmatmul.mubr.bf16.gmra.mrb[0].mxu0 %v1855
        %v1937 = vpop.f32.mrb[0].mxu0
        %v1938 = vadd.f32 0.0, %v1937
        %v1939 = vpop.f32.mrb[0].mxu0
        %v1940 = vpop.f32.mrb[0].mxu0
        %v1941 = vpop.f32.mrb[0].mxu0
        %1942 = vdwg.mxu0
        %1943 = vmatprep.subr.bf16.mxu0 0
        %1944 = vmatpush1.bf16.msra.mxu0 %v1731
        %1945 = vmatprep.subr.bf16.mxu0 0
        %1946 = vmatpush1.bf16.msra.mxu0 %v1732
        %1947 = vmatprep.subr.bf16.mxu0 0
        %1948 = vmatpush1.bf16.msra.mxu0 %v1733
        %1949 = vmatprep.subr.bf16.mxu0 0
        %1950 = vmatpush1.bf16.msra.mxu0 %v1734
        %1951 = vmatprep.subr.bf16.mxu0 0
        %1952 = vmatpush1.bf16.msra.mxu0 %v1735
        %1953 = vmatprep.subr.bf16.mxu0 0
        %1954 = vmatpush1.bf16.msra.mxu0 %v1736
        %1955 = vmatprep.subr.bf16.mxu0 0
        %1956 = vmatpush1.bf16.msra.mxu0 %v1737
        %1957 = vmatprep.subr.bf16.mxu0 0
        %1958 = vmatpush1.bf16.msra.mxu0 %v1738
        %1959 = vmatprep.subr.bf16.mxu0 0
        %1960 = vmatpush1.bf16.msra.mxu0 %v1739
        %1961 = vmatprep.subr.bf16.mxu0 0
        %1962 = vmatpush1.bf16.msra.mxu0 %v1740
        %1963 = vmatprep.subr.bf16.mxu0 0
        %1964 = vmatpush1.bf16.msra.mxu0 %v1741
        %1965 = vmatprep.subr.bf16.mxu0 0
        %1966 = vmatpush1.bf16.msra.mxu0 %v1742
        %1967 = vmatprep.subr.bf16.mxu0 0
        %1968 = vmatpush1.bf16.msra.mxu0 %v1743
        %1969 = vmatprep.subr.bf16.mxu0 0
        %1970 = vmatpush1.bf16.msra.mxu0 %v1744
        %1971 = vmatprep.subr.bf16.mxu0 0
        %1972 = vmatpush1.bf16.msra.mxu0 %v1745
        %1973 = vmatprep.subr.bf16.mxu0 0
        %1974 = vmatpush1.bf16.msra.mxu0 %v1746
        %1975 = vmatprep.mubr.bf16.mxu0 %v1842
        %1976 = vmatmul.mubr.bf16.gmra.mrb[0].mxu0 %v1841
        %v1977 = vpop.f32.mrb[0].mxu0
        %v1978 = vadd.f32 %v1922, %v1977
        %v1979 = vpop.f32.mrb[0].mxu0
        %v1980 = vpop.f32.mrb[0].mxu0
        %v1981 = vadd.f32 %v1925, %v1980
        %v1982 = vpop.f32.mrb[0].mxu0
        %1983 = vmatprep.mubr.bf16.mxu0 %v1850
        %1984 = vmatmul.mubr.bf16.gmra.mrb[0].mxu0 %v1849
        %v1985 = vpop.f32.mrb[0].mxu0
        %v1986 = vadd.f32 %v1930, %v1985
        %v1987 = vpop.f32.mrb[0].mxu0
        %v1988 = vpop.f32.mrb[0].mxu0
        %v1989 = vadd.f32 %v1933, %v1988
        %v1990 = vpop.f32.mrb[0].mxu0
        %1991 = vmatprep.mubr.bf16.mxu0 %v1858
        %1992 = vmatmul.mubr.bf16.gmra.mrb[0].mxu0 %v1857
        %v1993 = vpop.f32.mrb[0].mxu0
        %v1994 = vadd.f32 %v1938, %v1993
        %v1995 = vpop.f32.mrb[0].mxu0
        %v1996 = vpop.f32.mrb[0].mxu0
        %v1997 = vpop.f32.mrb[0].mxu0
        %1998 = vdwg.mxu0
        %1999 = vmatprep.subr.bf16.mxu0 0
        %2000 = vmatpush1.bf16.msra.mxu0 %v1747
        %2001 = vmatprep.subr.bf16.mxu0 0
        %2002 = vmatpush1.bf16.msra.mxu0 %v1748
        %2003 = vmatprep.subr.bf16.mxu0 0
        %2004 = vmatpush1.bf16.msra.mxu0 %v1749
        %2005 = vmatprep.subr.bf16.mxu0 0
        %2006 = vmatpush1.bf16.msra.mxu0 %v1750
        %2007 = vmatprep.subr.bf16.mxu0 0
        %2008 = vmatpush1.bf16.msra.mxu0 %v1751
        %2009 = vmatprep.subr.bf16.mxu0 0
        %2010 = vmatpush1.bf16.msra.mxu0 %v1752
        %2011 = vmatprep.subr.bf16.mxu0 0
        %2012 = vmatpush1.bf16.msra.mxu0 %v1753
        %2013 = vmatprep.subr.bf16.mxu0 0
        %2014 = vmatpush1.bf16.msra.mxu0 %v1754
        %2015 = vmatprep.subr.bf16.mxu0 0
        %2016 = vmatpush1.bf16.msra.mxu0 %v1755
        %2017 = vmatprep.subr.bf16.mxu0 0
        %2018 = vmatpush1.bf16.msra.mxu0 %v1756
        %2019 = vmatprep.subr.bf16.mxu0 0
        %2020 = vmatpush1.bf16.msra.mxu0 %v1757
        %2021 = vmatprep.subr.bf16.mxu0 0
        %2022 = vmatpush1.bf16.msra.mxu0 %v1758
        %2023 = vmatprep.subr.bf16.mxu0 0
        %2024 = vmatpush1.bf16.msra.mxu0 %v1759
        %2025 = vmatprep.subr.bf16.mxu0 0
        %2026 = vmatpush1.bf16.msra.mxu0 %v1760
        %2027 = vmatprep.subr.bf16.mxu0 0
        %2028 = vmatpush1.bf16.msra.mxu0 %v1761
        %2029 = vmatprep.subr.bf16.mxu0 0
        %2030 = vmatpush1.bf16.msra.mxu0 %v1762
        %2031 = vmatprep.mubr.bf16.mxu0 %v1844
        %2032 = vmatmul.mubr.bf16.gmra.mrb[0].mxu0 %v1843
        %v2033 = vpop.f32.mrb[0].mxu0
        %v2034 = vadd.f32 %v1978, %v2033
        %v2035 = vpop.f32.mrb[0].mxu0
        %v2036 = vpop.f32.mrb[0].mxu0
        %v2037 = vadd.f32 %v1981, %v2036
        %v2038 = vpop.f32.mrb[0].mxu0
        %2039 = vmatprep.mubr.bf16.mxu0 %v1852
        %2040 = vmatmul.mubr.bf16.gmra.mrb[0].mxu0 %v1851
        %v2041 = vpop.f32.mrb[0].mxu0
        %v2042 = vadd.f32 %v1986, %v2041
        %v2043 = vpop.f32.mrb[0].mxu0
        %v2044 = vpop.f32.mrb[0].mxu0
        %v2045 = vadd.f32 %v1989, %v2044
        %v2046 = vpop.f32.mrb[0].mxu0
        %2047 = vmatprep.mubr.bf16.mxu0 %v1860
        %2048 = vmatmul.mubr.bf16.gmra.mrb[0].mxu0 %v1859
        %v2049 = vpop.f32.mrb[0].mxu0
        %v2050 = vadd.f32 %v1994, %v2049
        %v2051 = vpop.f32.mrb[0].mxu0
        %v2052 = vpop.f32.mrb[0].mxu0
        %v2053 = vpop.f32.mrb[0].mxu0
        %2054 = vdwg.mxu0
        %2055 = vmatprep.subr.bf16.mxu0 0
        %2056 = vmatpush1.bf16.msra.mxu0 %v1763
        %2057 = vmatprep.subr.bf16.mxu0 0
        %2058 = vmatpush1.bf16.msra.mxu0 %v1764
        %2059 = vmatprep.subr.bf16.mxu0 0
        %2060 = vmatpush1.bf16.msra.mxu0 %v1765
        %2061 = vmatprep.subr.bf16.mxu0 0
        %2062 = vmatpush1.bf16.msra.mxu0 %v1766
        %2063 = vmatprep.subr.bf16.mxu0 0
        %2064 = vmatpush1.bf16.msra.mxu0 %v1767
        %2065 = vmatprep.subr.bf16.mxu0 0
        %2066 = vmatpush1.bf16.msra.mxu0 %v1768
        %2067 = vmatprep.subr.bf16.mxu0 0
        %2068 = vmatpush1.bf16.msra.mxu0 %v1769
        %2069 = vmatprep.subr.bf16.mxu0 0
        %2070 = vmatpush1.bf16.msra.mxu0 %v1770
        %2071 = vmatprep.subr.bf16.mxu0 0
        %2072 = vmatpush1.bf16.msra.mxu0 %v1771
        %2073 = vmatprep.subr.bf16.mxu0 0
        %2074 = vmatpush1.bf16.msra.mxu0 %v1772
        %2075 = vmatprep.subr.bf16.mxu0 0
        %2076 = vmatpush1.bf16.msra.mxu0 %v1773
        %2077 = vmatprep.subr.bf16.mxu0 0
        %2078 = vmatpush1.bf16.msra.mxu0 %v1774
        %2079 = vmatprep.subr.bf16.mxu0 0
        %2080 = vmatpush1.bf16.msra.mxu0 %v1775
        %2081 = vmatprep.subr.bf16.mxu0 0
        %2082 = vmatpush1.bf16.msra.mxu0 %v1776
        %2083 = vmatprep.subr.bf16.mxu0 0
        %2084 = vmatpush1.bf16.msra.mxu0 %v1777
        %2085 = vmatprep.subr.bf16.mxu0 0
        %2086 = vmatpush1.bf16.msra.mxu0 %v1778
        %2087 = vmatprep.mubr.bf16.mxu0 %v1846
        %2088 = vmatmul.mubr.bf16.gmra.mrb[0].mxu0 %v1845
        %v2089 = vpop.f32.mrb[0].mxu0
        %v2090 = vadd.f32 %v2034, %v2089
        %v2091 = vpop.f32.mrb[0].mxu0
        %v2092 = vpop.f32.mrb[0].mxu0
        %v2093 = vadd.f32 %v2037, %v2092
        %v2094 = vpop.f32.mrb[0].mxu0
        %2095 = vmatprep.mubr.bf16.mxu0 %v1854
        %2096 = vmatmul.mubr.bf16.gmra.mrb[0].mxu0 %v1853
        %v2097 = vpop.f32.mrb[0].mxu0
        %v2098 = vadd.f32 %v2042, %v2097
        %v2099 = vpop.f32.mrb[0].mxu0
        %v2100 = vpop.f32.mrb[0].mxu0
        %v2101 = vadd.f32 %v2045, %v2100
        %v2102 = vpop.f32.mrb[0].mxu0
        %2103 = vmatprep.mubr.bf16.mxu0 %v1862
        %2104 = vmatmul.mubr.bf16.gmra.mrb[0].mxu0 %v1861
        %v2105 = vpop.f32.mrb[0].mxu0
        %v2106 = vadd.f32 %v2050, %v2105
        %v2107 = vpop.f32.mrb[0].mxu0
        %v2108 = vpop.f32.mrb[0].mxu0
        %v2109 = vpop.f32.mrb[0].mxu0
        %2110 = vdwg.mxu0
        %v2111 = vld [vmem:[%s4] sm:$0xff]
        %v2112 = vld [vmem:[%s4 + $0x8] sm:$0xff]
        %v2113 = vld [vmem:[%s4 + $0x10] sm:$0xff]
        %v2114 = vld [vmem:[%s4 + $0x18] sm:$0xff]
        %v2115 = vld [vmem:[%s4 + $0x20] sm:$0xff]
        %v2116 = vld [vmem:[%s4 + $0x28] sm:$0xff]
        %v2117 = vld [vmem:[%s4 + $0x30] sm:$0xff]
        %v2118 = vld [vmem:[%s4 + $0x38] sm:$0xff]
        %s2119 = scalar_lea.vmem %s4, 64
        %v2120 = vld [vmem:[%s2119] sm:$0xff]
        %v2121 = vld [vmem:[%s2119 + $0x8] sm:$0xff]
        %v2122 = vld [vmem:[%s2119 + $0x10] sm:$0xff]
        %v2123 = vld [vmem:[%s2119 + $0x18] sm:$0xff]
        %v2124 = vld [vmem:[%s2119 + $0x20] sm:$0xff]
        %v2125 = vld [vmem:[%s2119 + $0x28] sm:$0xff]
        %v2126 = vld [vmem:[%s2119 + $0x30] sm:$0xff]
        %v2127 = vld [vmem:[%s2119 + $0x38] sm:$0xff]
        %v2129 = vrot.slane %v2090, 4
        %vm2130 = vcmask 523264
        %v2131 = vsel %vm2130, %v2129, 0
        %2133 = vmatprep.subr.mxu0 0.0
        %2134 = vmatpush1.msra.mxu0 %v2120
        %2135 = vmatprep.subr.mxu0 0.0
        %2136 = vmatpush1.msra.mxu0 %v2121
        %2137 = vmatprep.subr.mxu0 0.0
        %2138 = vmatpush1.msra.mxu0 %v2122
        %2139 = vmatprep.subr.mxu0 0.0
        %2140 = vmatpush1.msra.mxu0 %v2123
        %2141 = vmatprep.subr.mxu0 0.0
        %2142 = vmatpush1.msra.mxu0 %v2124
        %2143 = vmatprep.subr.mxu0 0.0
        %2144 = vmatpush1.msra.mxu0 %v2125
        %2145 = vmatprep.subr.mxu0 0.0
        %2146 = vmatpush1.msra.mxu0 %v2126
        %2147 = vmatprep.subr.mxu0 0.0
        %2148 = vmatpush1.msra.mxu0 %v2127
        %2149 = vmatprep.subr.mxu0 0.0
        %2150 = vmatpush1.msra.mxu0 0.0
        %2151 = vmatprep.subr.mxu0 0.0
        %2152 = vmatpush1.msra.mxu0 0.0
        %2153 = vmatprep.subr.mxu0 0.0
        %2154 = vmatpush1.msra.mxu0 0.0
        %2155 = vmatprep.subr.mxu0 0.0
        %2156 = vmatpush1.msra.mxu0 0.0
        %2157 = vmatprep.subr.mxu0 0.0
        %2158 = vmatpush1.msra.mxu0 0.0
        %2159 = vmatprep.subr.mxu0 0.0
        %2160 = vmatpush1.msra.mxu0 0.0
        %2161 = vmatprep.subr.mxu0 0.0
        %2162 = vmatpush1.msra.mxu0 0.0
        %2163 = vmatprep.subr.mxu0 0.0
        %2164 = vmatpush1.msra.mxu0 0.0
        %2165 = vmatprep.subr.mxu0 0.0
        %2166 = vmatpush1.msra.mxu0 0.0
        %2167 = vmatprep.subr.mxu0 0.0
        %2168 = vmatpush1.msra.mxu0 0.0
        %2169 = vmatprep.subr.mxu0 0.0
        %2170 = vmatpush1.msra.mxu0 0.0
        %2171 = vmatprep.subr.mxu0 0.0
        %2172 = vmatpush1.msra.mxu0 0.0
        %2173 = vmatprep.subr.mxu0 0.0
        %2174 = vmatpush1.msra.mxu0 0.0
        %2175 = vmatprep.subr.mxu0 0.0
        %2176 = vmatpush1.msra.mxu0 0.0
        %2177 = vmatprep.subr.mxu0 0.0
        %2178 = vmatpush1.msra.mxu0 0.0
        %2179 = vmatprep.subr.mxu0 0.0
        %2180 = vmatpush1.msra.mxu0 0.0
        %2181 = vmatprep.subr.mxu0 0.0
        %2182 = vmatpush1.msra.mxu0 0.0
        %2183 = vmatprep.subr.mxu0 0.0
        %2184 = vmatpush1.msra.mxu0 0.0
        %2185 = vmatprep.subr.mxu0 0.0
        %2186 = vmatpush1.msra.mxu0 0.0
        %2187 = vmatprep.subr.mxu0 0.0
        %2188 = vmatpush1.msra.mxu0 0.0
        %2189 = vmatprep.subr.mxu0 0.0
        %2190 = vmatpush1.msra.mxu0 0.0
        %2191 = vmatprep.subr.mxu0 0.0
        %2192 = vmatpush1.msra.mxu0 0.0
        %2193 = vmatprep.subr.mxu0 0.0
        %2194 = vmatpush1.msra.mxu0 0.0
        %2195 = vmatprep.subr.mxu0 0.0
        %2196 = vmatpush1.msra.mxu0 0.0
        %2197 = vmatprep.mubr.f32.mxu0 0.0
        %2198 = vmatmul.mubr.f32.gmra.mrb[0].mxu0 %v2131
        %v2199 = vpop.f32.mrb[0].mxu0
        %v2200 = vadd.f32 0.0, %v2199
        %v2201 = vpop.f32.mrb[0].mxu0
        %2202 = vdwg.mxu0
        %v2203 = vsel %vm2130, %v2090, 0
        %2205 = vmatprep.subr.mxu0 0.0
        %2206 = vmatpush1.msra.mxu0 %v2111
        %2207 = vmatprep.subr.mxu0 0.0
        %2208 = vmatpush1.msra.mxu0 %v2112
        %2209 = vmatprep.subr.mxu0 0.0
        %2210 = vmatpush1.msra.mxu0 %v2113
        %2211 = vmatprep.subr.mxu0 0.0
        %2212 = vmatpush1.msra.mxu0 %v2114
        %2213 = vmatprep.subr.mxu0 0.0
        %2214 = vmatpush1.msra.mxu0 %v2115
        %2215 = vmatprep.subr.mxu0 0.0
        %2216 = vmatpush1.msra.mxu0 %v2116
        %2217 = vmatprep.subr.mxu0 0.0
        %2218 = vmatpush1.msra.mxu0 %v2117
        %2219 = vmatprep.subr.mxu0 0.0
        %2220 = vmatpush1.msra.mxu0 %v2118
        %2221 = vmatprep.subr.mxu0 0.0
        %2222 = vmatpush1.msra.mxu0 0.0
        %2223 = vmatprep.subr.mxu0 0.0
        %2224 = vmatpush1.msra.mxu0 0.0
        %2225 = vmatprep.subr.mxu0 0.0
        %2226 = vmatpush1.msra.mxu0 0.0
        %2227 = vmatprep.subr.mxu0 0.0
        %2228 = vmatpush1.msra.mxu0 0.0
        %2229 = vmatprep.subr.mxu0 0.0
        %2230 = vmatpush1.msra.mxu0 0.0
        %2231 = vmatprep.subr.mxu0 0.0
        %2232 = vmatpush1.msra.mxu0 0.0
        %2233 = vmatprep.subr.mxu0 0.0
        %2234 = vmatpush1.msra.mxu0 0.0
        %2235 = vmatprep.subr.mxu0 0.0
        %2236 = vmatpush1.msra.mxu0 0.0
        %2237 = vmatprep.subr.mxu0 0.0
        %2238 = vmatpush1.msra.mxu0 0.0
        %2239 = vmatprep.subr.mxu0 0.0
        %2240 = vmatpush1.msra.mxu0 0.0
        %2241 = vmatprep.subr.mxu0 0.0
        %2242 = vmatpush1.msra.mxu0 0.0
        %2243 = vmatprep.subr.mxu0 0.0
        %2244 = vmatpush1.msra.mxu0 0.0
        %2245 = vmatprep.subr.mxu0 0.0
        %2246 = vmatpush1.msra.mxu0 0.0
        %2247 = vmatprep.subr.mxu0 0.0
        %2248 = vmatpush1.msra.mxu0 0.0
        %2249 = vmatprep.subr.mxu0 0.0
        %2250 = vmatpush1.msra.mxu0 0.0
        %2251 = vmatprep.subr.mxu0 0.0
        %2252 = vmatpush1.msra.mxu0 0.0
        %2253 = vmatprep.subr.mxu0 0.0
        %2254 = vmatpush1.msra.mxu0 0.0
        %2255 = vmatprep.subr.mxu0 0.0
        %2256 = vmatpush1.msra.mxu0 0.0
        %2257 = vmatprep.subr.mxu0 0.0
        %2258 = vmatpush1.msra.mxu0 0.0
        %2259 = vmatprep.subr.mxu0 0.0
        %2260 = vmatpush1.msra.mxu0 0.0
        %2261 = vmatprep.subr.mxu0 0.0
        %2262 = vmatpush1.msra.mxu0 0.0
        %2263 = vmatprep.subr.mxu0 0.0
        %2264 = vmatpush1.msra.mxu0 0.0
        %2265 = vmatprep.subr.mxu0 0.0
        %2266 = vmatpush1.msra.mxu0 0.0
        %2267 = vmatprep.subr.mxu0 0.0
        %2268 = vmatpush1.msra.mxu0 0.0
        %2269 = vmatprep.mubr.f32.mxu0 0.0
        %2270 = vmatmul.mubr.f32.gmra.mrb[0].mxu0 %v2203
        %v2271 = vpop.f32.mrb[0].mxu0
        %v2272 = vadd.f32 %v2200, %v2271
        %v2273 = vpop.f32.mrb[0].mxu0
        %2274 = vdwg.mxu0
        %s2275 = scalar_lea.vmem %s4, 128
        %v2276 = vld [vmem:[%s2275] sm:$0xff]
        %v2277 = vld [vmem:[%s2275 + $0x8] sm:$0xff]
        %v2278 = vld [vmem:[%s2275 + $0x10] sm:$0xff]
        %v2279 = vld [vmem:[%s2275 + $0x18] sm:$0xff]
        %v2280 = vld [vmem:[%s2275 + $0x20] sm:$0xff]
        %v2281 = vld [vmem:[%s2275 + $0x28] sm:$0xff]
        %v2282 = vld [vmem:[%s2275 + $0x30] sm:$0xff]
        %v2283 = vld [vmem:[%s2275 + $0x38] sm:$0xff]
        %v2285 = vsel %vm2130, %v2093, 0
        %2287 = vmatprep.subr.mxu0 0.0
        %2288 = vmatpush1.msra.mxu0 %v2276
        %2289 = vmatprep.subr.mxu0 0.0
        %2290 = vmatpush1.msra.mxu0 %v2277
        %2291 = vmatprep.subr.mxu0 0.0
        %2292 = vmatpush1.msra.mxu0 %v2278
        %2293 = vmatprep.subr.mxu0 0.0
        %2294 = vmatpush1.msra.mxu0 %v2279
        %2295 = vmatprep.subr.mxu0 0.0
        %2296 = vmatpush1.msra.mxu0 %v2280
        %2297 = vmatprep.subr.mxu0 0.0
        %2298 = vmatpush1.msra.mxu0 %v2281
        %2299 = vmatprep.subr.mxu0 0.0
        %2300 = vmatpush1.msra.mxu0 %v2282
        %2301 = vmatprep.subr.mxu0 0.0
        %2302 = vmatpush1.msra.mxu0 %v2283
        %2303 = vmatprep.subr.mxu0 0.0
        %2304 = vmatpush1.msra.mxu0 0.0
        %2305 = vmatprep.subr.mxu0 0.0
        %2306 = vmatpush1.msra.mxu0 0.0
        %2307 = vmatprep.subr.mxu0 0.0
        %2308 = vmatpush1.msra.mxu0 0.0
        %2309 = vmatprep.subr.mxu0 0.0
        %2310 = vmatpush1.msra.mxu0 0.0
        %2311 = vmatprep.subr.mxu0 0.0
        %2312 = vmatpush1.msra.mxu0 0.0
        %2313 = vmatprep.subr.mxu0 0.0
        %2314 = vmatpush1.msra.mxu0 0.0
        %2315 = vmatprep.subr.mxu0 0.0
        %2316 = vmatpush1.msra.mxu0 0.0
        %2317 = vmatprep.subr.mxu0 0.0
        %2318 = vmatpush1.msra.mxu0 0.0
        %2319 = vmatprep.subr.mxu0 0.0
        %2320 = vmatpush1.msra.mxu0 0.0
        %2321 = vmatprep.subr.mxu0 0.0
        %2322 = vmatpush1.msra.mxu0 0.0
        %2323 = vmatprep.subr.mxu0 0.0
        %2324 = vmatpush1.msra.mxu0 0.0
        %2325 = vmatprep.subr.mxu0 0.0
        %2326 = vmatpush1.msra.mxu0 0.0
        %2327 = vmatprep.subr.mxu0 0.0
        %2328 = vmatpush1.msra.mxu0 0.0
        %2329 = vmatprep.subr.mxu0 0.0
        %2330 = vmatpush1.msra.mxu0 0.0
        %2331 = vmatprep.subr.mxu0 0.0
        %2332 = vmatpush1.msra.mxu0 0.0
        %2333 = vmatprep.subr.mxu0 0.0
        %2334 = vmatpush1.msra.mxu0 0.0
        %2335 = vmatprep.subr.mxu0 0.0
        %2336 = vmatpush1.msra.mxu0 0.0
        %2337 = vmatprep.subr.mxu0 0.0
        %2338 = vmatpush1.msra.mxu0 0.0
        %2339 = vmatprep.subr.mxu0 0.0
        %2340 = vmatpush1.msra.mxu0 0.0
        %2341 = vmatprep.subr.mxu0 0.0
        %2342 = vmatpush1.msra.mxu0 0.0
        %2343 = vmatprep.subr.mxu0 0.0
        %2344 = vmatpush1.msra.mxu0 0.0
        %2345 = vmatprep.subr.mxu0 0.0
        %2346 = vmatpush1.msra.mxu0 0.0
        %2347 = vmatprep.subr.mxu0 0.0
        %2348 = vmatpush1.msra.mxu0 0.0
        %2349 = vmatprep.subr.mxu0 0.0
        %2350 = vmatpush1.msra.mxu0 0.0
        %2351 = vmatprep.mubr.f32.mxu0 0.0
        %2352 = vmatmul.mubr.f32.gmra.mrb[0].mxu0 %v2285
        %v2353 = vpop.f32.mrb[0].mxu0
        %v2354 = vadd.f32 0.0, %v2353
        %v2355 = vpop.f32.mrb[0].mxu0
        %2356 = vdwg.mxu0
        %v2357 = vadd.f32 %v2272, %v2354
        %s2358 = scalar_lea.vmem %s4, 192
        %v2359 = vld [vmem:[%s2358] sm:$0xff]
        %v2360 = vld [vmem:[%s2358 + $0x8] sm:$0xff]
        %v2361 = vld [vmem:[%s2358 + $0x10] sm:$0xff]
        %v2362 = vld [vmem:[%s2358 + $0x18] sm:$0xff]
        %v2363 = vld [vmem:[%s2358 + $0x20] sm:$0xff]
        %v2364 = vld [vmem:[%s2358 + $0x28] sm:$0xff]
        %v2365 = vld [vmem:[%s2358 + $0x30] sm:$0xff]
        %v2366 = vld [vmem:[%s2358 + $0x38] sm:$0xff]
        %v2367 = vrot.slane %v2093, 4
        %v2368 = vsel %vm2130, %v2367, 0
        %2370 = vmatprep.subr.mxu0 0.0
        %2371 = vmatpush1.msra.mxu0 %v2359
        %2372 = vmatprep.subr.mxu0 0.0
        %2373 = vmatpush1.msra.mxu0 %v2360
        %2374 = vmatprep.subr.mxu0 0.0
        %2375 = vmatpush1.msra.mxu0 %v2361
        %2376 = vmatprep.subr.mxu0 0.0
        %2377 = vmatpush1.msra.mxu0 %v2362
        %2378 = vmatprep.subr.mxu0 0.0
        %2379 = vmatpush1.msra.mxu0 %v2363
        %2380 = vmatprep.subr.mxu0 0.0
        %2381 = vmatpush1.msra.mxu0 %v2364
        %2382 = vmatprep.subr.mxu0 0.0
        %2383 = vmatpush1.msra.mxu0 %v2365
        %2384 = vmatprep.subr.mxu0 0.0
        %2385 = vmatpush1.msra.mxu0 %v2366
        %2386 = vmatprep.subr.mxu0 0.0
        %2387 = vmatpush1.msra.mxu0 0.0
        %2388 = vmatprep.subr.mxu0 0.0
        %2389 = vmatpush1.msra.mxu0 0.0
        %2390 = vmatprep.subr.mxu0 0.0
        %2391 = vmatpush1.msra.mxu0 0.0
        %2392 = vmatprep.subr.mxu0 0.0
        %2393 = vmatpush1.msra.mxu0 0.0
        %2394 = vmatprep.subr.mxu0 0.0
        %2395 = vmatpush1.msra.mxu0 0.0
        %2396 = vmatprep.subr.mxu0 0.0
        %2397 = vmatpush1.msra.mxu0 0.0
        %2398 = vmatprep.subr.mxu0 0.0
        %2399 = vmatpush1.msra.mxu0 0.0
        %2400 = vmatprep.subr.mxu0 0.0
        %2401 = vmatpush1.msra.mxu0 0.0
        %2402 = vmatprep.subr.mxu0 0.0
        %2403 = vmatpush1.msra.mxu0 0.0
        %2404 = vmatprep.subr.mxu0 0.0
        %2405 = vmatpush1.msra.mxu0 0.0
        %2406 = vmatprep.subr.mxu0 0.0
        %2407 = vmatpush1.msra.mxu0 0.0
        %2408 = vmatprep.subr.mxu0 0.0
        %2409 = vmatpush1.msra.mxu0 0.0
        %2410 = vmatprep.subr.mxu0 0.0
        %2411 = vmatpush1.msra.mxu0 0.0
        %2412 = vmatprep.subr.mxu0 0.0
        %2413 = vmatpush1.msra.mxu0 0.0
        %2414 = vmatprep.subr.mxu0 0.0
        %2415 = vmatpush1.msra.mxu0 0.0
        %2416 = vmatprep.subr.mxu0 0.0
        %2417 = vmatpush1.msra.mxu0 0.0
        %2418 = vmatprep.subr.mxu0 0.0
        %2419 = vmatpush1.msra.mxu0 0.0
        %2420 = vmatprep.subr.mxu0 0.0
        %2421 = vmatpush1.msra.mxu0 0.0
        %2422 = vmatprep.subr.mxu0 0.0
        %2423 = vmatpush1.msra.mxu0 0.0
        %2424 = vmatprep.subr.mxu0 0.0
        %2425 = vmatpush1.msra.mxu0 0.0
        %2426 = vmatprep.subr.mxu0 0.0
        %2427 = vmatpush1.msra.mxu0 0.0
        %2428 = vmatprep.subr.mxu0 0.0
        %2429 = vmatpush1.msra.mxu0 0.0
        %2430 = vmatprep.subr.mxu0 0.0
        %2431 = vmatpush1.msra.mxu0 0.0
        %2432 = vmatprep.subr.mxu0 0.0
        %2433 = vmatpush1.msra.mxu0 0.0
        %2434 = vmatprep.mubr.f32.mxu0 0.0
        %2435 = vmatmul.mubr.f32.gmra.mrb[0].mxu0 %v2368
        %v2436 = vpop.f32.mrb[0].mxu0
        %v2437 = vadd.f32 0.0, %v2436
        %v2438 = vpop.f32.mrb[0].mxu0
        %2439 = vdwg.mxu0
        %v2440 = vadd.f32 %v2357, %v2437
        %s2441 = scalar_lea.vmem %s4, 256
        %v2442 = vld [vmem:[%s2441] sm:$0xff]
        %v2443 = vld [vmem:[%s2441 + $0x8] sm:$0xff]
        %v2444 = vld [vmem:[%s2441 + $0x10] sm:$0xff]
        %v2445 = vld [vmem:[%s2441 + $0x18] sm:$0xff]
        %v2446 = vld [vmem:[%s2441 + $0x20] sm:$0xff]
        %v2447 = vld [vmem:[%s2441 + $0x28] sm:$0xff]
        %v2448 = vld [vmem:[%s2441 + $0x30] sm:$0xff]
        %v2449 = vld [vmem:[%s2441 + $0x38] sm:$0xff]
        %v2451 = vsel %vm2130, %v2098, 0
        %2453 = vmatprep.subr.mxu0 0.0
        %2454 = vmatpush1.msra.mxu0 %v2442
        %2455 = vmatprep.subr.mxu0 0.0
        %2456 = vmatpush1.msra.mxu0 %v2443
        %2457 = vmatprep.subr.mxu0 0.0
        %2458 = vmatpush1.msra.mxu0 %v2444
        %2459 = vmatprep.subr.mxu0 0.0
        %2460 = vmatpush1.msra.mxu0 %v2445
        %2461 = vmatprep.subr.mxu0 0.0
        %2462 = vmatpush1.msra.mxu0 %v2446
        %2463 = vmatprep.subr.mxu0 0.0
        %2464 = vmatpush1.msra.mxu0 %v2447
        %2465 = vmatprep.subr.mxu0 0.0
        %2466 = vmatpush1.msra.mxu0 %v2448
        %2467 = vmatprep.subr.mxu0 0.0
        %2468 = vmatpush1.msra.mxu0 %v2449
        %2469 = vmatprep.subr.mxu0 0.0
        %2470 = vmatpush1.msra.mxu0 0.0
        %2471 = vmatprep.subr.mxu0 0.0
        %2472 = vmatpush1.msra.mxu0 0.0
        %2473 = vmatprep.subr.mxu0 0.0
        %2474 = vmatpush1.msra.mxu0 0.0
        %2475 = vmatprep.subr.mxu0 0.0
        %2476 = vmatpush1.msra.mxu0 0.0
        %2477 = vmatprep.subr.mxu0 0.0
        %2478 = vmatpush1.msra.mxu0 0.0
        %2479 = vmatprep.subr.mxu0 0.0
        %2480 = vmatpush1.msra.mxu0 0.0
        %2481 = vmatprep.subr.mxu0 0.0
        %2482 = vmatpush1.msra.mxu0 0.0
        %2483 = vmatprep.subr.mxu0 0.0
        %2484 = vmatpush1.msra.mxu0 0.0
        %2485 = vmatprep.subr.mxu0 0.0
        %2486 = vmatpush1.msra.mxu0 0.0
        %2487 = vmatprep.subr.mxu0 0.0
        %2488 = vmatpush1.msra.mxu0 0.0
        %2489 = vmatprep.subr.mxu0 0.0
        %2490 = vmatpush1.msra.mxu0 0.0
        %2491 = vmatprep.subr.mxu0 0.0
        %2492 = vmatpush1.msra.mxu0 0.0
        %2493 = vmatprep.subr.mxu0 0.0
        %2494 = vmatpush1.msra.mxu0 0.0
        %2495 = vmatprep.subr.mxu0 0.0
        %2496 = vmatpush1.msra.mxu0 0.0
        %2497 = vmatprep.subr.mxu0 0.0
        %2498 = vmatpush1.msra.mxu0 0.0
        %2499 = vmatprep.subr.mxu0 0.0
        %2500 = vmatpush1.msra.mxu0 0.0
        %2501 = vmatprep.subr.mxu0 0.0
        %2502 = vmatpush1.msra.mxu0 0.0
        %2503 = vmatprep.subr.mxu0 0.0
        %2504 = vmatpush1.msra.mxu0 0.0
        %2505 = vmatprep.subr.mxu0 0.0
        %2506 = vmatpush1.msra.mxu0 0.0
        %2507 = vmatprep.subr.mxu0 0.0
        %2508 = vmatpush1.msra.mxu0 0.0
        %2509 = vmatprep.subr.mxu0 0.0
        %2510 = vmatpush1.msra.mxu0 0.0
        %2511 = vmatprep.subr.mxu0 0.0
        %2512 = vmatpush1.msra.mxu0 0.0
        %2513 = vmatprep.subr.mxu0 0.0
        %2514 = vmatpush1.msra.mxu0 0.0
        %2515 = vmatprep.subr.mxu0 0.0
        %2516 = vmatpush1.msra.mxu0 0.0
        %2517 = vmatprep.mubr.f32.mxu0 0.0
        %2518 = vmatmul.mubr.f32.gmra.mrb[0].mxu0 %v2451
        %v2519 = vpop.f32.mrb[0].mxu0
        %v2520 = vadd.f32 0.0, %v2519
        %v2521 = vpop.f32.mrb[0].mxu0
        %2522 = vdwg.mxu0
        %v2523 = vadd.f32 %v2440, %v2520
        %s2524 = scalar_lea.vmem %s4, 320
        %v2525 = vld [vmem:[%s2524] sm:$0xff]
        %v2526 = vld [vmem:[%s2524 + $0x8] sm:$0xff]
        %v2527 = vld [vmem:[%s2524 + $0x10] sm:$0xff]
        %v2528 = vld [vmem:[%s2524 + $0x18] sm:$0xff]
        %v2529 = vld [vmem:[%s2524 + $0x20] sm:$0xff]
        %v2530 = vld [vmem:[%s2524 + $0x28] sm:$0xff]
        %v2531 = vld [vmem:[%s2524 + $0x30] sm:$0xff]
        %v2532 = vld [vmem:[%s2524 + $0x38] sm:$0xff]
        %v2533 = vrot.slane %v2098, 4
        %v2534 = vsel %vm2130, %v2533, 0
        %2536 = vmatprep.subr.mxu0 0.0
        %2537 = vmatpush1.msra.mxu0 %v2525
        %2538 = vmatprep.subr.mxu0 0.0
        %2539 = vmatpush1.msra.mxu0 %v2526
        %2540 = vmatprep.subr.mxu0 0.0
        %2541 = vmatpush1.msra.mxu0 %v2527
        %2542 = vmatprep.subr.mxu0 0.0
        %2543 = vmatpush1.msra.mxu0 %v2528
        %2544 = vmatprep.subr.mxu0 0.0
        %2545 = vmatpush1.msra.mxu0 %v2529
        %2546 = vmatprep.subr.mxu0 0.0
        %2547 = vmatpush1.msra.mxu0 %v2530
        %2548 = vmatprep.subr.mxu0 0.0
        %2549 = vmatpush1.msra.mxu0 %v2531
        %2550 = vmatprep.subr.mxu0 0.0
        %2551 = vmatpush1.msra.mxu0 %v2532
        %2552 = vmatprep.subr.mxu0 0.0
        %2553 = vmatpush1.msra.mxu0 0.0
        %2554 = vmatprep.subr.mxu0 0.0
        %2555 = vmatpush1.msra.mxu0 0.0
        %2556 = vmatprep.subr.mxu0 0.0
        %2557 = vmatpush1.msra.mxu0 0.0
        %2558 = vmatprep.subr.mxu0 0.0
        %2559 = vmatpush1.msra.mxu0 0.0
        %2560 = vmatprep.subr.mxu0 0.0
        %2561 = vmatpush1.msra.mxu0 0.0
        %2562 = vmatprep.subr.mxu0 0.0
        %2563 = vmatpush1.msra.mxu0 0.0
        %2564 = vmatprep.subr.mxu0 0.0
        %2565 = vmatpush1.msra.mxu0 0.0
        %2566 = vmatprep.subr.mxu0 0.0
        %2567 = vmatpush1.msra.mxu0 0.0
        %2568 = vmatprep.subr.mxu0 0.0
        %2569 = vmatpush1.msra.mxu0 0.0
        %2570 = vmatprep.subr.mxu0 0.0
        %2571 = vmatpush1.msra.mxu0 0.0
        %2572 = vmatprep.subr.mxu0 0.0
        %2573 = vmatpush1.msra.mxu0 0.0
        %2574 = vmatprep.subr.mxu0 0.0
        %2575 = vmatpush1.msra.mxu0 0.0
        %2576 = vmatprep.subr.mxu0 0.0
        %2577 = vmatpush1.msra.mxu0 0.0
        %2578 = vmatprep.subr.mxu0 0.0
        %2579 = vmatpush1.msra.mxu0 0.0
        %2580 = vmatprep.subr.mxu0 0.0
        %2581 = vmatpush1.msra.mxu0 0.0
        %2582 = vmatprep.subr.mxu0 0.0
        %2583 = vmatpush1.msra.mxu0 0.0
        %2584 = vmatprep.subr.mxu0 0.0
        %2585 = vmatpush1.msra.mxu0 0.0
        %2586 = vmatprep.subr.mxu0 0.0
        %2587 = vmatpush1.msra.mxu0 0.0
        %2588 = vmatprep.subr.mxu0 0.0
        %2589 = vmatpush1.msra.mxu0 0.0
        %2590 = vmatprep.subr.mxu0 0.0
        %2591 = vmatpush1.msra.mxu0 0.0
        %2592 = vmatprep.subr.mxu0 0.0
        %2593 = vmatpush1.msra.mxu0 0.0
        %2594 = vmatprep.subr.mxu0 0.0
        %2595 = vmatpush1.msra.mxu0 0.0
        %2596 = vmatprep.subr.mxu0 0.0
        %2597 = vmatpush1.msra.mxu0 0.0
        %2598 = vmatprep.subr.mxu0 0.0
        %2599 = vmatpush1.msra.mxu0 0.0
        %2600 = vmatprep.mubr.f32.mxu0 0.0
        %2601 = vmatmul.mubr.f32.gmra.mrb[0].mxu0 %v2534
        %v2602 = vpop.f32.mrb[0].mxu0
        %v2603 = vadd.f32 0.0, %v2602
        %v2604 = vpop.f32.mrb[0].mxu0
        %2605 = vdwg.mxu0
        %v2606 = vadd.f32 %v2523, %v2603
        %s2607 = scalar_lea.vmem %s4, 384
        %v2608 = vld [vmem:[%s2607] sm:$0xff]
        %v2609 = vld [vmem:[%s2607 + $0x8] sm:$0xff]
        %v2610 = vld [vmem:[%s2607 + $0x10] sm:$0xff]
        %v2611 = vld [vmem:[%s2607 + $0x18] sm:$0xff]
        %v2612 = vld [vmem:[%s2607 + $0x20] sm:$0xff]
        %v2613 = vld [vmem:[%s2607 + $0x28] sm:$0xff]
        %v2614 = vld [vmem:[%s2607 + $0x30] sm:$0xff]
        %v2615 = vld [vmem:[%s2607 + $0x38] sm:$0xff]
        %v2617 = vsel %vm2130, %v2101, 0
        %2619 = vmatprep.subr.mxu0 0.0
        %2620 = vmatpush1.msra.mxu0 %v2608
        %2621 = vmatprep.subr.mxu0 0.0
        %2622 = vmatpush1.msra.mxu0 %v2609
        %2623 = vmatprep.subr.mxu0 0.0
        %2624 = vmatpush1.msra.mxu0 %v2610
        %2625 = vmatprep.subr.mxu0 0.0
        %2626 = vmatpush1.msra.mxu0 %v2611
        %2627 = vmatprep.subr.mxu0 0.0
        %2628 = vmatpush1.msra.mxu0 %v2612
        %2629 = vmatprep.subr.mxu0 0.0
        %2630 = vmatpush1.msra.mxu0 %v2613
        %2631 = vmatprep.subr.mxu0 0.0
        %2632 = vmatpush1.msra.mxu0 %v2614
        %2633 = vmatprep.subr.mxu0 0.0
        %2634 = vmatpush1.msra.mxu0 %v2615
        %2635 = vmatprep.subr.mxu0 0.0
        %2636 = vmatpush1.msra.mxu0 0.0
        %2637 = vmatprep.subr.mxu0 0.0
        %2638 = vmatpush1.msra.mxu0 0.0
        %2639 = vmatprep.subr.mxu0 0.0
        %2640 = vmatpush1.msra.mxu0 0.0
        %2641 = vmatprep.subr.mxu0 0.0
        %2642 = vmatpush1.msra.mxu0 0.0
        %2643 = vmatprep.subr.mxu0 0.0
        %2644 = vmatpush1.msra.mxu0 0.0
        %2645 = vmatprep.subr.mxu0 0.0
        %2646 = vmatpush1.msra.mxu0 0.0
        %2647 = vmatprep.subr.mxu0 0.0
        %2648 = vmatpush1.msra.mxu0 0.0
        %2649 = vmatprep.subr.mxu0 0.0
        %2650 = vmatpush1.msra.mxu0 0.0
        %2651 = vmatprep.subr.mxu0 0.0
        %2652 = vmatpush1.msra.mxu0 0.0
        %2653 = vmatprep.subr.mxu0 0.0
        %2654 = vmatpush1.msra.mxu0 0.0
        %2655 = vmatprep.subr.mxu0 0.0
        %2656 = vmatpush1.msra.mxu0 0.0
        %2657 = vmatprep.subr.mxu0 0.0
        %2658 = vmatpush1.msra.mxu0 0.0
        %2659 = vmatprep.subr.mxu0 0.0
        %2660 = vmatpush1.msra.mxu0 0.0
        %2661 = vmatprep.subr.mxu0 0.0
        %2662 = vmatpush1.msra.mxu0 0.0
        %2663 = vmatprep.subr.mxu0 0.0
        %2664 = vmatpush1.msra.mxu0 0.0
        %2665 = vmatprep.subr.mxu0 0.0
        %2666 = vmatpush1.msra.mxu0 0.0
        %2667 = vmatprep.subr.mxu0 0.0
        %2668 = vmatpush1.msra.mxu0 0.0
        %2669 = vmatprep.subr.mxu0 0.0
        %2670 = vmatpush1.msra.mxu0 0.0
        %2671 = vmatprep.subr.mxu0 0.0
        %2672 = vmatpush1.msra.mxu0 0.0
        %2673 = vmatprep.subr.mxu0 0.0
        %2674 = vmatpush1.msra.mxu0 0.0
        %2675 = vmatprep.subr.mxu0 0.0
        %2676 = vmatpush1.msra.mxu0 0.0
        %2677 = vmatprep.subr.mxu0 0.0
        %2678 = vmatpush1.msra.mxu0 0.0
        %2679 = vmatprep.subr.mxu0 0.0
        %2680 = vmatpush1.msra.mxu0 0.0
        %2681 = vmatprep.subr.mxu0 0.0
        %2682 = vmatpush1.msra.mxu0 0.0
        %2683 = vmatprep.mubr.f32.mxu0 0.0
        %2684 = vmatmul.mubr.f32.gmra.mrb[0].mxu0 %v2617
        %v2685 = vpop.f32.mrb[0].mxu0
        %v2686 = vadd.f32 0.0, %v2685
        %v2687 = vpop.f32.mrb[0].mxu0
        %2688 = vdwg.mxu0
        %v2689 = vadd.f32 %v2606, %v2686
        %s2690 = scalar_lea.vmem %s4, 448
        %v2691 = vld [vmem:[%s2690] sm:$0xff]
        %v2692 = vld [vmem:[%s2690 + $0x8] sm:$0xff]
        %v2693 = vld [vmem:[%s2690 + $0x10] sm:$0xff]
        %v2694 = vld [vmem:[%s2690 + $0x18] sm:$0xff]
        %v2695 = vld [vmem:[%s2690 + $0x20] sm:$0xff]
        %v2696 = vld [vmem:[%s2690 + $0x28] sm:$0xff]
        %v2697 = vld [vmem:[%s2690 + $0x30] sm:$0xff]
        %v2698 = vld [vmem:[%s2690 + $0x38] sm:$0xff]
        %v2699 = vrot.slane %v2101, 4
        %v2700 = vsel %vm2130, %v2699, 0
        %2702 = vmatprep.subr.mxu0 0.0
        %2703 = vmatpush1.msra.mxu0 %v2691
        %2704 = vmatprep.subr.mxu0 0.0
        %2705 = vmatpush1.msra.mxu0 %v2692
        %2706 = vmatprep.subr.mxu0 0.0
        %2707 = vmatpush1.msra.mxu0 %v2693
        %2708 = vmatprep.subr.mxu0 0.0
        %2709 = vmatpush1.msra.mxu0 %v2694
        %2710 = vmatprep.subr.mxu0 0.0
        %2711 = vmatpush1.msra.mxu0 %v2695
        %2712 = vmatprep.subr.mxu0 0.0
        %2713 = vmatpush1.msra.mxu0 %v2696
        %2714 = vmatprep.subr.mxu0 0.0
        %2715 = vmatpush1.msra.mxu0 %v2697
        %2716 = vmatprep.subr.mxu0 0.0
        %2717 = vmatpush1.msra.mxu0 %v2698
        %2718 = vmatprep.subr.mxu0 0.0
        %2719 = vmatpush1.msra.mxu0 0.0
        %2720 = vmatprep.subr.mxu0 0.0
        %2721 = vmatpush1.msra.mxu0 0.0
        %2722 = vmatprep.subr.mxu0 0.0
        %2723 = vmatpush1.msra.mxu0 0.0
        %2724 = vmatprep.subr.mxu0 0.0
        %2725 = vmatpush1.msra.mxu0 0.0
        %2726 = vmatprep.subr.mxu0 0.0
        %2727 = vmatpush1.msra.mxu0 0.0
        %2728 = vmatprep.subr.mxu0 0.0
        %2729 = vmatpush1.msra.mxu0 0.0
        %2730 = vmatprep.subr.mxu0 0.0
        %2731 = vmatpush1.msra.mxu0 0.0
        %2732 = vmatprep.subr.mxu0 0.0
        %2733 = vmatpush1.msra.mxu0 0.0
        %2734 = vmatprep.subr.mxu0 0.0
        %2735 = vmatpush1.msra.mxu0 0.0
        %2736 = vmatprep.subr.mxu0 0.0
        %2737 = vmatpush1.msra.mxu0 0.0
        %2738 = vmatprep.subr.mxu0 0.0
        %2739 = vmatpush1.msra.mxu0 0.0
        %2740 = vmatprep.subr.mxu0 0.0
        %2741 = vmatpush1.msra.mxu0 0.0
        %2742 = vmatprep.subr.mxu0 0.0
        %2743 = vmatpush1.msra.mxu0 0.0
        %2744 = vmatprep.subr.mxu0 0.0
        %2745 = vmatpush1.msra.mxu0 0.0
        %2746 = vmatprep.subr.mxu0 0.0
        %2747 = vmatpush1.msra.mxu0 0.0
        %2748 = vmatprep.subr.mxu0 0.0
        %2749 = vmatpush1.msra.mxu0 0.0
        %2750 = vmatprep.subr.mxu0 0.0
        %2751 = vmatpush1.msra.mxu0 0.0
        %2752 = vmatprep.subr.mxu0 0.0
        %2753 = vmatpush1.msra.mxu0 0.0
        %2754 = vmatprep.subr.mxu0 0.0
        %2755 = vmatpush1.msra.mxu0 0.0
        %2756 = vmatprep.subr.mxu0 0.0
        %2757 = vmatpush1.msra.mxu0 0.0
        %2758 = vmatprep.subr.mxu0 0.0
        %2759 = vmatpush1.msra.mxu0 0.0
        %2760 = vmatprep.subr.mxu0 0.0
        %2761 = vmatpush1.msra.mxu0 0.0
        %2762 = vmatprep.subr.mxu0 0.0
        %2763 = vmatpush1.msra.mxu0 0.0
        %2764 = vmatprep.subr.mxu0 0.0
        %2765 = vmatpush1.msra.mxu0 0.0
        %2766 = vmatprep.mubr.f32.mxu0 0.0
        %2767 = vmatmul.mubr.f32.gmra.mrb[0].mxu0 %v2700
        %v2768 = vpop.f32.mrb[0].mxu0
        %v2769 = vadd.f32 0.0, %v2768
        %v2770 = vpop.f32.mrb[0].mxu0
        %2771 = vdwg.mxu0
        %v2772 = vadd.f32 %v2689, %v2769
        %s2773 = scalar_lea.vmem %s4, 512
        %v2774 = vld [vmem:[%s2773] sm:$0xff]
        %v2775 = vld [vmem:[%s2773 + $0x8] sm:$0xff]
        %v2776 = vld [vmem:[%s2773 + $0x10] sm:$0xff]
        %v2777 = vld [vmem:[%s2773 + $0x18] sm:$0xff]
        %v2778 = vld [vmem:[%s2773 + $0x20] sm:$0xff]
        %v2779 = vld [vmem:[%s2773 + $0x28] sm:$0xff]
        %v2780 = vld [vmem:[%s2773 + $0x30] sm:$0xff]
        %v2781 = vld [vmem:[%s2773 + $0x38] sm:$0xff]
        %v2783 = vsel %vm2130, %v2106, 0
        %2785 = vmatprep.subr.mxu0 0.0
        %2786 = vmatpush1.msra.mxu0 %v2774
        %2787 = vmatprep.subr.mxu0 0.0
        %2788 = vmatpush1.msra.mxu0 %v2775
        %2789 = vmatprep.subr.mxu0 0.0
        %2790 = vmatpush1.msra.mxu0 %v2776
        %2791 = vmatprep.subr.mxu0 0.0
        %2792 = vmatpush1.msra.mxu0 %v2777
        %2793 = vmatprep.subr.mxu0 0.0
        %2794 = vmatpush1.msra.mxu0 %v2778
        %2795 = vmatprep.subr.mxu0 0.0
        %2796 = vmatpush1.msra.mxu0 %v2779
        %2797 = vmatprep.subr.mxu0 0.0
        %2798 = vmatpush1.msra.mxu0 %v2780
        %2799 = vmatprep.subr.mxu0 0.0
        %2800 = vmatpush1.msra.mxu0 %v2781
        %2801 = vmatprep.subr.mxu0 0.0
        %2802 = vmatpush1.msra.mxu0 0.0
        %2803 = vmatprep.subr.mxu0 0.0
        %2804 = vmatpush1.msra.mxu0 0.0
        %2805 = vmatprep.subr.mxu0 0.0
        %2806 = vmatpush1.msra.mxu0 0.0
        %2807 = vmatprep.subr.mxu0 0.0
        %2808 = vmatpush1.msra.mxu0 0.0
        %2809 = vmatprep.subr.mxu0 0.0
        %2810 = vmatpush1.msra.mxu0 0.0
        %2811 = vmatprep.subr.mxu0 0.0
        %2812 = vmatpush1.msra.mxu0 0.0
        %2813 = vmatprep.subr.mxu0 0.0
        %2814 = vmatpush1.msra.mxu0 0.0
        %2815 = vmatprep.subr.mxu0 0.0
        %2816 = vmatpush1.msra.mxu0 0.0
        %2817 = vmatprep.subr.mxu0 0.0
        %2818 = vmatpush1.msra.mxu0 0.0
        %2819 = vmatprep.subr.mxu0 0.0
        %2820 = vmatpush1.msra.mxu0 0.0
        %2821 = vmatprep.subr.mxu0 0.0
        %2822 = vmatpush1.msra.mxu0 0.0
        %2823 = vmatprep.subr.mxu0 0.0
        %2824 = vmatpush1.msra.mxu0 0.0
        %2825 = vmatprep.subr.mxu0 0.0
        %2826 = vmatpush1.msra.mxu0 0.0
        %2827 = vmatprep.subr.mxu0 0.0
        %2828 = vmatpush1.msra.mxu0 0.0
        %2829 = vmatprep.subr.mxu0 0.0
        %2830 = vmatpush1.msra.mxu0 0.0
        %2831 = vmatprep.subr.mxu0 0.0
        %2832 = vmatpush1.msra.mxu0 0.0
        %2833 = vmatprep.subr.mxu0 0.0
        %2834 = vmatpush1.msra.mxu0 0.0
        %2835 = vmatprep.subr.mxu0 0.0
        %2836 = vmatpush1.msra.mxu0 0.0
        %2837 = vmatprep.subr.mxu0 0.0
        %2838 = vmatpush1.msra.mxu0 0.0
        %2839 = vmatprep.subr.mxu0 0.0
        %2840 = vmatpush1.msra.mxu0 0.0
        %2841 = vmatprep.subr.mxu0 0.0
        %2842 = vmatpush1.msra.mxu0 0.0
        %2843 = vmatprep.subr.mxu0 0.0
        %2844 = vmatpush1.msra.mxu0 0.0
        %2845 = vmatprep.subr.mxu0 0.0
        %2846 = vmatpush1.msra.mxu0 0.0
        %2847 = vmatprep.subr.mxu0 0.0
        %2848 = vmatpush1.msra.mxu0 0.0
        %2849 = vmatprep.mubr.f32.mxu0 0.0
        %2850 = vmatmul.mubr.f32.gmra.mrb[0].mxu0 %v2783
        %v2851 = vpop.f32.mrb[0].mxu0
        %v2852 = vadd.f32 0.0, %v2851
        %v2853 = vpop.f32.mrb[0].mxu0
        %2854 = vdwg.mxu0
        %v2855 = vadd.f32 %v2772, %v2852
        %v2856 = vld [vmem:[%s5] sm:$0x1]
        %v2858 = vlaneseq
        %v2859 = vshrl.u32 %v2858, 7
        %v2860 = vsub.s32 0, %v2859
        %v2861 = vrot.slane %v2856, %v2860
        %v2863 = vadd.f32 %v2855, %v2861
        %v2864 = vld [vmem:[%s6] sm:$0xff]
        %v2865 = vld [vmem:[%s6 + $0x8] sm:$0xff]
        %v2866 = vld [vmem:[%s6 + $0x10] sm:$0xff]
        %v2867 = vld [vmem:[%s6 + $0x18] sm:$0xff]
        %v2868 = vld [vmem:[%s6 + $0x20] sm:$0xff]
        %v2869 = vld [vmem:[%s6 + $0x28] sm:$0xff]
        %v2870 = vld [vmem:[%s6 + $0x30] sm:$0xff]
        %v2871 = vld [vmem:[%s6 + $0x38] sm:$0xff]
        %v2872 = vld [vmem:[%s6 + $0x40] sm:$0xff]
        %v2873 = vld [vmem:[%s6 + $0x48] sm:$0xff]
        %v2874 = vld [vmem:[%s6 + $0x50] sm:$0xff]
        %v2875 = vld [vmem:[%s6 + $0x58] sm:$0xff]
        %v2876 = vld [vmem:[%s6 + $0x60] sm:$0xff]
        %v2877 = vld [vmem:[%s6 + $0x68] sm:$0xff]
        %v2878 = vld [vmem:[%s6 + $0x70] sm:$0xff]
        %v2879 = vld [vmem:[%s6 + $0x78] sm:$0xff]
        %v2880 = vld [vmem:[%s6 + $0x80] sm:$0xff]
        %v2881 = vld [vmem:[%s6 + $0x88] sm:$0xff]
        %v2882 = vld [vmem:[%s6 + $0x90] sm:$0xff]
        %v2883 = vld [vmem:[%s6 + $0x98] sm:$0xff]
        %v2884 = vld [vmem:[%s6 + $0xa0] sm:$0xff]
        %v2885 = vld [vmem:[%s6 + $0xa8] sm:$0xff]
        %v2886 = vld [vmem:[%s6 + $0xb0] sm:$0xff]
        %v2887 = vld [vmem:[%s6 + $0xb8] sm:$0xff]
        %v2888 = vld [vmem:[%s6 + $0xc0] sm:$0xff]
        %v2889 = vld [vmem:[%s6 + $0xc8] sm:$0xff]
        %v2890 = vld [vmem:[%s6 + $0xd0] sm:$0xff]
        %v2891 = vld [vmem:[%s6 + $0xd8] sm:$0xff]
        %v2892 = vld [vmem:[%s6 + $0xe0] sm:$0xff]
        %v2893 = vld [vmem:[%s6 + $0xe8] sm:$0xff]
        %v2894 = vld [vmem:[%s6 + $0xf0] sm:$0xff]
        %v2895 = vld [vmem:[%s6 + $0xf8] sm:$0xff]
        %v2896 = vld [vmem:[%s6 + $0x100] sm:$0xff]
        %v2897 = vld [vmem:[%s6 + $0x108] sm:$0xff]
        %v2898 = vld [vmem:[%s6 + $0x110] sm:$0xff]
        %v2899 = vld [vmem:[%s6 + $0x118] sm:$0xff]
        %v2900 = vld [vmem:[%s6 + $0x120] sm:$0xff]
        %v2901 = vld [vmem:[%s6 + $0x128] sm:$0xff]
        %v2902 = vld [vmem:[%s6 + $0x130] sm:$0xff]
        %v2903 = vld [vmem:[%s6 + $0x138] sm:$0xff]
        %v2904 = vld [vmem:[%s6 + $0x140] sm:$0xff]
        %v2905 = vld [vmem:[%s6 + $0x148] sm:$0xff]
        %v2906 = vld [vmem:[%s6 + $0x150] sm:$0xff]
        %v2907 = vld [vmem:[%s6 + $0x158] sm:$0xff]
        %v2908 = vld [vmem:[%s6 + $0x160] sm:$0xff]
        %v2909 = vld [vmem:[%s6 + $0x168] sm:$0xff]
        %v2910 = vld [vmem:[%s6 + $0x170] sm:$0xff]
        %v2911 = vld [vmem:[%s6 + $0x178] sm:$0xff]
        %v2912 = vld [vmem:[%s7] sm:$0x7]
        %v2914 = vlaneseq
        %v2915 = vshrl.u32 %v2914, 7
        %v2916 = vsub.s32 0, %v2915
        %v2917 = vrot.slane %v2912, %v2916
        %v2918 = vlaneseq
        %v2919 = vshrl.u32 %v2918, 7
        %v2920 = vsub.s32 1, %v2919
        %v2921 = vrot.slane %v2912, %v2920
        %v2922 = vlaneseq
        %v2923 = vshrl.u32 %v2922, 7
        %v2924 = vsub.s32 2, %v2923
        %v2925 = vrot.slane %v2912, %v2924
        %2929 = vmatprep.subr.mxu0 %v2865
        %2930 = vmatpush1.msra.mxu0 %v2864
        %2931 = vmatprep.subr.mxu0 %v2868
        %2932 = vmatpush1.msra.mxu0 %v2867
        %2933 = vmatprep.subr.mxu0 %v2871
        %2934 = vmatpush1.msra.mxu0 %v2870
        %2935 = vmatprep.subr.mxu0 %v2874
        %2936 = vmatpush1.msra.mxu0 %v2873
        %2937 = vmatprep.subr.mxu0 %v2877
        %2938 = vmatpush1.msra.mxu0 %v2876
        %2939 = vmatprep.subr.mxu0 %v2880
        %2940 = vmatpush1.msra.mxu0 %v2879
        %2941 = vmatprep.subr.mxu0 %v2883
        %2942 = vmatpush1.msra.mxu0 %v2882
        %2943 = vmatprep.subr.mxu0 %v2886
        %2944 = vmatpush1.msra.mxu0 %v2885
        %2945 = vmatprep.subr.mxu0 %v2889
        %2946 = vmatpush1.msra.mxu0 %v2888
        %2947 = vmatprep.subr.mxu0 %v2892
        %2948 = vmatpush1.msra.mxu0 %v2891
        %2949 = vmatprep.subr.mxu0 %v2895
        %2950 = vmatpush1.msra.mxu0 %v2894
        %2951 = vmatprep.subr.mxu0 %v2898
        %2952 = vmatpush1.msra.mxu0 %v2897
        %2953 = vmatprep.subr.mxu0 %v2901
        %2954 = vmatpush1.msra.mxu0 %v2900
        %2955 = vmatprep.subr.mxu0 %v2904
        %2956 = vmatpush1.msra.mxu0 %v2903
        %2957 = vmatprep.subr.mxu0 %v2907
        %2958 = vmatpush1.msra.mxu0 %v2906
        %2959 = vmatprep.subr.mxu0 %v2910
        %2960 = vmatpush1.msra.mxu0 %v2909
        %2961 = vmatprep.subr.mxu0 0.0
        %2962 = vmatpush1.msra.mxu0 0.0
        %2963 = vmatprep.subr.mxu0 0.0
        %2964 = vmatpush1.msra.mxu0 0.0
        %2965 = vmatprep.subr.mxu0 0.0
        %2966 = vmatpush1.msra.mxu0 0.0
        %2967 = vmatprep.subr.mxu0 0.0
        %2968 = vmatpush1.msra.mxu0 0.0
        %2969 = vmatprep.subr.mxu0 0.0
        %2970 = vmatpush1.msra.mxu0 0.0
        %2971 = vmatprep.subr.mxu0 0.0
        %2972 = vmatpush1.msra.mxu0 0.0
        %2973 = vmatprep.subr.mxu0 0.0
        %2974 = vmatpush1.msra.mxu0 0.0
        %2975 = vmatprep.subr.mxu0 0.0
        %2976 = vmatpush1.msra.mxu0 0.0
        %2977 = vmatprep.subr.mxu0 0.0
        %2978 = vmatpush1.msra.mxu0 0.0
        %2979 = vmatprep.subr.mxu0 0.0
        %2980 = vmatpush1.msra.mxu0 0.0
        %2981 = vmatprep.subr.mxu0 0.0
        %2982 = vmatpush1.msra.mxu0 0.0
        %2983 = vmatprep.subr.mxu0 0.0
        %2984 = vmatpush1.msra.mxu0 0.0
        %2985 = vmatprep.subr.mxu0 0.0
        %2986 = vmatpush1.msra.mxu0 0.0
        %2987 = vmatprep.subr.mxu0 0.0
        %2988 = vmatpush1.msra.mxu0 0.0
        %2989 = vmatprep.subr.mxu0 0.0
        %2990 = vmatpush1.msra.mxu0 0.0
        %2991 = vmatprep.subr.mxu0 0.0
        %2992 = vmatpush1.msra.mxu0 0.0
        %2993 = vmatprep.mubr.f32.mxu0 0.0
        %2994 = vmatmul.mubr.f32.gmra.mrb[0].mxu0 %v2863
        %v2995 = vpop.f32.mrb[0].mxu0
        %v2996 = vadd.f32 %v2917, %v2995
        %v2997 = vpop.f32.mrb[0].mxu0
        %v2998 = vadd.f32 %v2921, %v2997
        %2999 = vdwg.mxu0
        %3000 = vmatprep.subr.mxu0 0.0
        %3001 = vmatpush1.msra.mxu0 %v2866
        %3002 = vmatprep.subr.mxu0 0.0
        %3003 = vmatpush1.msra.mxu0 %v2869
        %3004 = vmatprep.subr.mxu0 0.0
        %3005 = vmatpush1.msra.mxu0 %v2872
        %3006 = vmatprep.subr.mxu0 0.0
        %3007 = vmatpush1.msra.mxu0 %v2875
        %3008 = vmatprep.subr.mxu0 0.0
        %3009 = vmatpush1.msra.mxu0 %v2878
        %3010 = vmatprep.subr.mxu0 0.0
        %3011 = vmatpush1.msra.mxu0 %v2881
        %3012 = vmatprep.subr.mxu0 0.0
        %3013 = vmatpush1.msra.mxu0 %v2884
        %3014 = vmatprep.subr.mxu0 0.0
        %3015 = vmatpush1.msra.mxu0 %v2887
        %3016 = vmatprep.subr.mxu0 0.0
        %3017 = vmatpush1.msra.mxu0 %v2890
        %3018 = vmatprep.subr.mxu0 0.0
        %3019 = vmatpush1.msra.mxu0 %v2893
        %3020 = vmatprep.subr.mxu0 0.0
        %3021 = vmatpush1.msra.mxu0 %v2896
        %3022 = vmatprep.subr.mxu0 0.0
        %3023 = vmatpush1.msra.mxu0 %v2899
        %3024 = vmatprep.subr.mxu0 0.0
        %3025 = vmatpush1.msra.mxu0 %v2902
        %3026 = vmatprep.subr.mxu0 0.0
        %3027 = vmatpush1.msra.mxu0 %v2905
        %3028 = vmatprep.subr.mxu0 0.0
        %3029 = vmatpush1.msra.mxu0 %v2908
        %3030 = vmatprep.subr.mxu0 0.0
        %3031 = vmatpush1.msra.mxu0 %v2911
        %3032 = vmatprep.subr.mxu0 0.0
        %3033 = vmatpush1.msra.mxu0 0.0
        %3034 = vmatprep.subr.mxu0 0.0
        %3035 = vmatpush1.msra.mxu0 0.0
        %3036 = vmatprep.subr.mxu0 0.0
        %3037 = vmatpush1.msra.mxu0 0.0
        %3038 = vmatprep.subr.mxu0 0.0
        %3039 = vmatpush1.msra.mxu0 0.0
        %3040 = vmatprep.subr.mxu0 0.0
        %3041 = vmatpush1.msra.mxu0 0.0
        %3042 = vmatprep.subr.mxu0 0.0
        %3043 = vmatpush1.msra.mxu0 0.0
        %3044 = vmatprep.subr.mxu0 0.0
        %3045 = vmatpush1.msra.mxu0 0.0
        %3046 = vmatprep.subr.mxu0 0.0
        %3047 = vmatpush1.msra.mxu0 0.0
        %3048 = vmatprep.subr.mxu0 0.0
        %3049 = vmatpush1.msra.mxu0 0.0
        %3050 = vmatprep.subr.mxu0 0.0
        %3051 = vmatpush1.msra.mxu0 0.0
        %3052 = vmatprep.subr.mxu0 0.0
        %3053 = vmatpush1.msra.mxu0 0.0
        %3054 = vmatprep.subr.mxu0 0.0
        %3055 = vmatpush1.msra.mxu0 0.0
        %3056 = vmatprep.subr.mxu0 0.0
        %3057 = vmatpush1.msra.mxu0 0.0
        %3058 = vmatprep.subr.mxu0 0.0
        %3059 = vmatpush1.msra.mxu0 0.0
        %3060 = vmatprep.subr.mxu0 0.0
        %3061 = vmatpush1.msra.mxu0 0.0
        %3062 = vmatprep.subr.mxu0 0.0
        %3063 = vmatpush1.msra.mxu0 0.0
        %3064 = vmatprep.mubr.f32.mxu0 0.0
        %3065 = vmatmul.mubr.f32.gmra.mrb[0].mxu0 %v2863
        %v3066 = vpop.f32.mrb[0].mxu0
        %v3067 = vadd.f32 %v2925, %v3066
        %v3068 = vpop.f32.mrb[0].mxu0
        %3069 = vdwg.mxu0
        %v3071 = vsel %vm829, %v2996, 0
        %v3074 = vsel %vm829, %v2998, 0
        %3076 = vmatprep.subr.mxu0 0.0
        %3077 = vmatpush1.xpose.msra.mxu0 %v3074
        %3078 = vmatprep.subr.mxu0 0.0
        %3079 = vmatpush1.xpose.msra.mxu0 0.0
        %3080 = vmatprep.subr.mxu0 0.0
        %3081 = vmatpush1.xpose.msra.mxu0 0.0
        %3082 = vmatprep.subr.mxu0 0.0
        %3083 = vmatpush1.xpose.msra.mxu0 0.0
        %3084 = vmatprep.subr.mxu0 0.0
        %3085 = vmatpush1.xpose.msra.mxu0 0.0
        %3086 = vmatprep.subr.mxu0 0.0
        %3087 = vmatpush1.xpose.msra.mxu0 0.0
        %3088 = vmatprep.subr.mxu0 0.0
        %3089 = vmatpush1.xpose.msra.mxu0 0.0
        %3090 = vmatprep.subr.mxu0 0.0
        %3091 = vmatpush1.xpose.msra.mxu0 0.0
        %3092 = vmatprep.subr.mxu0 0.0
        %3093 = vmatpush1.xpose.msra.mxu0 0.0
        %3094 = vmatprep.subr.mxu0 0.0
        %3095 = vmatpush1.xpose.msra.mxu0 0.0
        %3096 = vmatprep.subr.mxu0 0.0
        %3097 = vmatpush1.xpose.msra.mxu0 0.0
        %3098 = vmatprep.subr.mxu0 0.0
        %3099 = vmatpush1.xpose.msra.mxu0 0.0
        %3100 = vmatprep.subr.mxu0 0.0
        %3101 = vmatpush1.xpose.msra.mxu0 0.0
        %3102 = vmatprep.subr.mxu0 0.0
        %3103 = vmatpush1.xpose.msra.mxu0 0.0
        %3104 = vmatprep.subr.mxu0 0.0
        %3105 = vmatpush1.xpose.msra.mxu0 0.0
        %3106 = vmatprep.subr.mxu0 0.0
        %3107 = vmatpush1.xpose.msra.mxu0 0.0
        %3108 = vmatprep.subr.mxu0 0.0
        %3109 = vmatpush1.xpose.msra.mxu0 0.0
        %3110 = vmatprep.subr.mxu0 0.0
        %3111 = vmatpush1.xpose.msra.mxu0 0.0
        %3112 = vmatprep.subr.mxu0 0.0
        %3113 = vmatpush1.xpose.msra.mxu0 0.0
        %3114 = vmatprep.subr.mxu0 0.0
        %3115 = vmatpush1.xpose.msra.mxu0 0.0
        %3116 = vmatprep.subr.mxu0 0.0
        %3117 = vmatpush1.xpose.msra.mxu0 0.0
        %3118 = vmatprep.subr.mxu0 0.0
        %3119 = vmatpush1.xpose.msra.mxu0 0.0
        %3120 = vmatprep.subr.mxu0 0.0
        %3121 = vmatpush1.xpose.msra.mxu0 0.0
        %3122 = vmatprep.subr.mxu0 0.0
        %3123 = vmatpush1.xpose.msra.mxu0 0.0
        %3124 = vmatprep.subr.mxu0 0.0
        %3125 = vmatpush1.xpose.msra.mxu0 0.0
        %3126 = vmatprep.subr.mxu0 0.0
        %3127 = vmatpush1.xpose.msra.mxu0 0.0
        %3128 = vmatprep.subr.mxu0 0.0
        %3129 = vmatpush1.xpose.msra.mxu0 0.0
        %3130 = vmatprep.subr.mxu0 0.0
        %3131 = vmatpush1.xpose.msra.mxu0 0.0
        %3132 = vmatprep.subr.mxu0 0.0
        %3133 = vmatpush1.xpose.msra.mxu0 0.0
        %3134 = vmatprep.subr.mxu0 0.0
        %3135 = vmatpush1.xpose.msra.mxu0 0.0
        %3136 = vmatprep.subr.mxu0 0.0
        %3137 = vmatpush1.xpose.msra.mxu0 0.0
        %3138 = vmatprep.subr.mxu0 0.0
        %3139 = vmatpush1.xpose.msra.mxu0 0.0
        %3140 = vmatprep.mubr.f32.mxu0 0.0
        %3141 = vmatmul.mubr.f32.gmra.mrb[0].mxu0 %v3071
        %v3142 = vpop.f32.mrb[0].mxu0
        %v3143 = vadd.f32 0.0, %v3142
        %v3144 = vpop.f32.mrb[0].mxu0
        %3145 = vdwg.mxu0
        %vm3146 = vcmask 27648
        %v3147 = vsel %vm3146, %v3143, -inf
        %3148 = vmax.xlane.f32.xlu0 %v3147
        %v3149 = vpop.xlane.xlu0 %3148
        %v3150 = vsub.f32 %v3143, %v3149
        %v3151 = vmul.f32 %v3150, 1.442695
        %v3152 = vpow.pop %v3151
        %v3153 = vsel %vm3146, %v3152, 0.0
        %3154 = vadd.xlane.f32.xlu0 %v3153
        %v3155 = vpop.xlane.xlu0 %3154
        %v3156 = vrcp.pop %v3155
        %v3157 = vmul.f32 %v3152, %v3156
        %vm3158 = vcmask 31744
        %v3160 = vsel %vm3158, %v3157, 0
        %vm3162 = vcmask 1043456
        %v3164 = vsel %vm3162, %v3067, 0
        %3166 = vmatprep.subr.mxu0 0.0
        %3167 = vmatpush1.msra.mxu0 %v3164
        %3168 = vmatprep.subr.mxu0 0.0
        %3169 = vmatpush1.msra.mxu0 0.0
        %3170 = vmatprep.subr.mxu0 0.0
        %3171 = vmatpush1.msra.mxu0 0.0
        %3172 = vmatprep.subr.mxu0 0.0
        %3173 = vmatpush1.msra.mxu0 0.0
        %3174 = vmatprep.subr.mxu0 0.0
        %3175 = vmatpush1.msra.mxu0 0.0
        %3176 = vmatprep.subr.mxu0 0.0
        %3177 = vmatpush1.msra.mxu0 0.0
        %3178 = vmatprep.subr.mxu0 0.0
        %3179 = vmatpush1.msra.mxu0 0.0
        %3180 = vmatprep.subr.mxu0 0.0
        %3181 = vmatpush1.msra.mxu0 0.0
        %3182 = vmatprep.subr.mxu0 0.0
        %3183 = vmatpush1.msra.mxu0 0.0
        %3184 = vmatprep.subr.mxu0 0.0
        %3185 = vmatpush1.msra.mxu0 0.0
        %3186 = vmatprep.subr.mxu0 0.0
        %3187 = vmatpush1.msra.mxu0 0.0
        %3188 = vmatprep.subr.mxu0 0.0
        %3189 = vmatpush1.msra.mxu0 0.0
        %3190 = vmatprep.subr.mxu0 0.0
        %3191 = vmatpush1.msra.mxu0 0.0
        %3192 = vmatprep.subr.mxu0 0.0
        %3193 = vmatpush1.msra.mxu0 0.0
        %3194 = vmatprep.subr.mxu0 0.0
        %3195 = vmatpush1.msra.mxu0 0.0
        %3196 = vmatprep.subr.mxu0 0.0
        %3197 = vmatpush1.msra.mxu0 0.0
        %3198 = vmatprep.subr.mxu0 0.0
        %3199 = vmatpush1.msra.mxu0 0.0
        %3200 = vmatprep.subr.mxu0 0.0
        %3201 = vmatpush1.msra.mxu0 0.0
        %3202 = vmatprep.subr.mxu0 0.0
        %3203 = vmatpush1.msra.mxu0 0.0
        %3204 = vmatprep.subr.mxu0 0.0
        %3205 = vmatpush1.msra.mxu0 0.0
        %3206 = vmatprep.subr.mxu0 0.0
        %3207 = vmatpush1.msra.mxu0 0.0
        %3208 = vmatprep.subr.mxu0 0.0
        %3209 = vmatpush1.msra.mxu0 0.0
        %3210 = vmatprep.subr.mxu0 0.0
        %3211 = vmatpush1.msra.mxu0 0.0
        %3212 = vmatprep.subr.mxu0 0.0
        %3213 = vmatpush1.msra.mxu0 0.0
        %3214 = vmatprep.subr.mxu0 0.0
        %3215 = vmatpush1.msra.mxu0 0.0
        %3216 = vmatprep.subr.mxu0 0.0
        %3217 = vmatpush1.msra.mxu0 0.0
        %3218 = vmatprep.subr.mxu0 0.0
        %3219 = vmatpush1.msra.mxu0 0.0
        %3220 = vmatprep.subr.mxu0 0.0
        %3221 = vmatpush1.msra.mxu0 0.0
        %3222 = vmatprep.subr.mxu0 0.0
        %3223 = vmatpush1.msra.mxu0 0.0
        %3224 = vmatprep.subr.mxu0 0.0
        %3225 = vmatpush1.msra.mxu0 0.0
        %3226 = vmatprep.subr.mxu0 0.0
        %3227 = vmatpush1.msra.mxu0 0.0
        %3228 = vmatprep.subr.mxu0 0.0
        %3229 = vmatpush1.msra.mxu0 0.0
        %3230 = vmatprep.mubr.f32.mxu0 0.0
        %3231 = vmatmul.mubr.f32.gmra.mrb[0].mxu0 %v3160
        %v3232 = vpop.f32.mrb[0].mxu0
        %v3233 = vadd.f32 0.0, %v3232
        %v3234 = vpop.f32.mrb[0].mxu0
        %3235 = vdwg.mxu0
        %v3236 = vld [vmem:[%s8] sm:$0xff]
        %v3237 = vld [vmem:[%s8 + $0x8] sm:$0xff]
        %v3238 = vld [vmem:[%s8 + $0x10] sm:$0xff]
        %v3239 = vld [vmem:[%s8 + $0x18] sm:$0xff]
        %3240 = vrot.lane.b32.xlu0 %v2996, 96
        %v3241 = vpop.permute.xlu0 %3240
        %3242 = vrot.lane.b32.xlu0 %v2998, 96
        %v3243 = vpop.permute.xlu0 %3242
        %v3244 = vsel %vm829, %v3241, 0
        %v3246 = vsel %vm829, %v3243, 0
        %3248 = vmatprep.subr.mxu0 0.0
        %3249 = vmatpush1.xpose.msra.mxu0 %v3246
        %3250 = vmatprep.subr.mxu0 0.0
        %3251 = vmatpush1.xpose.msra.mxu0 0.0
        %3252 = vmatprep.subr.mxu0 0.0
        %3253 = vmatpush1.xpose.msra.mxu0 0.0
        %3254 = vmatprep.subr.mxu0 0.0
        %3255 = vmatpush1.xpose.msra.mxu0 0.0
        %3256 = vmatprep.subr.mxu0 0.0
        %3257 = vmatpush1.xpose.msra.mxu0 0.0
        %3258 = vmatprep.subr.mxu0 0.0
        %3259 = vmatpush1.xpose.msra.mxu0 0.0
        %3260 = vmatprep.subr.mxu0 0.0
        %3261 = vmatpush1.xpose.msra.mxu0 0.0
        %3262 = vmatprep.subr.mxu0 0.0
        %3263 = vmatpush1.xpose.msra.mxu0 0.0
        %3264 = vmatprep.subr.mxu0 0.0
        %3265 = vmatpush1.xpose.msra.mxu0 0.0
        %3266 = vmatprep.subr.mxu0 0.0
        %3267 = vmatpush1.xpose.msra.mxu0 0.0
        %3268 = vmatprep.subr.mxu0 0.0
        %3269 = vmatpush1.xpose.msra.mxu0 0.0
        %3270 = vmatprep.subr.mxu0 0.0
        %3271 = vmatpush1.xpose.msra.mxu0 0.0
        %3272 = vmatprep.subr.mxu0 0.0
        %3273 = vmatpush1.xpose.msra.mxu0 0.0
        %3274 = vmatprep.subr.mxu0 0.0
        %3275 = vmatpush1.xpose.msra.mxu0 0.0
        %3276 = vmatprep.subr.mxu0 0.0
        %3277 = vmatpush1.xpose.msra.mxu0 0.0
        %3278 = vmatprep.subr.mxu0 0.0
        %3279 = vmatpush1.xpose.msra.mxu0 0.0
        %3280 = vmatprep.subr.mxu0 0.0
        %3281 = vmatpush1.xpose.msra.mxu0 0.0
        %3282 = vmatprep.subr.mxu0 0.0
        %3283 = vmatpush1.xpose.msra.mxu0 0.0
        %3284 = vmatprep.subr.mxu0 0.0
        %3285 = vmatpush1.xpose.msra.mxu0 0.0
        %3286 = vmatprep.subr.mxu0 0.0
        %3287 = vmatpush1.xpose.msra.mxu0 0.0
        %3288 = vmatprep.subr.mxu0 0.0
        %3289 = vmatpush1.xpose.msra.mxu0 0.0
        %3290 = vmatprep.subr.mxu0 0.0
        %3291 = vmatpush1.xpose.msra.mxu0 0.0
        %3292 = vmatprep.subr.mxu0 0.0
        %3293 = vmatpush1.xpose.msra.mxu0 0.0
        %3294 = vmatprep.subr.mxu0 0.0
        %3295 = vmatpush1.xpose.msra.mxu0 0.0
        %3296 = vmatprep.subr.mxu0 0.0
        %3297 = vmatpush1.xpose.msra.mxu0 0.0
        %3298 = vmatprep.subr.mxu0 0.0
        %3299 = vmatpush1.xpose.msra.mxu0 0.0
        %3300 = vmatprep.subr.mxu0 0.0
        %3301 = vmatpush1.xpose.msra.mxu0 0.0
        %3302 = vmatprep.subr.mxu0 0.0
        %3303 = vmatpush1.xpose.msra.mxu0 0.0
        %3304 = vmatprep.subr.mxu0 0.0
        %3305 = vmatpush1.xpose.msra.mxu0 0.0
        %3306 = vmatprep.subr.mxu0 0.0
        %3307 = vmatpush1.xpose.msra.mxu0 0.0
        %3308 = vmatprep.subr.mxu0 0.0
        %3309 = vmatpush1.xpose.msra.mxu0 0.0
        %3310 = vmatprep.subr.mxu0 0.0
        %3311 = vmatpush1.xpose.msra.mxu0 0.0
        %3312 = vmatprep.mubr.f32.mxu0 0.0
        %3313 = vmatmul.mubr.f32.gmra.mrb[0].mxu0 %v3244
        %v3314 = vpop.f32.mrb[0].mxu0
        %v3315 = vadd.f32 0.0, %v3314
        %v3316 = vpop.f32.mrb[0].mxu0
        %3317 = vdwg.mxu0
        %v3318 = vsel %vm3146, %v3315, -inf
        %3319 = vmax.xlane.f32.xlu0 %v3318
        %v3320 = vpop.xlane.xlu0 %3319
        %v3321 = vsub.f32 %v3315, %v3320
        %v3322 = vmul.f32 %v3321, 1.442695
        %v3323 = vpow.pop %v3322
        %v3324 = vsel %vm3146, %v3323, 0.0
        %3325 = vadd.xlane.f32.xlu0 %v3324
        %v3326 = vpop.xlane.xlu0 %3325
        %v3327 = vrcp.pop %v3326
        %v3328 = vmul.f32 %v3323, %v3327
        %3329 = vrot.lane.b32.xlu0 %v3067, 96
        %v3330 = vpop.permute.xlu0 %3329
        %v3332 = vsel %vm3158, %v3328, 0
        %v3334 = vsel %vm3162, %v3330, 0
        %3336 = vmatprep.subr.mxu0 0.0
        %3337 = vmatpush1.msra.mxu0 %v3334
        %3338 = vmatprep.subr.mxu0 0.0
        %3339 = vmatpush1.msra.mxu0 0.0
        %3340 = vmatprep.subr.mxu0 0.0
        %3341 = vmatpush1.msra.mxu0 0.0
        %3342 = vmatprep.subr.mxu0 0.0
        %3343 = vmatpush1.msra.mxu0 0.0
        %3344 = vmatprep.subr.mxu0 0.0
        %3345 = vmatpush1.msra.mxu0 0.0
        %3346 = vmatprep.subr.mxu0 0.0
        %3347 = vmatpush1.msra.mxu0 0.0
        %3348 = vmatprep.subr.mxu0 0.0
        %3349 = vmatpush1.msra.mxu0 0.0
        %3350 = vmatprep.subr.mxu0 0.0
        %3351 = vmatpush1.msra.mxu0 0.0
        %3352 = vmatprep.subr.mxu0 0.0
        %3353 = vmatpush1.msra.mxu0 0.0
        %3354 = vmatprep.subr.mxu0 0.0
        %3355 = vmatpush1.msra.mxu0 0.0
        %3356 = vmatprep.subr.mxu0 0.0
        %3357 = vmatpush1.msra.mxu0 0.0
        %3358 = vmatprep.subr.mxu0 0.0
        %3359 = vmatpush1.msra.mxu0 0.0
        %3360 = vmatprep.subr.mxu0 0.0
        %3361 = vmatpush1.msra.mxu0 0.0
        %3362 = vmatprep.subr.mxu0 0.0
        %3363 = vmatpush1.msra.mxu0 0.0
        %3364 = vmatprep.subr.mxu0 0.0
        %3365 = vmatpush1.msra.mxu0 0.0
        %3366 = vmatprep.subr.mxu0 0.0
        %3367 = vmatpush1.msra.mxu0 0.0
        %3368 = vmatprep.subr.mxu0 0.0
        %3369 = vmatpush1.msra.mxu0 0.0
        %3370 = vmatprep.subr.mxu0 0.0
        %3371 = vmatpush1.msra.mxu0 0.0
        %3372 = vmatprep.subr.mxu0 0.0
        %3373 = vmatpush1.msra.mxu0 0.0
        %3374 = vmatprep.subr.mxu0 0.0
        %3375 = vmatpush1.msra.mxu0 0.0
        %3376 = vmatprep.subr.mxu0 0.0
        %3377 = vmatpush1.msra.mxu0 0.0
        %3378 = vmatprep.subr.mxu0 0.0
        %3379 = vmatpush1.msra.mxu0 0.0
        %3380 = vmatprep.subr.mxu0 0.0
        %3381 = vmatpush1.msra.mxu0 0.0
        %3382 = vmatprep.subr.mxu0 0.0
        %3383 = vmatpush1.msra.mxu0 0.0
        %3384 = vmatprep.subr.mxu0 0.0
        %3385 = vmatpush1.msra.mxu0 0.0
        %3386 = vmatprep.subr.mxu0 0.0
        %3387 = vmatpush1.msra.mxu0 0.0
        %3388 = vmatprep.subr.mxu0 0.0
        %3389 = vmatpush1.msra.mxu0 0.0
        %3390 = vmatprep.subr.mxu0 0.0
        %3391 = vmatpush1.msra.mxu0 0.0
        %3392 = vmatprep.subr.mxu0 0.0
        %3393 = vmatpush1.msra.mxu0 0.0
        %3394 = vmatprep.subr.mxu0 0.0
        %3395 = vmatpush1.msra.mxu0 0.0
        %3396 = vmatprep.subr.mxu0 0.0
        %3397 = vmatpush1.msra.mxu0 0.0
        %3398 = vmatprep.subr.mxu0 0.0
        %3399 = vmatpush1.msra.mxu0 0.0
        %3400 = vmatprep.mubr.f32.mxu0 0.0
        %3401 = vmatmul.mubr.f32.gmra.mrb[0].mxu0 %v3332
        %v3402 = vpop.f32.mrb[0].mxu0
        %v3403 = vadd.f32 0.0, %v3402
        %v3404 = vpop.f32.mrb[0].mxu0
        %3405 = vdwg.mxu0
        %s3406 = scalar_lea.vmem %s8, 32
        %v3407 = vld [vmem:[%s3406] sm:$0xff]
        %v3408 = vld [vmem:[%s3406 + $0x8] sm:$0xff]
        %v3409 = vld [vmem:[%s3406 + $0x10] sm:$0xff]
        %v3410 = vld [vmem:[%s3406 + $0x18] sm:$0xff]
        %v3412 = vsel %vm829, %v3403, 0
        %3414 = vmatprep.subr.mxu0 0.0
        %3415 = vmatpush1.msra.mxu0 %v3407
        %3416 = vmatprep.subr.mxu0 0.0
        %3417 = vmatpush1.msra.mxu0 %v3408
        %3418 = vmatprep.subr.mxu0 0.0
        %3419 = vmatpush1.msra.mxu0 %v3409
        %3420 = vmatprep.subr.mxu0 0.0
        %3421 = vmatpush1.msra.mxu0 %v3410
        %3422 = vmatprep.subr.mxu0 0.0
        %3423 = vmatpush1.msra.mxu0 0.0
        %3424 = vmatprep.subr.mxu0 0.0
        %3425 = vmatpush1.msra.mxu0 0.0
        %3426 = vmatprep.subr.mxu0 0.0
        %3427 = vmatpush1.msra.mxu0 0.0
        %3428 = vmatprep.subr.mxu0 0.0
        %3429 = vmatpush1.msra.mxu0 0.0
        %3430 = vmatprep.subr.mxu0 0.0
        %3431 = vmatpush1.msra.mxu0 0.0
        %3432 = vmatprep.subr.mxu0 0.0
        %3433 = vmatpush1.msra.mxu0 0.0
        %3434 = vmatprep.subr.mxu0 0.0
        %3435 = vmatpush1.msra.mxu0 0.0
        %3436 = vmatprep.subr.mxu0 0.0
        %3437 = vmatpush1.msra.mxu0 0.0
        %3438 = vmatprep.subr.mxu0 0.0
        %3439 = vmatpush1.msra.mxu0 0.0
        %3440 = vmatprep.subr.mxu0 0.0
        %3441 = vmatpush1.msra.mxu0 0.0
        %3442 = vmatprep.subr.mxu0 0.0
        %3443 = vmatpush1.msra.mxu0 0.0
        %3444 = vmatprep.subr.mxu0 0.0
        %3445 = vmatpush1.msra.mxu0 0.0
        %3446 = vmatprep.subr.mxu0 0.0
        %3447 = vmatpush1.msra.mxu0 0.0
        %3448 = vmatprep.subr.mxu0 0.0
        %3449 = vmatpush1.msra.mxu0 0.0
        %3450 = vmatprep.subr.mxu0 0.0
        %3451 = vmatpush1.msra.mxu0 0.0
        %3452 = vmatprep.subr.mxu0 0.0
        %3453 = vmatpush1.msra.mxu0 0.0
        %3454 = vmatprep.subr.mxu0 0.0
        %3455 = vmatpush1.msra.mxu0 0.0
        %3456 = vmatprep.subr.mxu0 0.0
        %3457 = vmatpush1.msra.mxu0 0.0
        %3458 = vmatprep.subr.mxu0 0.0
        %3459 = vmatpush1.msra.mxu0 0.0
        %3460 = vmatprep.subr.mxu0 0.0
        %3461 = vmatpush1.msra.mxu0 0.0
        %3462 = vmatprep.subr.mxu0 0.0
        %3463 = vmatpush1.msra.mxu0 0.0
        %3464 = vmatprep.subr.mxu0 0.0
        %3465 = vmatpush1.msra.mxu0 0.0
        %3466 = vmatprep.subr.mxu0 0.0
        %3467 = vmatpush1.msra.mxu0 0.0
        %3468 = vmatprep.subr.mxu0 0.0
        %3469 = vmatpush1.msra.mxu0 0.0
        %3470 = vmatprep.subr.mxu0 0.0
        %3471 = vmatpush1.msra.mxu0 0.0
        %3472 = vmatprep.subr.mxu0 0.0
        %3473 = vmatpush1.msra.mxu0 0.0
        %3474 = vmatprep.subr.mxu0 0.0
        %3475 = vmatpush1.msra.mxu0 0.0
        %3476 = vmatprep.subr.mxu0 0.0
        %3477 = vmatpush1.msra.mxu0 0.0
        %3478 = vmatprep.mubr.f32.mxu0 0.0
        %3479 = vmatmul.mubr.f32.gmra.mrb[0].mxu0 %v3412
        %v3480 = vpop.f32.mrb[0].mxu0
        %v3481 = vadd.f32 0.0, %v3480
        %v3482 = vpop.f32.mrb[0].mxu0
        %3483 = vdwg.mxu0
        %v3485 = vsel %vm829, %v3233, 0
        %3487 = vmatprep.subr.mxu0 0.0
        %3488 = vmatpush1.msra.mxu0 %v3236
        %3489 = vmatprep.subr.mxu0 0.0
        %3490 = vmatpush1.msra.mxu0 %v3237
        %3491 = vmatprep.subr.mxu0 0.0
        %3492 = vmatpush1.msra.mxu0 %v3238
        %3493 = vmatprep.subr.mxu0 0.0
        %3494 = vmatpush1.msra.mxu0 %v3239
        %3495 = vmatprep.subr.mxu0 0.0
        %3496 = vmatpush1.msra.mxu0 0.0
        %3497 = vmatprep.subr.mxu0 0.0
        %3498 = vmatpush1.msra.mxu0 0.0
        %3499 = vmatprep.subr.mxu0 0.0
        %3500 = vmatpush1.msra.mxu0 0.0
        %3501 = vmatprep.subr.mxu0 0.0
        %3502 = vmatpush1.msra.mxu0 0.0
        %3503 = vmatprep.subr.mxu0 0.0
        %3504 = vmatpush1.msra.mxu0 0.0
        %3505 = vmatprep.subr.mxu0 0.0
        %3506 = vmatpush1.msra.mxu0 0.0
        %3507 = vmatprep.subr.mxu0 0.0
        %3508 = vmatpush1.msra.mxu0 0.0
        %3509 = vmatprep.subr.mxu0 0.0
        %3510 = vmatpush1.msra.mxu0 0.0
        %3511 = vmatprep.subr.mxu0 0.0
        %3512 = vmatpush1.msra.mxu0 0.0
        %3513 = vmatprep.subr.mxu0 0.0
        %3514 = vmatpush1.msra.mxu0 0.0
        %3515 = vmatprep.subr.mxu0 0.0
        %3516 = vmatpush1.msra.mxu0 0.0
        %3517 = vmatprep.subr.mxu0 0.0
        %3518 = vmatpush1.msra.mxu0 0.0
        %3519 = vmatprep.subr.mxu0 0.0
        %3520 = vmatpush1.msra.mxu0 0.0
        %3521 = vmatprep.subr.mxu0 0.0
        %3522 = vmatpush1.msra.mxu0 0.0
        %3523 = vmatprep.subr.mxu0 0.0
        %3524 = vmatpush1.msra.mxu0 0.0
        %3525 = vmatprep.subr.mxu0 0.0
        %3526 = vmatpush1.msra.mxu0 0.0
        %3527 = vmatprep.subr.mxu0 0.0
        %3528 = vmatpush1.msra.mxu0 0.0
        %3529 = vmatprep.subr.mxu0 0.0
        %3530 = vmatpush1.msra.mxu0 0.0
        %3531 = vmatprep.subr.mxu0 0.0
        %3532 = vmatpush1.msra.mxu0 0.0
        %3533 = vmatprep.subr.mxu0 0.0
        %3534 = vmatpush1.msra.mxu0 0.0
        %3535 = vmatprep.subr.mxu0 0.0
        %3536 = vmatpush1.msra.mxu0 0.0
        %3537 = vmatprep.subr.mxu0 0.0
        %3538 = vmatpush1.msra.mxu0 0.0
        %3539 = vmatprep.subr.mxu0 0.0
        %3540 = vmatpush1.msra.mxu0 0.0
        %3541 = vmatprep.subr.mxu0 0.0
        %3542 = vmatpush1.msra.mxu0 0.0
        %3543 = vmatprep.subr.mxu0 0.0
        %3544 = vmatpush1.msra.mxu0 0.0
        %3545 = vmatprep.subr.mxu0 0.0
        %3546 = vmatpush1.msra.mxu0 0.0
        %3547 = vmatprep.subr.mxu0 0.0
        %3548 = vmatpush1.msra.mxu0 0.0
        %3549 = vmatprep.subr.mxu0 0.0
        %3550 = vmatpush1.msra.mxu0 0.0
        %3551 = vmatprep.mubr.f32.mxu0 0.0
        %3552 = vmatmul.mubr.f32.gmra.mrb[0].mxu0 %v3485
        %v3553 = vpop.f32.mrb[0].mxu0
        %v3554 = vadd.f32 %v3481, %v3553
        %v3555 = vpop.f32.mrb[0].mxu0
        %3556 = vdwg.mxu0
        %3557 = vrot.lane.b32.xlu0 %v2996, 64
        %v3558 = vpop.permute.xlu0 %3557
        %3559 = vrot.lane.b32.xlu0 %v2998, 64
        %v3560 = vpop.permute.xlu0 %3559
        %v3561 = vsel %vm829, %v3558, 0
        %v3563 = vsel %vm829, %v3560, 0
        %3565 = vmatprep.subr.mxu0 0.0
        %3566 = vmatpush1.xpose.msra.mxu0 %v3563
        %3567 = vmatprep.subr.mxu0 0.0
        %3568 = vmatpush1.xpose.msra.mxu0 0.0
        %3569 = vmatprep.subr.mxu0 0.0
        %3570 = vmatpush1.xpose.msra.mxu0 0.0
        %3571 = vmatprep.subr.mxu0 0.0
        %3572 = vmatpush1.xpose.msra.mxu0 0.0
        %3573 = vmatprep.subr.mxu0 0.0
        %3574 = vmatpush1.xpose.msra.mxu0 0.0
        %3575 = vmatprep.subr.mxu0 0.0
        %3576 = vmatpush1.xpose.msra.mxu0 0.0
        %3577 = vmatprep.subr.mxu0 0.0
        %3578 = vmatpush1.xpose.msra.mxu0 0.0
        %3579 = vmatprep.subr.mxu0 0.0
        %3580 = vmatpush1.xpose.msra.mxu0 0.0
        %3581 = vmatprep.subr.mxu0 0.0
        %3582 = vmatpush1.xpose.msra.mxu0 0.0
        %3583 = vmatprep.subr.mxu0 0.0
        %3584 = vmatpush1.xpose.msra.mxu0 0.0
        %3585 = vmatprep.subr.mxu0 0.0
        %3586 = vmatpush1.xpose.msra.mxu0 0.0
        %3587 = vmatprep.subr.mxu0 0.0
        %3588 = vmatpush1.xpose.msra.mxu0 0.0
        %3589 = vmatprep.subr.mxu0 0.0
        %3590 = vmatpush1.xpose.msra.mxu0 0.0
        %3591 = vmatprep.subr.mxu0 0.0
        %3592 = vmatpush1.xpose.msra.mxu0 0.0
        %3593 = vmatprep.subr.mxu0 0.0
        %3594 = vmatpush1.xpose.msra.mxu0 0.0
        %3595 = vmatprep.subr.mxu0 0.0
        %3596 = vmatpush1.xpose.msra.mxu0 0.0
        %3597 = vmatprep.subr.mxu0 0.0
        %3598 = vmatpush1.xpose.msra.mxu0 0.0
        %3599 = vmatprep.subr.mxu0 0.0
        %3600 = vmatpush1.xpose.msra.mxu0 0.0
        %3601 = vmatprep.subr.mxu0 0.0
        %3602 = vmatpush1.xpose.msra.mxu0 0.0
        %3603 = vmatprep.subr.mxu0 0.0
        %3604 = vmatpush1.xpose.msra.mxu0 0.0
        %3605 = vmatprep.subr.mxu0 0.0
        %3606 = vmatpush1.xpose.msra.mxu0 0.0
        %3607 = vmatprep.subr.mxu0 0.0
        %3608 = vmatpush1.xpose.msra.mxu0 0.0
        %3609 = vmatprep.subr.mxu0 0.0
        %3610 = vmatpush1.xpose.msra.mxu0 0.0
        %3611 = vmatprep.subr.mxu0 0.0
        %3612 = vmatpush1.xpose.msra.mxu0 0.0
        %3613 = vmatprep.subr.mxu0 0.0
        %3614 = vmatpush1.xpose.msra.mxu0 0.0
        %3615 = vmatprep.subr.mxu0 0.0
        %3616 = vmatpush1.xpose.msra.mxu0 0.0
        %3617 = vmatprep.subr.mxu0 0.0
        %3618 = vmatpush1.xpose.msra.mxu0 0.0
        %3619 = vmatprep.subr.mxu0 0.0
        %3620 = vmatpush1.xpose.msra.mxu0 0.0
        %3621 = vmatprep.subr.mxu0 0.0
        %3622 = vmatpush1.xpose.msra.mxu0 0.0
        %3623 = vmatprep.subr.mxu0 0.0
        %3624 = vmatpush1.xpose.msra.mxu0 0.0
        %3625 = vmatprep.subr.mxu0 0.0
        %3626 = vmatpush1.xpose.msra.mxu0 0.0
        %3627 = vmatprep.subr.mxu0 0.0
        %3628 = vmatpush1.xpose.msra.mxu0 0.0
        %3629 = vmatprep.mubr.f32.mxu0 0.0
        %3630 = vmatmul.mubr.f32.gmra.mrb[0].mxu0 %v3561
        %v3631 = vpop.f32.mrb[0].mxu0
        %v3632 = vadd.f32 0.0, %v3631
        %v3633 = vpop.f32.mrb[0].mxu0
        %3634 = vdwg.mxu0
        %v3635 = vsel %vm3146, %v3632, -inf
        %3636 = vmax.xlane.f32.xlu0 %v3635
        %v3637 = vpop.xlane.xlu0 %3636
        %v3638 = vsub.f32 %v3632, %v3637
        %v3639 = vmul.f32 %v3638, 1.442695
        %v3640 = vpow.pop %v3639
        %v3641 = vsel %vm3146, %v3640, 0.0
        %3642 = vadd.xlane.f32.xlu0 %v3641
        %v3643 = vpop.xlane.xlu0 %3642
        %v3644 = vrcp.pop %v3643
        %v3645 = vmul.f32 %v3640, %v3644
        %3646 = vrot.lane.b32.xlu0 %v3067, 64
        %v3647 = vpop.permute.xlu0 %3646
        %v3649 = vsel %vm3158, %v3645, 0
        %v3651 = vsel %vm3162, %v3647, 0
        %3653 = vmatprep.subr.mxu0 0.0
        %3654 = vmatpush1.msra.mxu0 %v3651
        %3655 = vmatprep.subr.mxu0 0.0
        %3656 = vmatpush1.msra.mxu0 0.0
        %3657 = vmatprep.subr.mxu0 0.0
        %3658 = vmatpush1.msra.mxu0 0.0
        %3659 = vmatprep.subr.mxu0 0.0
        %3660 = vmatpush1.msra.mxu0 0.0
        %3661 = vmatprep.subr.mxu0 0.0
        %3662 = vmatpush1.msra.mxu0 0.0
        %3663 = vmatprep.subr.mxu0 0.0
        %3664 = vmatpush1.msra.mxu0 0.0
        %3665 = vmatprep.subr.mxu0 0.0
        %3666 = vmatpush1.msra.mxu0 0.0
        %3667 = vmatprep.subr.mxu0 0.0
        %3668 = vmatpush1.msra.mxu0 0.0
        %3669 = vmatprep.subr.mxu0 0.0
        %3670 = vmatpush1.msra.mxu0 0.0
        %3671 = vmatprep.subr.mxu0 0.0
        %3672 = vmatpush1.msra.mxu0 0.0
        %3673 = vmatprep.subr.mxu0 0.0
        %3674 = vmatpush1.msra.mxu0 0.0
        %3675 = vmatprep.subr.mxu0 0.0
        %3676 = vmatpush1.msra.mxu0 0.0
        %3677 = vmatprep.subr.mxu0 0.0
        %3678 = vmatpush1.msra.mxu0 0.0
        %3679 = vmatprep.subr.mxu0 0.0
        %3680 = vmatpush1.msra.mxu0 0.0
        %3681 = vmatprep.subr.mxu0 0.0
        %3682 = vmatpush1.msra.mxu0 0.0
        %3683 = vmatprep.subr.mxu0 0.0
        %3684 = vmatpush1.msra.mxu0 0.0
        %3685 = vmatprep.subr.mxu0 0.0
        %3686 = vmatpush1.msra.mxu0 0.0
        %3687 = vmatprep.subr.mxu0 0.0
        %3688 = vmatpush1.msra.mxu0 0.0
        %3689 = vmatprep.subr.mxu0 0.0
        %3690 = vmatpush1.msra.mxu0 0.0
        %3691 = vmatprep.subr.mxu0 0.0
        %3692 = vmatpush1.msra.mxu0 0.0
        %3693 = vmatprep.subr.mxu0 0.0
        %3694 = vmatpush1.msra.mxu0 0.0
        %3695 = vmatprep.subr.mxu0 0.0
        %3696 = vmatpush1.msra.mxu0 0.0
        %3697 = vmatprep.subr.mxu0 0.0
        %3698 = vmatpush1.msra.mxu0 0.0
        %3699 = vmatprep.subr.mxu0 0.0
        %3700 = vmatpush1.msra.mxu0 0.0
        %3701 = vmatprep.subr.mxu0 0.0
        %3702 = vmatpush1.msra.mxu0 0.0
        %3703 = vmatprep.subr.mxu0 0.0
        %3704 = vmatpush1.msra.mxu0 0.0
        %3705 = vmatprep.subr.mxu0 0.0
        %3706 = vmatpush1.msra.mxu0 0.0
        %3707 = vmatprep.subr.mxu0 0.0
        %3708 = vmatpush1.msra.mxu0 0.0
        %3709 = vmatprep.subr.mxu0 0.0
        %3710 = vmatpush1.msra.mxu0 0.0
        %3711 = vmatprep.subr.mxu0 0.0
        %3712 = vmatpush1.msra.mxu0 0.0
        %3713 = vmatprep.subr.mxu0 0.0
        %3714 = vmatpush1.msra.mxu0 0.0
        %3715 = vmatprep.subr.mxu0 0.0
        %3716 = vmatpush1.msra.mxu0 0.0
        %3717 = vmatprep.mubr.f32.mxu0 0.0
        %3718 = vmatmul.mubr.f32.gmra.mrb[0].mxu0 %v3649
        %v3719 = vpop.f32.mrb[0].mxu0
        %v3720 = vadd.f32 0.0, %v3719
        %v3721 = vpop.f32.mrb[0].mxu0
        %3722 = vdwg.mxu0
        %s3723 = scalar_lea.vmem %s8, 64
        %v3724 = vld [vmem:[%s3723] sm:$0xff]
        %v3725 = vld [vmem:[%s3723 + $0x8] sm:$0xff]
        %v3726 = vld [vmem:[%s3723 + $0x10] sm:$0xff]
        %v3727 = vld [vmem:[%s3723 + $0x18] sm:$0xff]
        %v3729 = vsel %vm829, %v3720, 0
        %3731 = vmatprep.subr.mxu0 0.0
        %3732 = vmatpush1.msra.mxu0 %v3724
        %3733 = vmatprep.subr.mxu0 0.0
        %3734 = vmatpush1.msra.mxu0 %v3725
        %3735 = vmatprep.subr.mxu0 0.0
        %3736 = vmatpush1.msra.mxu0 %v3726
        %3737 = vmatprep.subr.mxu0 0.0
        %3738 = vmatpush1.msra.mxu0 %v3727
        %3739 = vmatprep.subr.mxu0 0.0
        %3740 = vmatpush1.msra.mxu0 0.0
        %3741 = vmatprep.subr.mxu0 0.0
        %3742 = vmatpush1.msra.mxu0 0.0
        %3743 = vmatprep.subr.mxu0 0.0
        %3744 = vmatpush1.msra.mxu0 0.0
        %3745 = vmatprep.subr.mxu0 0.0
        %3746 = vmatpush1.msra.mxu0 0.0
        %3747 = vmatprep.subr.mxu0 0.0
        %3748 = vmatpush1.msra.mxu0 0.0
        %3749 = vmatprep.subr.mxu0 0.0
        %3750 = vmatpush1.msra.mxu0 0.0
        %3751 = vmatprep.subr.mxu0 0.0
        %3752 = vmatpush1.msra.mxu0 0.0
        %3753 = vmatprep.subr.mxu0 0.0
        %3754 = vmatpush1.msra.mxu0 0.0
        %3755 = vmatprep.subr.mxu0 0.0
        %3756 = vmatpush1.msra.mxu0 0.0
        %3757 = vmatprep.subr.mxu0 0.0
        %3758 = vmatpush1.msra.mxu0 0.0
        %3759 = vmatprep.subr.mxu0 0.0
        %3760 = vmatpush1.msra.mxu0 0.0
        %3761 = vmatprep.subr.mxu0 0.0
        %3762 = vmatpush1.msra.mxu0 0.0
        %3763 = vmatprep.subr.mxu0 0.0
        %3764 = vmatpush1.msra.mxu0 0.0
        %3765 = vmatprep.subr.mxu0 0.0
        %3766 = vmatpush1.msra.mxu0 0.0
        %3767 = vmatprep.subr.mxu0 0.0
        %3768 = vmatpush1.msra.mxu0 0.0
        %3769 = vmatprep.subr.mxu0 0.0
        %3770 = vmatpush1.msra.mxu0 0.0
        %3771 = vmatprep.subr.mxu0 0.0
        %3772 = vmatpush1.msra.mxu0 0.0
        %3773 = vmatprep.subr.mxu0 0.0
        %3774 = vmatpush1.msra.mxu0 0.0
        %3775 = vmatprep.subr.mxu0 0.0
        %3776 = vmatpush1.msra.mxu0 0.0
        %3777 = vmatprep.subr.mxu0 0.0
        %3778 = vmatpush1.msra.mxu0 0.0
        %3779 = vmatprep.subr.mxu0 0.0
        %3780 = vmatpush1.msra.mxu0 0.0
        %3781 = vmatprep.subr.mxu0 0.0
        %3782 = vmatpush1.msra.mxu0 0.0
        %3783 = vmatprep.subr.mxu0 0.0
        %3784 = vmatpush1.msra.mxu0 0.0
        %3785 = vmatprep.subr.mxu0 0.0
        %3786 = vmatpush1.msra.mxu0 0.0
        %3787 = vmatprep.subr.mxu0 0.0
        %3788 = vmatpush1.msra.mxu0 0.0
        %3789 = vmatprep.subr.mxu0 0.0
        %3790 = vmatpush1.msra.mxu0 0.0
        %3791 = vmatprep.subr.mxu0 0.0
        %3792 = vmatpush1.msra.mxu0 0.0
        %3793 = vmatprep.subr.mxu0 0.0
        %3794 = vmatpush1.msra.mxu0 0.0
        %3795 = vmatprep.mubr.f32.mxu0 0.0
        %3796 = vmatmul.mubr.f32.gmra.mrb[0].mxu0 %v3729
        %v3797 = vpop.f32.mrb[0].mxu0
        %v3798 = vadd.f32 0.0, %v3797
        %v3799 = vpop.f32.mrb[0].mxu0
        %3800 = vdwg.mxu0
        %v3801 = vadd.f32 %v3554, %v3798
        %3802 = vrot.lane.b32.xlu0 %v2996, 32
        %v3803 = vpop.permute.xlu0 %3802
        %3804 = vrot.lane.b32.xlu0 %v2998, 32
        %v3805 = vpop.permute.xlu0 %3804
        %v3806 = vsel %vm829, %v3803, 0
        %v3808 = vsel %vm829, %v3805, 0
        %3810 = vmatprep.subr.mxu0 0.0
        %3811 = vmatpush1.xpose.msra.mxu0 %v3808
        %3812 = vmatprep.subr.mxu0 0.0
        %3813 = vmatpush1.xpose.msra.mxu0 0.0
        %3814 = vmatprep.subr.mxu0 0.0
        %3815 = vmatpush1.xpose.msra.mxu0 0.0
        %3816 = vmatprep.subr.mxu0 0.0
        %3817 = vmatpush1.xpose.msra.mxu0 0.0
        %3818 = vmatprep.subr.mxu0 0.0
        %3819 = vmatpush1.xpose.msra.mxu0 0.0
        %3820 = vmatprep.subr.mxu0 0.0
        %3821 = vmatpush1.xpose.msra.mxu0 0.0
        %3822 = vmatprep.subr.mxu0 0.0
        %3823 = vmatpush1.xpose.msra.mxu0 0.0
        %3824 = vmatprep.subr.mxu0 0.0
        %3825 = vmatpush1.xpose.msra.mxu0 0.0
        %3826 = vmatprep.subr.mxu0 0.0
        %3827 = vmatpush1.xpose.msra.mxu0 0.0
        %3828 = vmatprep.subr.mxu0 0.0
        %3829 = vmatpush1.xpose.msra.mxu0 0.0
        %3830 = vmatprep.subr.mxu0 0.0
        %3831 = vmatpush1.xpose.msra.mxu0 0.0
        %3832 = vmatprep.subr.mxu0 0.0
        %3833 = vmatpush1.xpose.msra.mxu0 0.0
        %3834 = vmatprep.subr.mxu0 0.0
        %3835 = vmatpush1.xpose.msra.mxu0 0.0
        %3836 = vmatprep.subr.mxu0 0.0
        %3837 = vmatpush1.xpose.msra.mxu0 0.0
        %3838 = vmatprep.subr.mxu0 0.0
        %3839 = vmatpush1.xpose.msra.mxu0 0.0
        %3840 = vmatprep.subr.mxu0 0.0
        %3841 = vmatpush1.xpose.msra.mxu0 0.0
        %3842 = vmatprep.subr.mxu0 0.0
        %3843 = vmatpush1.xpose.msra.mxu0 0.0
        %3844 = vmatprep.subr.mxu0 0.0
        %3845 = vmatpush1.xpose.msra.mxu0 0.0
        %3846 = vmatprep.subr.mxu0 0.0
        %3847 = vmatpush1.xpose.msra.mxu0 0.0
        %3848 = vmatprep.subr.mxu0 0.0
        %3849 = vmatpush1.xpose.msra.mxu0 0.0
        %3850 = vmatprep.subr.mxu0 0.0
        %3851 = vmatpush1.xpose.msra.mxu0 0.0
        %3852 = vmatprep.subr.mxu0 0.0
        %3853 = vmatpush1.xpose.msra.mxu0 0.0
        %3854 = vmatprep.subr.mxu0 0.0
        %3855 = vmatpush1.xpose.msra.mxu0 0.0
        %3856 = vmatprep.subr.mxu0 0.0
        %3857 = vmatpush1.xpose.msra.mxu0 0.0
        %3858 = vmatprep.subr.mxu0 0.0
        %3859 = vmatpush1.xpose.msra.mxu0 0.0
        %3860 = vmatprep.subr.mxu0 0.0
        %3861 = vmatpush1.xpose.msra.mxu0 0.0
        %3862 = vmatprep.subr.mxu0 0.0
        %3863 = vmatpush1.xpose.msra.mxu0 0.0
        %3864 = vmatprep.subr.mxu0 0.0
        %3865 = vmatpush1.xpose.msra.mxu0 0.0
        %3866 = vmatprep.subr.mxu0 0.0
        %3867 = vmatpush1.xpose.msra.mxu0 0.0
        %3868 = vmatprep.subr.mxu0 0.0
        %3869 = vmatpush1.xpose.msra.mxu0 0.0
        %3870 = vmatprep.subr.mxu0 0.0
        %3871 = vmatpush1.xpose.msra.mxu0 0.0
        %3872 = vmatprep.subr.mxu0 0.0
        %3873 = vmatpush1.xpose.msra.mxu0 0.0
        %3874 = vmatprep.mubr.f32.mxu0 0.0
        %3875 = vmatmul.mubr.f32.gmra.mrb[0].mxu0 %v3806
        %v3876 = vpop.f32.mrb[0].mxu0
        %v3877 = vadd.f32 0.0, %v3876
        %v3878 = vpop.f32.mrb[0].mxu0
        %3879 = vdwg.mxu0
        %v3880 = vsel %vm3146, %v3877, -inf
        %3881 = vmax.xlane.f32.xlu0 %v3880
        %v3882 = vpop.xlane.xlu0 %3881
        %v3883 = vsub.f32 %v3877, %v3882
        %v3884 = vmul.f32 %v3883, 1.442695
        %v3885 = vpow.pop %v3884
        %v3886 = vsel %vm3146, %v3885, 0.0
        %3887 = vadd.xlane.f32.xlu0 %v3886
        %v3888 = vpop.xlane.xlu0 %3887
        %v3889 = vrcp.pop %v3888
        %v3890 = vmul.f32 %v3885, %v3889
        %3891 = vrot.lane.b32.xlu0 %v3067, 32
        %v3892 = vpop.permute.xlu0 %3891
        %v3894 = vsel %vm3158, %v3890, 0
        %v3896 = vsel %vm3162, %v3892, 0
        %3898 = vmatprep.subr.mxu0 0.0
        %3899 = vmatpush1.msra.mxu0 %v3896
        %3900 = vmatprep.subr.mxu0 0.0
        %3901 = vmatpush1.msra.mxu0 0.0
        %3902 = vmatprep.subr.mxu0 0.0
        %3903 = vmatpush1.msra.mxu0 0.0
        %3904 = vmatprep.subr.mxu0 0.0
        %3905 = vmatpush1.msra.mxu0 0.0
        %3906 = vmatprep.subr.mxu0 0.0
        %3907 = vmatpush1.msra.mxu0 0.0
        %3908 = vmatprep.subr.mxu0 0.0
        %3909 = vmatpush1.msra.mxu0 0.0
        %3910 = vmatprep.subr.mxu0 0.0
        %3911 = vmatpush1.msra.mxu0 0.0
        %3912 = vmatprep.subr.mxu0 0.0
        %3913 = vmatpush1.msra.mxu0 0.0
        %3914 = vmatprep.subr.mxu0 0.0
        %3915 = vmatpush1.msra.mxu0 0.0
        %3916 = vmatprep.subr.mxu0 0.0
        %3917 = vmatpush1.msra.mxu0 0.0
        %3918 = vmatprep.subr.mxu0 0.0
        %3919 = vmatpush1.msra.mxu0 0.0
        %3920 = vmatprep.subr.mxu0 0.0
        %3921 = vmatpush1.msra.mxu0 0.0
        %3922 = vmatprep.subr.mxu0 0.0
        %3923 = vmatpush1.msra.mxu0 0.0
        %3924 = vmatprep.subr.mxu0 0.0
        %3925 = vmatpush1.msra.mxu0 0.0
        %3926 = vmatprep.subr.mxu0 0.0
        %3927 = vmatpush1.msra.mxu0 0.0
        %3928 = vmatprep.subr.mxu0 0.0
        %3929 = vmatpush1.msra.mxu0 0.0
        %3930 = vmatprep.subr.mxu0 0.0
        %3931 = vmatpush1.msra.mxu0 0.0
        %3932 = vmatprep.subr.mxu0 0.0
        %3933 = vmatpush1.msra.mxu0 0.0
        %3934 = vmatprep.subr.mxu0 0.0
        %3935 = vmatpush1.msra.mxu0 0.0
        %3936 = vmatprep.subr.mxu0 0.0
        %3937 = vmatpush1.msra.mxu0 0.0
        %3938 = vmatprep.subr.mxu0 0.0
        %3939 = vmatpush1.msra.mxu0 0.0
        %3940 = vmatprep.subr.mxu0 0.0
        %3941 = vmatpush1.msra.mxu0 0.0
        %3942 = vmatprep.subr.mxu0 0.0
        %3943 = vmatpush1.msra.mxu0 0.0
        %3944 = vmatprep.subr.mxu0 0.0
        %3945 = vmatpush1.msra.mxu0 0.0
        %3946 = vmatprep.subr.mxu0 0.0
        %3947 = vmatpush1.msra.mxu0 0.0
        %3948 = vmatprep.subr.mxu0 0.0
        %3949 = vmatpush1.msra.mxu0 0.0
        %3950 = vmatprep.subr.mxu0 0.0
        %3951 = vmatpush1.msra.mxu0 0.0
        %3952 = vmatprep.subr.mxu0 0.0
        %3953 = vmatpush1.msra.mxu0 0.0
        %3954 = vmatprep.subr.mxu0 0.0
        %3955 = vmatpush1.msra.mxu0 0.0
        %3956 = vmatprep.subr.mxu0 0.0
        %3957 = vmatpush1.msra.mxu0 0.0
        %3958 = vmatprep.subr.mxu0 0.0
        %3959 = vmatpush1.msra.mxu0 0.0
        %3960 = vmatprep.subr.mxu0 0.0
        %3961 = vmatpush1.msra.mxu0 0.0
        %3962 = vmatprep.mubr.f32.mxu0 0.0
        %3963 = vmatmul.mubr.f32.gmra.mrb[0].mxu0 %v3894
        %v3964 = vpop.f32.mrb[0].mxu0
        %v3965 = vadd.f32 0.0, %v3964
        %v3966 = vpop.f32.mrb[0].mxu0
        %3967 = vdwg.mxu0
        %s3968 = scalar_lea.vmem %s8, 96
        %v3969 = vld [vmem:[%s3968] sm:$0xff]
        %v3970 = vld [vmem:[%s3968 + $0x8] sm:$0xff]
        %v3971 = vld [vmem:[%s3968 + $0x10] sm:$0xff]
        %v3972 = vld [vmem:[%s3968 + $0x18] sm:$0xff]
        %v3974 = vsel %vm829, %v3965, 0
        %3976 = vmatprep.subr.mxu0 0.0
        %3977 = vmatpush1.msra.mxu0 %v3969
        %3978 = vmatprep.subr.mxu0 0.0
        %3979 = vmatpush1.msra.mxu0 %v3970
        %3980 = vmatprep.subr.mxu0 0.0
        %3981 = vmatpush1.msra.mxu0 %v3971
        %3982 = vmatprep.subr.mxu0 0.0
        %3983 = vmatpush1.msra.mxu0 %v3972
        %3984 = vmatprep.subr.mxu0 0.0
        %3985 = vmatpush1.msra.mxu0 0.0
        %3986 = vmatprep.subr.mxu0 0.0
        %3987 = vmatpush1.msra.mxu0 0.0
        %3988 = vmatprep.subr.mxu0 0.0
        %3989 = vmatpush1.msra.mxu0 0.0
        %3990 = vmatprep.subr.mxu0 0.0
        %3991 = vmatpush1.msra.mxu0 0.0
        %3992 = vmatprep.subr.mxu0 0.0
        %3993 = vmatpush1.msra.mxu0 0.0
        %3994 = vmatprep.subr.mxu0 0.0
        %3995 = vmatpush1.msra.mxu0 0.0
        %3996 = vmatprep.subr.mxu0 0.0
        %3997 = vmatpush1.msra.mxu0 0.0
        %3998 = vmatprep.subr.mxu0 0.0
        %3999 = vmatpush1.msra.mxu0 0.0
        %4000 = vmatprep.subr.mxu0 0.0
        %4001 = vmatpush1.msra.mxu0 0.0
        %4002 = vmatprep.subr.mxu0 0.0
        %4003 = vmatpush1.msra.mxu0 0.0
        %4004 = vmatprep.subr.mxu0 0.0
        %4005 = vmatpush1.msra.mxu0 0.0
        %4006 = vmatprep.subr.mxu0 0.0
        %4007 = vmatpush1.msra.mxu0 0.0
        %4008 = vmatprep.subr.mxu0 0.0
        %4009 = vmatpush1.msra.mxu0 0.0
        %4010 = vmatprep.subr.mxu0 0.0
        %4011 = vmatpush1.msra.mxu0 0.0
        %4012 = vmatprep.subr.mxu0 0.0
        %4013 = vmatpush1.msra.mxu0 0.0
        %4014 = vmatprep.subr.mxu0 0.0
        %4015 = vmatpush1.msra.mxu0 0.0
        %4016 = vmatprep.subr.mxu0 0.0
        %4017 = vmatpush1.msra.mxu0 0.0
        %4018 = vmatprep.subr.mxu0 0.0
        %4019 = vmatpush1.msra.mxu0 0.0
        %4020 = vmatprep.subr.mxu0 0.0
        %4021 = vmatpush1.msra.mxu0 0.0
        %4022 = vmatprep.subr.mxu0 0.0
        %4023 = vmatpush1.msra.mxu0 0.0
        %4024 = vmatprep.subr.mxu0 0.0
        %4025 = vmatpush1.msra.mxu0 0.0
        %4026 = vmatprep.subr.mxu0 0.0
        %4027 = vmatpush1.msra.mxu0 0.0
        %4028 = vmatprep.subr.mxu0 0.0
        %4029 = vmatpush1.msra.mxu0 0.0
        %4030 = vmatprep.subr.mxu0 0.0
        %4031 = vmatpush1.msra.mxu0 0.0
        %4032 = vmatprep.subr.mxu0 0.0
        %4033 = vmatpush1.msra.mxu0 0.0
        %4034 = vmatprep.subr.mxu0 0.0
        %4035 = vmatpush1.msra.mxu0 0.0
        %4036 = vmatprep.subr.mxu0 0.0
        %4037 = vmatpush1.msra.mxu0 0.0
        %4038 = vmatprep.subr.mxu0 0.0
        %4039 = vmatpush1.msra.mxu0 0.0
        %4040 = vmatprep.mubr.f32.mxu0 0.0
        %4041 = vmatmul.mubr.f32.gmra.mrb[0].mxu0 %v3974
        %v4042 = vpop.f32.mrb[0].mxu0
        %v4043 = vadd.f32 0.0, %v4042
        %v4044 = vpop.f32.mrb[0].mxu0
        %4045 = vdwg.mxu0
        %v4046 = vadd.f32 %v3801, %v4043
        %v4047 = vld [vmem:[%s9] sm:$0x1]
        %v4049 = vlaneseq
        %v4050 = vshrl.u32 %v4049, 7
        %v4051 = vsub.s32 0, %v4050
        %v4052 = vrot.slane %v4047, %v4051
        %v4054 = vadd.f32 %v4046, %v4052
        %v4055 = vsel %vm3162, %v4054, 0.0
        %v4056 = vrot.slane %v4055, 4
        %v4057 = vadd.f32 %v4055, %v4056
        %v4058 = vrot.slane %v4057, 2
        %v4059 = vadd.f32 %v4057, %v4058
        %v4060 = vrot.slane %v4059, 1
        %v4061 = vadd.f32 %v4059, %v4060
        %v4062 = vrcp.pop 4.0
        %v4063 = vmul.f32 %v4061, %v4062
        %4064 = vst [vmem:[%s351] sm:$0x1] %v4063
        %s4065 = sand.u32 %s247, 1
        %s4066 = scalar_lea.sflag [#allocation3], %s4065
        %s4067 = sand.u32 %s247, 1
        %s4068 = scalar_lea.vmem [#allocation2], %s4067
        // Predicated region
        $region61: #{tpu_custom_call.1} parent=59 // pred_check
          %p4069 = pneg %p257
        $region62: #{tpu_custom_call.1} parent=59 // pred_check_branch
          %4071 = sbr.rel (%p4069) target = $region64
        $region63: #{tpu_custom_call.1} parent=59 // pred_region
          %s4073 = ssub.s32 16, 16
          %4074 = vsyncadd %s4066, %s4073
          %s4075 = smul.addr %s24, 16
          %s4076 = scalar_lea.hbm %s10, %s4075
          %s4078 = sshll.u32 %s4068, 4
          %s4079 = int_to_ptr.vmem [resolvable:$true] %s4078
          %4081 = dma.vmem_to_hbm [thread:$0]  %s4079, 16, %s4076, %s4066
        $region64: #{tpu_custom_call.1} parent=59 // pred_fallthru
          _
      $region60: #{tpu_custom_call.1} parent=5 // pred_fallthru
        _
      %p4082 = scmp.le.s32.totalorder 2, %s19
      // Predicated region
      $region65: #{tpu_custom_call.1} parent=5 // pred_check
        %p4083 = pneg %p4082
      $region66: #{tpu_custom_call.1} parent=5 // pred_check_branch
        %4085 = sbr.rel (%p4083) target = $region68
      $region67: #{tpu_custom_call.1} parent=5 // pred_region
        %s4086 = ssub.s32 %s19, 2
        // Predicated region
        $region69: #{tpu_custom_call.1} parent=67 // pred_check
          %p4087 = pneg %p263
        $region70: #{tpu_custom_call.1} parent=67 // pred_check_branch
          %4089 = sbr.rel (%p4087) target = $region72
        $region71: #{tpu_custom_call.1} parent=67 // pred_region
          %s4090 = sand.u32 %s248, 1
          %s4091 = scalar_lea.sflag [#allocation3], %s4090
          %s4092 = sand.u32 %s248, 1
          %s4093 = scalar_lea.vmem [#allocation2], %s4092
          %4094 = dma.done %s4091, 16
        $region72: #{tpu_custom_call.1} parent=67 // pred_fallthru
          _
      $region68: #{tpu_custom_call.1} parent=5 // pred_fallthru
        _
    $region6: #{tpu_custom_call.1} parent=1 // loop_footer
      %s23 = sadd.s32 1, %s19
    $region7: #{tpu_custom_call.1} parent=1 // loop_footer_branch
      %18 = sbr.rel target = $region3
    $region8: #{tpu_custom_call.1} parent=1 // loop_exit
      _
    %4095 = vsyncpa [#allocation3], 1
    %s4096 = scalar_lea.sflag [#allocation3], 1
    %4097 = vsyncpa %s4096, 1

</llo_original>
